<compile_context>
chip_gen: v7x
topology: tpu7x:2x2x1
jax: 0.10.0
libtpu: 0.0.40
codegen_flags: <defaults>
</compile_context>

<pallas_src>
import functools

import jax
import jax.numpy as jnp
import numpy as np
from jax.experimental import pallas as pl
from jax.experimental.pallas import tpu as pltpu


def _rup(x, m):
    return ((x + m - 1) // m) * m


def _pad_to(x, shape):
    pads = [(0, t - s) for s, t in zip(x.shape, shape)]
    if all(p == (0, 0) for p in pads):
        return x
    return jnp.pad(x, pads)


# --------------------------------------------------------------------------
# Kernel: one batch tile per grid step; all weights resident in VMEM.
# --------------------------------------------------------------------------
def san_kernel(wmean_ref, v_ref,
               qW_ref, qb_ref,
               attvW_ref, attvb_ref, attqW_ref,
               a1_qb_ref, a1_lW_ref,
               a2_qWv_ref, a2_qb_ref, a2_lW_ref,
               vnW_ref, vnb_ref, clW_ref, clb_ref,
               out_ref, *, num_objs, num_hid_p, att_dtype):
    f32 = jnp.float32
    bf16 = jnp.bfloat16
    Hp = num_hid_p

    wmean = wmean_ref[...]                        # [TB, Dwp]      (bf16)
    v = v_ref[...]                                # [TB, Kp, Dvp]  (bf16)
    TB, Kp, Dv = v.shape

    # ---- q_emb: Linear(w_dim -> H) + tanh (mean-pool done in glue JAX) ----
    q_emb = jnp.tanh(
        jnp.dot(wmean, qW_ref[...], preferred_element_type=f32) + qb_ref[...])
    q_emb_b = q_emb.astype(bf16)

    # ---- fused v-projection for att1 and att2/3: single MXU pass, N = 2*Hp ----
    v2d = v.reshape(TB * Kp, Dv)                  # Kp is a multiple of 16 -> layout-free
    vproj = jnp.maximum(
        jnp.dot(v2d, attvW_ref[...], preferred_element_type=f32) + attvb_ref[...],
        0.0).reshape(TB, Kp, 2 * Hp)
    vproj1 = vproj[:, :, :Hp]                     # att1 half   (lane-aligned slice)
    vproj2 = vproj[:, :, Hp:]                     # att2/3 half

    # ---- fused q-projection: [q_emb @ a1_qW | q_emb @ a2_qW[:H]] ----
    qh = jnp.dot(q_emb_b, attqW_ref[...], preferred_element_type=f32)   # [TB, 2Hp]
    q1h = qh[:, :Hp]
    q_part = qh[:, Hp:]                           # shared by att2 and att3

    # ---- padded-object mask (hoisted; iota/compare emitted once) ----
    if Kp != num_objs:
        obj_ids = jax.lax.broadcasted_iota(jnp.int32, (1, Kp), 1)
        obj_mask = obj_ids < num_objs             # [1, Kp] bool
    else:
        obj_mask = None

    def softmax_objs(logits):                     # softmax over objects (f32)
        if obj_mask is not None:
            logits = jnp.where(obj_mask, logits, -1e30)
        m = jnp.max(logits, axis=-1, keepdims=True)
        p = jnp.exp(logits - m)
        inv = pl.reciprocal(jnp.sum(p, axis=-1, keepdims=True), approx=True)
        return p * inv

    def weighted_sum(att):                        # sum_k att[b,k] * v[b,k,:]
        # bf16 multiply on v6e/v7x (bf16 VALU), f32 on v5e; f32 accumulation
        return jnp.sum(att.astype(att_dtype)[:, :, None] * v, axis=1, dtype=f32)

    # ---- attention 1 ----
    # Linear(H->1) weight folded into the small [TB,H] q side (no [TB,K,H]
    # broadcast); its scalar bias is a uniform logit shift -> cancels in softmax.
    qs1 = jnp.maximum(q1h + a1_qb_ref[...], 0.0) * a1_lW_ref[...]
    logits1 = jnp.sum(vproj1 * qs1[:, None, :], axis=-1)
    v_emb1 = weighted_sum(softmax_objs(logits1))                 # [TB, Dvp] f32

    # ---- attention 2 / 3 (shared v_att2 weights; q_emb part of the concat
    #      matmul computed once above) ----
    def att2_pass(v_emb):
        qs = jnp.maximum(
            q_part
            + jnp.dot(v_emb.astype(bf16), a2_qWv_ref[...], preferred_element_type=f32)
            + a2_qb_ref[...], 0.0) * a2_lW_ref[...]
        logits = jnp.sum(vproj2 * qs[:, None, :], axis=-1)
        return weighted_sum(softmax_objs(logits))

    v_emb2 = att2_pass(v_emb1)
    v_emb3 = att2_pass(v_emb2)

    # ---- v_net + classifier ----
    v_repr = jnp.maximum(
        jnp.dot(v_emb3.astype(bf16), vnW_ref[...], preferred_element_type=f32)
        + vnb_ref[...], 0.0)
    out = (jnp.dot(v_repr.astype(bf16), clW_ref[...], preferred_element_type=f32)
           + clb_ref[...])
    out_ref[...] = out.astype(out_ref.dtype)


# --------------------------------------------------------------------------
# Parameter init (raw, unpadded) and one-time preparation (pad + fuse + bf16)
# --------------------------------------------------------------------------
def init_params(key, vocab, w_dim, obj_dim, num_hid, num_ans):
    ks = jax.random.split(key, 16)
    s = 0.1
    return {
        "emb":    s * jax.random.normal(ks[0], (vocab, w_dim), jnp.float32),
        "qW":     s * jax.random.normal(ks[1], (w_dim, num_hid), jnp.float32),
        "qb":     jnp.zeros((1, num_hid), jnp.float32),
        "a1_vW":  s * jax.random.normal(ks[2], (obj_dim, num_hid), jnp.float32),
        "a1_vb":  jnp.zeros((1, num_hid), jnp.float32),
        "a1_qW":  s * jax.random.normal(ks[3], (num_hid, num_hid), jnp.float32),
        "a1_qb":  jnp.zeros((1, num_hid), jnp.float32),
        "a1_lW":  s * jax.random.normal(ks[4], (1, num_hid), jnp.float32),
        "a1_lb":  jnp.zeros((1, 1), jnp.float32),
        "a2_vW":  s * jax.random.normal(ks[5], (obj_dim, num_hid), jnp.float32),
        "a2_vb":  jnp.zeros((1, num_hid), jnp.float32),
        "a2_qW":  s * jax.random.normal(ks[6], (num_hid + obj_dim, num_hid), jnp.float32),
        "a2_qb":  jnp.zeros((1, num_hid), jnp.float32),
        "a2_lW":  s * jax.random.normal(ks[7], (1, num_hid), jnp.float32),
        "a2_lb":  jnp.zeros((1, 1), jnp.float32),
        "vnW":    s * jax.random.normal(ks[8], (obj_dim, num_hid), jnp.float32),
        "vnb":    jnp.zeros((1, num_hid), jnp.float32),
        "clW":    s * jax.random.normal(ks[9], (num_hid, num_ans), jnp.float32),
        "clb":    jnp.zeros((1, num_ans), jnp.float32),
    }


def prepare_params(params):
    """Pad lane dims to multiples of 128, fuse the parallel a1/a2 projections
    along the output (lane) dim, split the concat weight, and cast matmul
    weights to bf16. Zero padding keeps the math exact.

    Note: a1_lb / a2_lb (the Linear(H->1) scalar biases) are intentionally not
    exported for the kernel — they are a uniform shift of the attention logits
    and cancel exactly inside the softmax."""
    f32, bf16 = jnp.float32, jnp.bfloat16
    Dw, H = params["qW"].shape
    Dv = params["a1_vW"].shape[0]
    A = params["clW"].shape[1]
    Dwp, Hp, Dvp, Ap = (_rup(d, 128) for d in (Dw, H, Dv, A))

    def w(x, r, c):          # matmul weight -> bf16, lane/sublane padded
        return _pad_to(x, (r, c)).astype(bf16)

    def bvec(x, c):          # bias / lane vector -> f32 padded
        return _pad_to(x, (1, c)).astype(f32)

    a2_qW = params["a2_qW"]  # [(H+Dv), H]  (applied to cat([q_emb, v_emb]))

    # Fuse the two parallel v-projections (and q-projections) along the output
    # dim: one matmul with N = 2*Hp instead of two with N = Hp.
    attvW = jnp.concatenate([_pad_to(params["a1_vW"], (Dvp, Hp)),
                             _pad_to(params["a2_vW"], (Dvp, Hp))], axis=1)
    attvb = jnp.concatenate([_pad_to(params["a1_vb"], (1, Hp)),
                             _pad_to(params["a2_vb"], (1, Hp))], axis=1)
    attqW = jnp.concatenate([_pad_to(params["a1_qW"], (Hp, Hp)),
                             _pad_to(a2_qW[:H], (Hp, Hp))], axis=1)

    return {
        "emb": params["emb"].astype(f32),
        "qW": w(params["qW"], Dwp, Hp),       "qb": bvec(params["qb"], Hp),
        "attvW": attvW.astype(bf16),          "attvb": attvb.astype(f32),
        "attqW": attqW.astype(bf16),
        "a1_qb": bvec(params["a1_qb"], Hp),   "a1_lW": bvec(params["a1_lW"], Hp),
        "a2_qWv": w(a2_qW[H:], Dvp, Hp),      # v_emb part of the concat matmul
        "a2_qb": bvec(params["a2_qb"], Hp),   "a2_lW": bvec(params["a2_lW"], Hp),
        "vnW": w(params["vnW"], Dvp, Hp),     "vnb": bvec(params["vnb"], Hp),
        "clW": w(params["clW"], Hp, Ap),      "clb": bvec(params["clb"], Ap),
        "num_ans": A,
    }


_WEIGHT_ORDER = ["qW", "qb", "attvW", "attvb", "attqW", "a1_qb", "a1_lW",
                 "a2_qWv", "a2_qb", "a2_lW", "vnW", "vnb", "clW", "clb"]


def _att_mul_dtype():
    """bf16 for the att*v pointwise multiply on chips with a bf16 VALU
    (v6e/v7x); f32 elsewhere (v5e has no bf16 VPU)."""
    try:
        kind = jax.devices()[0].device_kind.lower()
        return jnp.bfloat16 if ("v6" in kind or "v7" in kind) else jnp.float32
    except Exception:
        return jnp.float32


def san_forward(v, b, q, labels, prep, *, max_batch_tile=1024):
    # b (box features) and labels are not used by SANModel1.forward.
    del b, labels
    f32, bf16 = jnp.float32, jnp.bfloat16
    B, K, _ = v.shape
    A = prep["num_ans"]
    Dwp, Hp = prep["qW"].shape
    Dvp = prep["a2_qWv"].shape[0]
    Ap = prep["clW"].shape[1]
    Kp = _rup(K, 16)   # bf16 sublane tile -> the (TB,Kp)->(TB*Kp) flatten is layout-free

    weights = [prep[n] for n in _WEIGHT_ORDER]
    weight_bytes = sum(int(w.size) * w.dtype.itemsize for w in weights)

    # Glue JAX: embedding gather + mean-pool over the sequence. The kernel then
    # only reads wmean [B, Dw] instead of the full [B, S, Dw] word sequence.
    wmean = jnp.mean(jnp.take(prep["emb"], q, axis=0), axis=1)   # [B, Dw] f32

    # ---- generation-aware batch-tile sizing (amortize ~0.35us/grid-step) ----
    try:
        vmem_cap = int(pltpu.get_tpu_info().vmem_capacity_bytes)
    except Exception:
        vmem_cap = 64 * 1024 * 1024          # conservative fallback (v7x per-TC)
    # per batch-row bytes: double-buffered streamed tiles + the f32 fused
    # v-projection intermediate + slack for the other [Kp, *] temporaries
    per_row = (2 * Dwp * 2 + 2 * Kp * Dvp * 2 + 2 * Ap * 4
               + Kp * 2 * Hp * 4 + Kp * Hp * 4)
    budget = int(0.70 * vmem_cap) - weight_bytes
    tb_cap = max(8, (budget // max(per_row, 1)) // 8 * 8)
    B8 = _rup(B, 8)
    TB = min(max_batch_tile, tb_cap, B8)
    if TB >= B8 and B8 >= 16:
        TB = _rup(B8 // 2, 8)        # keep grid >= 2 so v7x's 2 TCs both get work
    B_pad = _rup(B8, TB)
    grid = (B_pad // TB,)

    wmean_p = _pad_to(wmean, (B_pad, Dwp)).astype(bf16)
    v_p = _pad_to(v.astype(f32), (B_pad, Kp, Dvp)).astype(bf16)

    out_specs = pl.BlockSpec((TB, Ap), lambda i: (i, 0))

    # CostEstimate: weights counted once (constant-index blocks); activations
    # streamed per tile.
    flops_per_row = 2 * (Dwp * Hp                 # q_emb
                         + Kp * Dvp * 2 * Hp      # fused v-projection
                         + Hp * 2 * Hp            # fused q-projection
                         + 2 * Dvp * Hp           # a2_qWv (att2 + att3)
                         + Dvp * Hp               # v_net
                         + Hp * Ap                # classifier
                         + 3 * Kp * Hp            # logits dot-products
                         + 3 * Kp * Dvp)          # attention-weighted sums
    bytes_accessed = (B_pad * Dwp * 2 + B_pad * Kp * Dvp * 2
                      + B_pad * Ap * 4 + weight_bytes)
    cost = pl.CostEstimate(flops=int(B_pad * flops_per_row),
                           transcendentals=int(B_pad * (Hp + 3 * Kp + 3)),
                           bytes_accessed=int(bytes_accessed))

    vmem_limit = int(min(0.9 * vmem_cap,
                         max(32 * 1024 * 1024,
                             weight_bytes + TB * per_row + 16 * 1024 * 1024)))

    kernel = functools.partial(san_kernel, num_objs=K, num_hid_p=Hp,
                               att_dtype=_att_mul_dtype())

    def run(single_buffer_weights):
        wkw = {"pipeline_mode": pl.Buffered(1)} if single_buffer_weights else {}
        in_specs = (
            [pl.BlockSpec((TB, Dwp), lambda i: (i, 0)),
             pl.BlockSpec((TB, Kp, Dvp), lambda i: (i, 0, 0))]
            # weights: constant block index -> DMA'd once, resident in VMEM;
            # single-buffered to halve their resident footprint
            + [pl.BlockSpec(w.shape, lambda i: (0, 0), **wkw) for w in weights])
        return pl.pallas_call(
            kernel,
            out_shape=jax.ShapeDtypeStruct((B_pad, Ap), f32),
            grid=grid,
            in_specs=in_specs,
            out_specs=out_specs,
            compiler_params=pltpu.CompilerParams(
                dimension_semantics=("parallel",),
                vmem_limit_bytes=vmem_limit),
            cost_estimate=cost,
        )(wmean_p, v_p, *weights)

    try:
        out = run(single_buffer_weights=True)
    except Exception:
        # pipeline_mode=pl.Buffered(1) unsupported on this jax version:
        # fall back to default double-buffered weight blocks.
        out = run(single_buffer_weights=False)

    # strip batch / answer padding (padded logits columns are zero by construction)
    return out[:B, :A]


# --------------------------------------------------------------------------
# Pure-JAX reference (f32, un-fused, with the concat) for correctness checking
# --------------------------------------------------------------------------
def san_forward_ref(v, b, q, labels, params):
    del b, labels
    wseq = jnp.take(params["emb"], q, axis=0)
    q_emb = jnp.tanh(jnp.mean(wseq, axis=1) @ params["qW"] + params["qb"])
    B, K, Dv = v.shape

    def attention(q_feat, vW, vb, qW, qb, lW, lb):
        vproj = jax.nn.relu(v.reshape(B * K, Dv) @ vW + vb).reshape(B, K, -1)
        qproj = jax.nn.relu(q_feat @ qW + qb)
        joint = vproj * qproj[:, None, :]
        logits = jnp.sum(joint * lW[0][None, None, :], axis=-1) + lb[0, 0]
        return jax.nn.softmax(logits, axis=1)

    att1 = attention(q_emb, params["a1_vW"], params["a1_vb"], params["a1_qW"],
                     params["a1_qb"], params["a1_lW"], params["a1_lb"])
    v_emb = jnp.sum(att1[:, :, None] * v, axis=1)
    q2 = jnp.concatenate([q_emb, v_emb], axis=1)
    att2 = attention(q2, params["a2_vW"], params["a2_vb"], params["a2_qW"],
                     params["a2_qb"], params["a2_lW"], params["a2_lb"])
    v_emb2 = jnp.sum(att2[:, :, None] * v, axis=1)
    q3 = jnp.concatenate([q_emb, v_emb2], axis=1)
    att3 = attention(q3, params["a2_vW"], params["a2_vb"], params["a2_qW"],
                     params["a2_qb"], params["a2_lW"], params["a2_lb"])
    v_emb3 = jnp.sum(att3[:, :, None] * v, axis=1)
    v_repr = jax.nn.relu(v_emb3 @ params["vnW"] + params["vnb"])
    return v_repr @ params["clW"] + params["clb"]


if __name__ == "__main__":
    # Small shapes consistent with the forward:
    B, K, OBJ_DIM, B_DIM = 2, 8, 32, 4
    SEQ, VOCAB, W_DIM = 8, 50, 32
    NUM_HID, NUM_ANS = 32, 16

    key = jax.random.PRNGKey(0)
    k_v, k_b, k_q, k_l, k_p = jax.random.split(key, 5)
    v = jax.random.normal(k_v, (B, K, OBJ_DIM), jnp.float32)
    b = jax.random.normal(k_b, (B, K, B_DIM), jnp.float32)          # unused in forward
    q = jax.random.randint(k_q, (B, SEQ), 0, VOCAB, jnp.int32)
    labels = jax.random.randint(k_l, (B,), 0, NUM_ANS, jnp.int32)   # unused in forward

    params = init_params(k_p, VOCAB, W_DIM, OBJ_DIM, NUM_HID, NUM_ANS)
    prep = prepare_params(params)

    logits = jax.block_until_ready(san_forward(v, b, q, labels, prep))
    ref = jax.block_until_ready(san_forward_ref(v, b, q, labels, params))
    # bf16 matmul/pointwise operands + approx-reciprocal softmax -> loose compare
    np.testing.assert_allclose(np.asarray(logits), np.asarray(ref),
                               rtol=2e-2, atol=2e-2)
    print("KERNEL_OK")
</pallas_src>

<mosaic_0001>
module attributes {stable_mosaic.version = 11 : i64} {
  func.func @san_kernel(%arg0: i32, %arg1: memref<8x128xbf16, #tpu.memory_space<vmem>>, %arg2: memref<8x16x128xbf16, #tpu.memory_space<vmem>>, %arg3: memref<128x128xbf16, #tpu.memory_space<vmem>>, %arg4: memref<1x128xf32, #tpu.memory_space<vmem>>, %arg5: memref<128x256xbf16, #tpu.memory_space<vmem>>, %arg6: memref<1x256xf32, #tpu.memory_space<vmem>>, %arg7: memref<128x256xbf16, #tpu.memory_space<vmem>>, %arg8: memref<1x128xf32, #tpu.memory_space<vmem>>, %arg9: memref<1x128xf32, #tpu.memory_space<vmem>>, %arg10: memref<128x128xbf16, #tpu.memory_space<vmem>>, %arg11: memref<1x128xf32, #tpu.memory_space<vmem>>, %arg12: memref<1x128xf32, #tpu.memory_space<vmem>>, %arg13: memref<128x128xbf16, #tpu.memory_space<vmem>>, %arg14: memref<1x128xf32, #tpu.memory_space<vmem>>, %arg15: memref<128x128xbf16, #tpu.memory_space<vmem>>, %arg16: memref<1x128xf32, #tpu.memory_space<vmem>>, %arg17: memref<8x128xf32, #tpu.memory_space<vmem>>) attributes {dimension_semantics = [#tpu.dimension_semantics<parallel>], iteration_bounds = array<i64: 1>, scalar_prefetch = 0 : i64, scratch_operands = 0 : i64, tpu.core_type = #tpu.core_type<tc>, window_params = [{transform_indices = @transform_0, window_bounds = array<i64: 8, 128>}, {transform_indices = @transform_1, window_bounds = array<i64: 8, 16, 128>}, {pipeline_mode = #tpu.pipeline_mode<synchronous>, transform_indices = @transform_2, window_bounds = array<i64: 128, 128>}, {pipeline_mode = #tpu.pipeline_mode<synchronous>, transform_indices = @transform_3, window_bounds = array<i64: 1, 128>}, {pipeline_mode = #tpu.pipeline_mode<synchronous>, transform_indices = @transform_4, window_bounds = array<i64: 128, 256>}, {pipeline_mode = #tpu.pipeline_mode<synchronous>, transform_indices = @transform_5, window_bounds = array<i64: 1, 256>}, {pipeline_mode = #tpu.pipeline_mode<synchronous>, transform_indices = @transform_6, window_bounds = array<i64: 128, 256>}, {pipeline_mode = #tpu.pipeline_mode<synchronous>, transform_indices = @transform_7, window_bounds = array<i64: 1, 128>}, {pipeline_mode = #tpu.pipeline_mode<synchronous>, transform_indices = @transform_8, window_bounds = array<i64: 1, 128>}, {pipeline_mode = #tpu.pipeline_mode<synchronous>, transform_indices = @transform_9, window_bounds = array<i64: 128, 128>}, {pipeline_mode = #tpu.pipeline_mode<synchronous>, transform_indices = @transform_10, window_bounds = array<i64: 1, 128>}, {pipeline_mode = #tpu.pipeline_mode<synchronous>, transform_indices = @transform_11, window_bounds = array<i64: 1, 128>}, {pipeline_mode = #tpu.pipeline_mode<synchronous>, transform_indices = @transform_12, window_bounds = array<i64: 128, 128>}, {pipeline_mode = #tpu.pipeline_mode<synchronous>, transform_indices = @transform_13, window_bounds = array<i64: 1, 128>}, {pipeline_mode = #tpu.pipeline_mode<synchronous>, transform_indices = @transform_14, window_bounds = array<i64: 128, 128>}, {pipeline_mode = #tpu.pipeline_mode<synchronous>, transform_indices = @transform_15, window_bounds = array<i64: 1, 128>}, {transform_indices = @transform_16, window_bounds = array<i64: 8, 128>}]} {
    %c0 = arith.constant 0 : index
    %c0_0 = arith.constant 0 : index
    %0 = vector.load %arg1[%c0, %c0_0] : memref<8x128xbf16, #tpu.memory_space<vmem>>, vector<8x128xbf16>
    %c0_1 = arith.constant 0 : index
    %c0_2 = arith.constant 0 : index
    %c0_3 = arith.constant 0 : index
    %1 = vector.load %arg2[%c0_1, %c0_2, %c0_3] : memref<8x16x128xbf16, #tpu.memory_space<vmem>>, vector<8x16x128xbf16>
    %c0_4 = arith.constant 0 : index
    %c0_5 = arith.constant 0 : index
    %2 = vector.load %arg3[%c0_4, %c0_5] : memref<128x128xbf16, #tpu.memory_space<vmem>>, vector<128x128xbf16>
    %cst = arith.constant dense<0.000000e+00> : vector<8x128xf32>
    %3 = tpu.matmul %0, %2, %cst {dimension_numbers = #tpu.dot_dimension_numbers<[1], [0], [0], [1], [0, 0, 1, 1], [], []>} : vector<8x128xbf16>, vector<128x128xbf16>, vector<8x128xf32> -> vector<8x128xf32>
    %c0_6 = arith.constant 0 : index
    %c0_7 = arith.constant 0 : index
    %4 = vector.load %arg4[%c0_6, %c0_7] : memref<1x128xf32, #tpu.memory_space<vmem>>, vector<1x128xf32>
    %5 = vector.broadcast %4 : vector<1x128xf32> to vector<8x128xf32>
    %6 = arith.addf %3, %5 : vector<8x128xf32>
    %7 = math.tanh %6 : vector<8x128xf32>
    %8 = arith.truncf %7 : vector<8x128xf32> to vector<8x128xbf16>
    %9 = vector.shape_cast %1 : vector<8x16x128xbf16> to vector<128x128xbf16>
    %c0_8 = arith.constant 0 : index
    %c0_9 = arith.constant 0 : index
    %10 = vector.load %arg5[%c0_8, %c0_9] : memref<128x256xbf16, #tpu.memory_space<vmem>>, vector<128x256xbf16>
    %cst_10 = arith.constant dense<0.000000e+00> : vector<128x256xf32>
    %11 = tpu.matmul %9, %10, %cst_10 {dimension_numbers = #tpu.dot_dimension_numbers<[1], [0], [0], [1], [0, 0, 1, 1], [], []>} : vector<128x128xbf16>, vector<128x256xbf16>, vector<128x256xf32> -> vector<128x256xf32>
    %c0_11 = arith.constant 0 : index
    %c0_12 = arith.constant 0 : index
    %12 = vector.load %arg6[%c0_11, %c0_12] : memref<1x256xf32, #tpu.memory_space<vmem>>, vector<1x256xf32>
    %13 = vector.broadcast %12 : vector<1x256xf32> to vector<128x256xf32>
    %14 = arith.addf %11, %13 : vector<128x256xf32>
    %cst_13 = arith.constant 0.000000e+00 : f32
    %15 = vector.broadcast %cst_13 : f32 to vector<128x256xf32>
    %16 = arith.maximumf %14, %15 : vector<128x256xf32>
    %17 = vector.shape_cast %16 : vector<128x256xf32> to vector<8x16x256xf32>
    %18 = vector.extract_strided_slice %17 {offsets = [0, 0, 0], sizes = [8, 16, 128], strides = [1, 1, 1]} : vector<8x16x256xf32> to vector<8x16x128xf32>
    %19 = vector.extract_strided_slice %17 {offsets = [0, 0, 128], sizes = [8, 16, 128], strides = [1, 1, 1]} : vector<8x16x256xf32> to vector<8x16x128xf32>
    %c0_14 = arith.constant 0 : index
    %c0_15 = arith.constant 0 : index
    %20 = vector.load %arg7[%c0_14, %c0_15] : memref<128x256xbf16, #tpu.memory_space<vmem>>, vector<128x256xbf16>
    %cst_16 = arith.constant dense<0.000000e+00> : vector<8x256xf32>
    %21 = tpu.matmul %8, %20, %cst_16 {dimension_numbers = #tpu.dot_dimension_numbers<[1], [0], [0], [1], [0, 0, 1, 1], [], []>} : vector<8x128xbf16>, vector<128x256xbf16>, vector<8x256xf32> -> vector<8x256xf32>
    %22 = vector.extract_strided_slice %21 {offsets = [0, 0], sizes = [8, 128], strides = [1, 1]} : vector<8x256xf32> to vector<8x128xf32>
    %23 = vector.extract_strided_slice %21 {offsets = [0, 128], sizes = [8, 128], strides = [1, 1]} : vector<8x256xf32> to vector<8x128xf32>
    %24 = tpu.iota {dimensions = array<i32: 1>} : vector<1x16xi32>
    %c8_i32 = arith.constant 8 : i32
    %25 = vector.broadcast %c8_i32 : i32 to vector<1x16xi32>
    %26 = arith.cmpi slt, %24, %25 : vector<1x16xi32>
    %c0_17 = arith.constant 0 : index
    %c0_18 = arith.constant 0 : index
    %27 = vector.load %arg8[%c0_17, %c0_18] : memref<1x128xf32, #tpu.memory_space<vmem>>, vector<1x128xf32>
    %28 = vector.broadcast %27 : vector<1x128xf32> to vector<8x128xf32>
    %29 = arith.addf %22, %28 : vector<8x128xf32>
    %cst_19 = arith.constant 0.000000e+00 : f32
    %30 = vector.broadcast %cst_19 : f32 to vector<8x128xf32>
    %31 = arith.maximumf %29, %30 : vector<8x128xf32>
    %c0_20 = arith.constant 0 : index
    %c0_21 = arith.constant 0 : index
    %32 = vector.load %arg9[%c0_20, %c0_21] : memref<1x128xf32, #tpu.memory_space<vmem>>, vector<1x128xf32>
    %33 = vector.broadcast %32 : vector<1x128xf32> to vector<8x128xf32>
    %34 = arith.mulf %31, %33 : vector<8x128xf32>
    %35 = vector.shape_cast %34 : vector<8x128xf32> to vector<8x1x128xf32>
    %36 = vector.broadcast %35 : vector<8x1x128xf32> to vector<8x16x128xf32>
    %37 = arith.mulf %18, %36 : vector<8x16x128xf32>
    %cst_22 = arith.constant dense<0.000000e+00> : vector<8x16xf32>
    %38 = vector.multi_reduction <add>, %37, %cst_22 [2] : vector<8x16x128xf32> to vector<8x16xf32>
    %cst_23 = arith.constant -1.000000e+30 : f32
    %39 = vector.shape_cast %26 : vector<1x16xi1> to vector<1x16xi1>
    %40 = vector.broadcast %39 : vector<1x16xi1> to vector<8x16xi1>
    %41 = vector.broadcast %cst_23 : f32 to vector<8x16xf32>
    %42 = arith.select %40, %38, %41 : vector<8x16xi1>, vector<8x16xf32>
    %cst_24 = arith.constant dense<0xFF800000> : vector<8xf32>
    %43 = vector.multi_reduction <maximumf>, %42, %cst_24 [1] : vector<8x16xf32> to vector<8xf32>
    %44 = vector.shape_cast %43 : vector<8xf32> to vector<8x1xf32>
    %45 = vector.broadcast %44 : vector<8x1xf32> to vector<8x16xf32>
    %46 = arith.subf %42, %45 : vector<8x16xf32>
    %47 = math.exp %46 : vector<8x16xf32>
    %cst_25 = arith.constant dense<0.000000e+00> : vector<8xf32>
    %48 = vector.multi_reduction <add>, %47, %cst_25 [1] : vector<8x16xf32> to vector<8xf32>
    %49 = vector.shape_cast %48 : vector<8xf32> to vector<8x1xf32>
    %50 = tpu.reciprocal %49 {approx = true} : vector<8x1xf32> -> vector<8x1xf32>
    %51 = vector.broadcast %50 : vector<8x1xf32> to vector<8x16xf32>
    %52 = arith.mulf %47, %51 : vector<8x16xf32>
    %53 = vector.shape_cast %52 : vector<8x16xf32> to vector<8x16x1xf32>
    %54 = arith.extf %1 : vector<8x16x128xbf16> to vector<8x16x128xf32>
    %55 = vector.broadcast %53 : vector<8x16x1xf32> to vector<8x16x128xf32>
    %56 = arith.mulf %55, %54 : vector<8x16x128xf32>
    %cst_26 = arith.constant dense<0.000000e+00> : vector<8x128xf32>
    %57 = vector.multi_reduction <add>, %56, %cst_26 [1] : vector<8x16x128xf32> to vector<8x128xf32>
    %58 = arith.truncf %57 : vector<8x128xf32> to vector<8x128xbf16>
    %c0_27 = arith.constant 0 : index
    %c0_28 = arith.constant 0 : index
    %59 = vector.load %arg10[%c0_27, %c0_28] : memref<128x128xbf16, #tpu.memory_space<vmem>>, vector<128x128xbf16>
    %cst_29 = arith.constant dense<0.000000e+00> : vector<8x128xf32>
    %60 = tpu.matmul %58, %59, %cst_29 {dimension_numbers = #tpu.dot_dimension_numbers<[1], [0], [0], [1], [0, 0, 1, 1], [], []>} : vector<8x128xbf16>, vector<128x128xbf16>, vector<8x128xf32> -> vector<8x128xf32>
    %61 = arith.addf %23, %60 : vector<8x128xf32>
    %c0_30 = arith.constant 0 : index
    %c0_31 = arith.constant 0 : index
    %62 = vector.load %arg11[%c0_30, %c0_31] : memref<1x128xf32, #tpu.memory_space<vmem>>, vector<1x128xf32>
    %63 = vector.broadcast %62 : vector<1x128xf32> to vector<8x128xf32>
    %64 = arith.addf %61, %63 : vector<8x128xf32>
    %cst_32 = arith.constant 0.000000e+00 : f32
    %65 = vector.broadcast %cst_32 : f32 to vector<8x128xf32>
    %66 = arith.maximumf %64, %65 : vector<8x128xf32>
    %c0_33 = arith.constant 0 : index
    %c0_34 = arith.constant 0 : index
    %67 = vector.load %arg12[%c0_33, %c0_34] : memref<1x128xf32, #tpu.memory_space<vmem>>, vector<1x128xf32>
    %68 = vector.broadcast %67 : vector<1x128xf32> to vector<8x128xf32>
    %69 = arith.mulf %66, %68 : vector<8x128xf32>
    %70 = vector.shape_cast %69 : vector<8x128xf32> to vector<8x1x128xf32>
    %71 = vector.broadcast %70 : vector<8x1x128xf32> to vector<8x16x128xf32>
    %72 = arith.mulf %19, %71 : vector<8x16x128xf32>
    %cst_35 = arith.constant dense<0.000000e+00> : vector<8x16xf32>
    %73 = vector.multi_reduction <add>, %72, %cst_35 [2] : vector<8x16x128xf32> to vector<8x16xf32>
    %cst_36 = arith.constant -1.000000e+30 : f32
    %74 = vector.shape_cast %26 : vector<1x16xi1> to vector<1x16xi1>
    %75 = vector.broadcast %74 : vector<1x16xi1> to vector<8x16xi1>
    %76 = vector.broadcast %cst_36 : f32 to vector<8x16xf32>
    %77 = arith.select %75, %73, %76 : vector<8x16xi1>, vector<8x16xf32>
    %cst_37 = arith.constant dense<0xFF800000> : vector<8xf32>
    %78 = vector.multi_reduction <maximumf>, %77, %cst_37 [1] : vector<8x16xf32> to vector<8xf32>
    %79 = vector.shape_cast %78 : vector<8xf32> to vector<8x1xf32>
    %80 = vector.broadcast %79 : vector<8x1xf32> to vector<8x16xf32>
    %81 = arith.subf %77, %80 : vector<8x16xf32>
    %82 = math.exp %81 : vector<8x16xf32>
    %cst_38 = arith.constant dense<0.000000e+00> : vector<8xf32>
    %83 = vector.multi_reduction <add>, %82, %cst_38 [1] : vector<8x16xf32> to vector<8xf32>
    %84 = vector.shape_cast %83 : vector<8xf32> to vector<8x1xf32>
    %85 = tpu.reciprocal %84 {approx = true} : vector<8x1xf32> -> vector<8x1xf32>
    %86 = vector.broadcast %85 : vector<8x1xf32> to vector<8x16xf32>
    %87 = arith.mulf %82, %86 : vector<8x16xf32>
    %88 = vector.shape_cast %87 : vector<8x16xf32> to vector<8x16x1xf32>
    %89 = arith.extf %1 : vector<8x16x128xbf16> to vector<8x16x128xf32>
    %90 = vector.broadcast %88 : vector<8x16x1xf32> to vector<8x16x128xf32>
    %91 = arith.mulf %90, %89 : vector<8x16x128xf32>
    %cst_39 = arith.constant dense<0.000000e+00> : vector<8x128xf32>
    %92 = vector.multi_reduction <add>, %91, %cst_39 [1] : vector<8x16x128xf32> to vector<8x128xf32>
    %93 = arith.truncf %92 : vector<8x128xf32> to vector<8x128xbf16>
    %c0_40 = arith.constant 0 : index
    %c0_41 = arith.constant 0 : index
    %94 = vector.load %arg10[%c0_40, %c0_41] : memref<128x128xbf16, #tpu.memory_space<vmem>>, vector<128x128xbf16>
    %cst_42 = arith.constant dense<0.000000e+00> : vector<8x128xf32>
    %95 = tpu.matmul %93, %94, %cst_42 {dimension_numbers = #tpu.dot_dimension_numbers<[1], [0], [0], [1], [0, 0, 1, 1], [], []>} : vector<8x128xbf16>, vector<128x128xbf16>, vector<8x128xf32> -> vector<8x128xf32>
    %96 = arith.addf %23, %95 : vector<8x128xf32>
    %c0_43 = arith.constant 0 : index
    %c0_44 = arith.constant 0 : index
    %97 = vector.load %arg11[%c0_43, %c0_44] : memref<1x128xf32, #tpu.memory_space<vmem>>, vector<1x128xf32>
    %98 = vector.broadcast %97 : vector<1x128xf32> to vector<8x128xf32>
    %99 = arith.addf %96, %98 : vector<8x128xf32>
    %cst_45 = arith.constant 0.000000e+00 : f32
    %100 = vector.broadcast %cst_45 : f32 to vector<8x128xf32>
    %101 = arith.maximumf %99, %100 : vector<8x128xf32>
    %c0_46 = arith.constant 0 : index
    %c0_47 = arith.constant 0 : index
    %102 = vector.load %arg12[%c0_46, %c0_47] : memref<1x128xf32, #tpu.memory_space<vmem>>, vector<1x128xf32>
    %103 = vector.broadcast %102 : vector<1x128xf32> to vector<8x128xf32>
    %104 = arith.mulf %101, %103 : vector<8x128xf32>
    %105 = vector.shape_cast %104 : vector<8x128xf32> to vector<8x1x128xf32>
    %106 = vector.broadcast %105 : vector<8x1x128xf32> to vector<8x16x128xf32>
    %107 = arith.mulf %19, %106 : vector<8x16x128xf32>
    %cst_48 = arith.constant dense<0.000000e+00> : vector<8x16xf32>
    %108 = vector.multi_reduction <add>, %107, %cst_48 [2] : vector<8x16x128xf32> to vector<8x16xf32>
    %cst_49 = arith.constant -1.000000e+30 : f32
    %109 = vector.shape_cast %26 : vector<1x16xi1> to vector<1x16xi1>
    %110 = vector.broadcast %109 : vector<1x16xi1> to vector<8x16xi1>
    %111 = vector.broadcast %cst_49 : f32 to vector<8x16xf32>
    %112 = arith.select %110, %108, %111 : vector<8x16xi1>, vector<8x16xf32>
    %cst_50 = arith.constant dense<0xFF800000> : vector<8xf32>
    %113 = vector.multi_reduction <maximumf>, %112, %cst_50 [1] : vector<8x16xf32> to vector<8xf32>
    %114 = vector.shape_cast %113 : vector<8xf32> to vector<8x1xf32>
    %115 = vector.broadcast %114 : vector<8x1xf32> to vector<8x16xf32>
    %116 = arith.subf %112, %115 : vector<8x16xf32>
    %117 = math.exp %116 : vector<8x16xf32>
    %cst_51 = arith.constant dense<0.000000e+00> : vector<8xf32>
    %118 = vector.multi_reduction <add>, %117, %cst_51 [1] : vector<8x16xf32> to vector<8xf32>
    %119 = vector.shape_cast %118 : vector<8xf32> to vector<8x1xf32>
    %120 = tpu.reciprocal %119 {approx = true} : vector<8x1xf32> -> vector<8x1xf32>
    %121 = vector.broadcast %120 : vector<8x1xf32> to vector<8x16xf32>
    %122 = arith.mulf %117, %121 : vector<8x16xf32>
    %123 = vector.shape_cast %122 : vector<8x16xf32> to vector<8x16x1xf32>
    %124 = arith.extf %1 : vector<8x16x128xbf16> to vector<8x16x128xf32>
    %125 = vector.broadcast %123 : vector<8x16x1xf32> to vector<8x16x128xf32>
    %126 = arith.mulf %125, %124 : vector<8x16x128xf32>
    %cst_52 = arith.constant dense<0.000000e+00> : vector<8x128xf32>
    %127 = vector.multi_reduction <add>, %126, %cst_52 [1] : vector<8x16x128xf32> to vector<8x128xf32>
    %128 = arith.truncf %127 : vector<8x128xf32> to vector<8x128xbf16>
    %c0_53 = arith.constant 0 : index
    %c0_54 = arith.constant 0 : index
    %129 = vector.load %arg13[%c0_53, %c0_54] : memref<128x128xbf16, #tpu.memory_space<vmem>>, vector<128x128xbf16>
    %cst_55 = arith.constant dense<0.000000e+00> : vector<8x128xf32>
    %130 = tpu.matmul %128, %129, %cst_55 {dimension_numbers = #tpu.dot_dimension_numbers<[1], [0], [0], [1], [0, 0, 1, 1], [], []>} : vector<8x128xbf16>, vector<128x128xbf16>, vector<8x128xf32> -> vector<8x128xf32>
    %c0_56 = arith.constant 0 : index
    %c0_57 = arith.constant 0 : index
    %131 = vector.load %arg14[%c0_56, %c0_57] : memref<1x128xf32, #tpu.memory_space<vmem>>, vector<1x128xf32>
    %132 = vector.broadcast %131 : vector<1x128xf32> to vector<8x128xf32>
    %133 = arith.addf %130, %132 : vector<8x128xf32>
    %cst_58 = arith.constant 0.000000e+00 : f32
    %134 = vector.broadcast %cst_58 : f32 to vector<8x128xf32>
    %135 = arith.maximumf %133, %134 : vector<8x128xf32>
    %136 = arith.truncf %135 : vector<8x128xf32> to vector<8x128xbf16>
    %c0_59 = arith.constant 0 : index
    %c0_60 = arith.constant 0 : index
    %137 = vector.load %arg15[%c0_59, %c0_60] : memref<128x128xbf16, #tpu.memory_space<vmem>>, vector<128x128xbf16>
    %cst_61 = arith.constant dense<0.000000e+00> : vector<8x128xf32>
    %138 = tpu.matmul %136, %137, %cst_61 {dimension_numbers = #tpu.dot_dimension_numbers<[1], [0], [0], [1], [0, 0, 1, 1], [], []>} : vector<8x128xbf16>, vector<128x128xbf16>, vector<8x128xf32> -> vector<8x128xf32>
    %c0_62 = arith.constant 0 : index
    %c0_63 = arith.constant 0 : index
    %139 = vector.load %arg16[%c0_62, %c0_63] : memref<1x128xf32, #tpu.memory_space<vmem>>, vector<1x128xf32>
    %140 = vector.broadcast %139 : vector<1x128xf32> to vector<8x128xf32>
    %141 = arith.addf %138, %140 : vector<8x128xf32>
    %c0_64 = arith.constant 0 : index
    %c0_65 = arith.constant 0 : index
    %142 = vector.load %arg17[%c0_64, %c0_65] : memref<8x128xf32, #tpu.memory_space<vmem>>, vector<8x128xf32>
    tpu.vector_store %arg17[%c0_64, %c0_65], %141 {strides = array<i32>} : memref<8x128xf32, #tpu.memory_space<vmem>>, vector<8x128xf32>,
    return
  }
  func.func @transform_0(%arg0: i32) -> (i32, i32) {
    %c0_i32 = arith.constant 0 : i32
    %c0_i32_0 = arith.constant 0 : i32
    return %arg0, %c0_i32 : i32, i32
  }
  func.func @transform_1(%arg0: i32) -> (i32, i32, i32) {
    %c0_i32 = arith.constant 0 : i32
    %c0_i32_0 = arith.constant 0 : i32
    %c0_i32_1 = arith.constant 0 : i32
    return %arg0, %c0_i32, %c0_i32_0 : i32, i32, i32
  }
  func.func @transform_2(%arg0: i32) -> (i32, i32) {
    %c0_i32 = arith.constant 0 : i32
    %c0_i32_0 = arith.constant 0 : i32
    %c0_i32_1 = arith.constant 0 : i32
    return %c0_i32, %c0_i32_0 : i32, i32
  }
  func.func @transform_3(%arg0: i32) -> (i32, i32) {
    %c0_i32 = arith.constant 0 : i32
    %c0_i32_0 = arith.constant 0 : i32
    %c0_i32_1 = arith.constant 0 : i32
    return %c0_i32, %c0_i32_0 : i32, i32
  }
  func.func @transform_4(%arg0: i32) -> (i32, i32) {
    %c0_i32 = arith.constant 0 : i32
    %c0_i32_0 = arith.constant 0 : i32
    %c0_i32_1 = arith.constant 0 : i32
    return %c0_i32, %c0_i32_0 : i32, i32
  }
  func.func @transform_5(%arg0: i32) -> (i32, i32) {
    %c0_i32 = arith.constant 0 : i32
    %c0_i32_0 = arith.constant 0 : i32
    %c0_i32_1 = arith.constant 0 : i32
    return %c0_i32, %c0_i32_0 : i32, i32
  }
  func.func @transform_6(%arg0: i32) -> (i32, i32) {
    %c0_i32 = arith.constant 0 : i32
    %c0_i32_0 = arith.constant 0 : i32
    %c0_i32_1 = arith.constant 0 : i32
    return %c0_i32, %c0_i32_0 : i32, i32
  }
  func.func @transform_7(%arg0: i32) -> (i32, i32) {
    %c0_i32 = arith.constant 0 : i32
    %c0_i32_0 = arith.constant 0 : i32
    %c0_i32_1 = arith.constant 0 : i32
    return %c0_i32, %c0_i32_0 : i32, i32
  }
  func.func @transform_8(%arg0: i32) -> (i32, i32) {
    %c0_i32 = arith.constant 0 : i32
    %c0_i32_0 = arith.constant 0 : i32
    %c0_i32_1 = arith.constant 0 : i32
    return %c0_i32, %c0_i32_0 : i32, i32
  }
  func.func @transform_9(%arg0: i32) -> (i32, i32) {
    %c0_i32 = arith.constant 0 : i32
    %c0_i32_0 = arith.constant 0 : i32
    %c0_i32_1 = arith.constant 0 : i32
    return %c0_i32, %c0_i32_0 : i32, i32
  }
  func.func @transform_10(%arg0: i32) -> (i32, i32) {
    %c0_i32 = arith.constant 0 : i32
    %c0_i32_0 = arith.constant 0 : i32
    %c0_i32_1 = arith.constant 0 : i32
    return %c0_i32, %c0_i32_0 : i32, i32
  }
  func.func @transform_11(%arg0: i32) -> (i32, i32) {
    %c0_i32 = arith.constant 0 : i32
    %c0_i32_0 = arith.constant 0 : i32
    %c0_i32_1 = arith.constant 0 : i32
    return %c0_i32, %c0_i32_0 : i32, i32
  }
  func.func @transform_12(%arg0: i32) -> (i32, i32) {
    %c0_i32 = arith.constant 0 : i32
    %c0_i32_0 = arith.constant 0 : i32
    %c0_i32_1 = arith.constant 0 : i32
    return %c0_i32, %c0_i32_0 : i32, i32
  }
  func.func @transform_13(%arg0: i32) -> (i32, i32) {
    %c0_i32 = arith.constant 0 : i32
    %c0_i32_0 = arith.constant 0 : i32
    %c0_i32_1 = arith.constant 0 : i32
    return %c0_i32, %c0_i32_0 : i32, i32
  }
  func.func @transform_14(%arg0: i32) -> (i32, i32) {
    %c0_i32 = arith.constant 0 : i32
    %c0_i32_0 = arith.constant 0 : i32
    %c0_i32_1 = arith.constant 0 : i32
    return %c0_i32, %c0_i32_0 : i32, i32
  }
  func.func @transform_15(%arg0: i32) -> (i32, i32) {
    %c0_i32 = arith.constant 0 : i32
    %c0_i32_0 = arith.constant 0 : i32
    %c0_i32_1 = arith.constant 0 : i32
    return %c0_i32, %c0_i32_0 : i32, i32
  }
  func.func @transform_16(%arg0: i32) -> (i32, i32) {
    %c0_i32 = arith.constant 0 : i32
    %c0_i32_0 = arith.constant 0 : i32
    return %arg0, %c0_i32 : i32, i32
  }
}

module attributes {stable_mosaic.version = 11 : i64} {
  func.func @san_kernel(%arg0: i32, %arg1: memref<8x128xbf16, #tpu.memory_space<vmem>>, %arg2: memref<8x16x128xbf16, #tpu.memory_space<vmem>>, %arg3: memref<128x128xbf16, #tpu.memory_space<vmem>>, %arg4: memref<1x128xf32, #tpu.memory_space<vmem>>, %arg5: memref<128x256xbf16, #tpu.memory_space<vmem>>, %arg6: memref<1x256xf32, #tpu.memory_space<vmem>>, %arg7: memref<128x256xbf16, #tpu.memory_space<vmem>>, %arg8: memref<1x128xf32, #tpu.memory_space<vmem>>, %arg9: memref<1x128xf32, #tpu.memory_space<vmem>>, %arg10: memref<128x128xbf16, #tpu.memory_space<vmem>>, %arg11: memref<1x128xf32, #tpu.memory_space<vmem>>, %arg12: memref<1x128xf32, #tpu.memory_space<vmem>>, %arg13: memref<128x128xbf16, #tpu.memory_space<vmem>>, %arg14: memref<1x128xf32, #tpu.memory_space<vmem>>, %arg15: memref<128x128xbf16, #tpu.memory_space<vmem>>, %arg16: memref<1x128xf32, #tpu.memory_space<vmem>>, %arg17: memref<8x128xf32, #tpu.memory_space<vmem>>) attributes {dimension_semantics = [#tpu.dimension_semantics<parallel>], iteration_bounds = array<i64: 1>, scalar_prefetch = 0 : i64, scratch_operands = 0 : i64, tpu.core_type = #tpu.core_type<tc>, window_params = [{transform_indices = @transform_0, window_bounds = array<i64: 8, 128>}, {transform_indices = @transform_1, window_bounds = array<i64: 8, 16, 128>}, {pipeline_mode = #tpu.pipeline_mode<synchronous>, transform_indices = @transform_2, window_bounds = array<i64: 128, 128>}, {pipeline_mode = #tpu.pipeline_mode<synchronous>, transform_indices = @transform_3, window_bounds = array<i64: 1, 128>}, {pipeline_mode = #tpu.pipeline_mode<synchronous>, transform_indices = @transform_4, window_bounds = array<i64: 128, 256>}, {pipeline_mode = #tpu.pipeline_mode<synchronous>, transform_indices = @transform_5, window_bounds = array<i64: 1, 256>}, {pipeline_mode = #tpu.pipeline_mode<synchronous>, transform_indices = @transform_6, window_bounds = array<i64: 128, 256>}, {pipeline_mode = #tpu.pipeline_mode<synchronous>, transform_indices = @transform_7, window_bounds = array<i64: 1, 128>}, {pipeline_mode = #tpu.pipeline_mode<synchronous>, transform_indices = @transform_8, window_bounds = array<i64: 1, 128>}, {pipeline_mode = #tpu.pipeline_mode<synchronous>, transform_indices = @transform_9, window_bounds = array<i64: 128, 128>}, {pipeline_mode = #tpu.pipeline_mode<synchronous>, transform_indices = @transform_10, window_bounds = array<i64: 1, 128>}, {pipeline_mode = #tpu.pipeline_mode<synchronous>, transform_indices = @transform_11, window_bounds = array<i64: 1, 128>}, {pipeline_mode = #tpu.pipeline_mode<synchronous>, transform_indices = @transform_12, window_bounds = array<i64: 128, 128>}, {pipeline_mode = #tpu.pipeline_mode<synchronous>, transform_indices = @transform_13, window_bounds = array<i64: 1, 128>}, {pipeline_mode = #tpu.pipeline_mode<synchronous>, transform_indices = @transform_14, window_bounds = array<i64: 128, 128>}, {pipeline_mode = #tpu.pipeline_mode<synchronous>, transform_indices = @transform_15, window_bounds = array<i64: 1, 128>}, {transform_indices = @transform_16, window_bounds = array<i64: 8, 128>}]} {
    %c0 = arith.constant 0 : index
    %c0_0 = arith.constant 0 : index
    %0 = vector.load %arg1[%c0, %c0_0] : memref<8x128xbf16, #tpu.memory_space<vmem>>, vector<8x128xbf16>
    %c0_1 = arith.constant 0 : index
    %c0_2 = arith.constant 0 : index
    %c0_3 = arith.constant 0 : index
    %1 = vector.load %arg2[%c0_1, %c0_2, %c0_3] : memref<8x16x128xbf16, #tpu.memory_space<vmem>>, vector<8x16x128xbf16>
    %c0_4 = arith.constant 0 : index
    %c0_5 = arith.constant 0 : index
    %2 = vector.load %arg3[%c0_4, %c0_5] : memref<128x128xbf16, #tpu.memory_space<vmem>>, vector<128x128xbf16>
    %cst = arith.constant dense<0.000000e+00> : vector<8x128xf32>
    %3 = tpu.matmul %0, %2, %cst {dimension_numbers = #tpu.dot_dimension_numbers<[1], [0], [0], [1], [0, 0, 1, 1], [], []>} : vector<8x128xbf16>, vector<128x128xbf16>, vector<8x128xf32> -> vector<8x128xf32>
    %c0_6 = arith.constant 0 : index
    %c0_7 = arith.constant 0 : index
    %4 = vector.load %arg4[%c0_6, %c0_7] : memref<1x128xf32, #tpu.memory_space<vmem>>, vector<1x128xf32>
    %5 = vector.broadcast %4 : vector<1x128xf32> to vector<8x128xf32>
    %6 = arith.addf %3, %5 : vector<8x128xf32>
    %7 = math.tanh %6 : vector<8x128xf32>
    %8 = arith.truncf %7 : vector<8x128xf32> to vector<8x128xbf16>
    %9 = vector.shape_cast %1 : vector<8x16x128xbf16> to vector<128x128xbf16>
    %c0_8 = arith.constant 0 : index
    %c0_9 = arith.constant 0 : index
    %10 = vector.load %arg5[%c0_8, %c0_9] : memref<128x256xbf16, #tpu.memory_space<vmem>>, vector<128x256xbf16>
    %cst_10 = arith.constant dense<0.000000e+00> : vector<128x256xf32>
    %11 = tpu.matmul %9, %10, %cst_10 {dimension_numbers = #tpu.dot_dimension_numbers<[1], [0], [0], [1], [0, 0, 1, 1], [], []>} : vector<128x128xbf16>, vector<128x256xbf16>, vector<128x256xf32> -> vector<128x256xf32>
    %c0_11 = arith.constant 0 : index
    %c0_12 = arith.constant 0 : index
    %12 = vector.load %arg6[%c0_11, %c0_12] : memref<1x256xf32, #tpu.memory_space<vmem>>, vector<1x256xf32>
    %13 = vector.broadcast %12 : vector<1x256xf32> to vector<128x256xf32>
    %14 = arith.addf %11, %13 : vector<128x256xf32>
    %cst_13 = arith.constant 0.000000e+00 : f32
    %15 = vector.broadcast %cst_13 : f32 to vector<128x256xf32>
    %16 = arith.maximumf %14, %15 : vector<128x256xf32>
    %17 = vector.shape_cast %16 : vector<128x256xf32> to vector<8x16x256xf32>
    %18 = vector.extract_strided_slice %17 {offsets = [0, 0, 0], sizes = [8, 16, 128], strides = [1, 1, 1]} : vector<8x16x256xf32> to vector<8x16x128xf32>
    %19 = vector.extract_strided_slice %17 {offsets = [0, 0, 128], sizes = [8, 16, 128], strides = [1, 1, 1]} : vector<8x16x256xf32> to vector<8x16x128xf32>
    %c0_14 = arith.constant 0 : index
    %c0_15 = arith.constant 0 : index
    %20 = vector.load %arg7[%c0_14, %c0_15] : memref<128x256xbf16, #tpu.memory_space<vmem>>, vector<128x256xbf16>
    %cst_16 = arith.constant dense<0.000000e+00> : vector<8x256xf32>
    %21 = tpu.matmul %8, %20, %cst_16 {dimension_numbers = #tpu.dot_dimension_numbers<[1], [0], [0], [1], [0, 0, 1, 1], [], []>} : vector<8x128xbf16>, vector<128x256xbf16>, vector<8x256xf32> -> vector<8x256xf32>
    %22 = vector.extract_strided_slice %21 {offsets = [0, 0], sizes = [8, 128], strides = [1, 1]} : vector<8x256xf32> to vector<8x128xf32>
    %23 = vector.extract_strided_slice %21 {offsets = [0, 128], sizes = [8, 128], strides = [1, 1]} : vector<8x256xf32> to vector<8x128xf32>
    %24 = tpu.iota {dimensions = array<i32: 1>} : vector<1x16xi32>
    %c8_i32 = arith.constant 8 : i32
    %25 = vector.broadcast %c8_i32 : i32 to vector<1x16xi32>
    %26 = arith.cmpi slt, %24, %25 : vector<1x16xi32>
    %c0_17 = arith.constant 0 : index
    %c0_18 = arith.constant 0 : index
    %27 = vector.load %arg8[%c0_17, %c0_18] : memref<1x128xf32, #tpu.memory_space<vmem>>, vector<1x128xf32>
    %28 = vector.broadcast %27 : vector<1x128xf32> to vector<8x128xf32>
    %29 = arith.addf %22, %28 : vector<8x128xf32>
    %cst_19 = arith.constant 0.000000e+00 : f32
    %30 = vector.broadcast %cst_19 : f32 to vector<8x128xf32>
    %31 = arith.maximumf %29, %30 : vector<8x128xf32>
    %c0_20 = arith.constant 0 : index
    %c0_21 = arith.constant 0 : index
    %32 = vector.load %arg9[%c0_20, %c0_21] : memref<1x128xf32, #tpu.memory_space<vmem>>, vector<1x128xf32>
    %33 = vector.broadcast %32 : vector<1x128xf32> to vector<8x128xf32>
    %34 = arith.mulf %31, %33 : vector<8x128xf32>
    %35 = vector.shape_cast %34 : vector<8x128xf32> to vector<8x1x128xf32>
    %36 = vector.broadcast %35 : vector<8x1x128xf32> to vector<8x16x128xf32>
    %37 = arith.mulf %18, %36 : vector<8x16x128xf32>
    %cst_22 = arith.constant dense<0.000000e+00> : vector<8x16xf32>
    %38 = vector.multi_reduction <add>, %37, %cst_22 [2] : vector<8x16x128xf32> to vector<8x16xf32>
    %cst_23 = arith.constant -1.000000e+30 : f32
    %39 = vector.shape_cast %26 : vector<1x16xi1> to vector<1x16xi1>
    %40 = vector.broadcast %39 : vector<1x16xi1> to vector<8x16xi1>
    %41 = vector.broadcast %cst_23 : f32 to vector<8x16xf32>
    %42 = arith.select %40, %38, %41 : vector<8x16xi1>, vector<8x16xf32>
    %cst_24 = arith.constant dense<0xFF800000> : vector<8xf32>
    %43 = vector.multi_reduction <maximumf>, %42, %cst_24 [1] : vector<8x16xf32> to vector<8xf32>
    %44 = vector.shape_cast %43 : vector<8xf32> to vector<8x1xf32>
    %45 = vector.broadcast %44 : vector<8x1xf32> to vector<8x16xf32>
    %46 = arith.subf %42, %45 : vector<8x16xf32>
    %47 = math.exp %46 : vector<8x16xf32>
    %cst_25 = arith.constant dense<0.000000e+00> : vector<8xf32>
    %48 = vector.multi_reduction <add>, %47, %cst_25 [1] : vector<8x16xf32> to vector<8xf32>
    %49 = vector.shape_cast %48 : vector<8xf32> to vector<8x1xf32>
    %50 = tpu.reciprocal %49 {approx = true} : vector<8x1xf32> -> vector<8x1xf32>
    %51 = vector.broadcast %50 : vector<8x1xf32> to vector<8x16xf32>
    %52 = arith.mulf %47, %51 : vector<8x16xf32>
    %53 = vector.shape_cast %52 : vector<8x16xf32> to vector<8x16x1xf32>
    %54 = arith.extf %1 : vector<8x16x128xbf16> to vector<8x16x128xf32>
    %55 = vector.broadcast %53 : vector<8x16x1xf32> to vector<8x16x128xf32>
    %56 = arith.mulf %55, %54 : vector<8x16x128xf32>
    %cst_26 = arith.constant dense<0.000000e+00> : vector<8x128xf32>
    %57 = vector.multi_reduction <add>, %56, %cst_26 [1] : vector<8x16x128xf32> to vector<8x128xf32>
    %58 = arith.truncf %57 : vector<8x128xf32> to vector<8x128xbf16>
    %c0_27 = arith.constant 0 : index
    %c0_28 = arith.constant 0 : index
    %59 = vector.load %arg10[%c0_27, %c0_28] : memref<128x128xbf16, #tpu.memory_space<vmem>>, vector<128x128xbf16>
    %cst_29 = arith.constant dense<0.000000e+00> : vector<8x128xf32>
    %60 = tpu.matmul %58, %59, %cst_29 {dimension_numbers = #tpu.dot_dimension_numbers<[1], [0], [0], [1], [0, 0, 1, 1], [], []>} : vector<8x128xbf16>, vector<128x128xbf16>, vector<8x128xf32> -> vector<8x128xf32>
    %61 = arith.addf %23, %60 : vector<8x128xf32>
    %c0_30 = arith.constant 0 : index
    %c0_31 = arith.constant 0 : index
    %62 = vector.load %arg11[%c0_30, %c0_31] : memref<1x128xf32, #tpu.memory_space<vmem>>, vector<1x128xf32>
    %63 = vector.broadcast %62 : vector<1x128xf32> to vector<8x128xf32>
    %64 = arith.addf %61, %63 : vector<8x128xf32>
    %cst_32 = arith.constant 0.000000e+00 : f32
    %65 = vector.broadcast %cst_32 : f32 to vector<8x128xf32>
    %66 = arith.maximumf %64, %65 : vector<8x128xf32>
    %c0_33 = arith.constant 0 : index
    %c0_34 = arith.constant 0 : index
    %67 = vector.load %arg12[%c0_33, %c0_34] : memref<1x128xf32, #tpu.memory_space<vmem>>, vector<1x128xf32>
    %68 = vector.broadcast %67 : vector<1x128xf32> to vector<8x128xf32>
    %69 = arith.mulf %66, %68 : vector<8x128xf32>
    %70 = vector.shape_cast %69 : vector<8x128xf32> to vector<8x1x128xf32>
    %71 = vector.broadcast %70 : vector<8x1x128xf32> to vector<8x16x128xf32>
    %72 = arith.mulf %19, %71 : vector<8x16x128xf32>
    %cst_35 = arith.constant dense<0.000000e+00> : vector<8x16xf32>
    %73 = vector.multi_reduction <add>, %72, %cst_35 [2] : vector<8x16x128xf32> to vector<8x16xf32>
    %cst_36 = arith.constant -1.000000e+30 : f32
    %74 = vector.shape_cast %26 : vector<1x16xi1> to vector<1x16xi1>
    %75 = vector.broadcast %74 : vector<1x16xi1> to vector<8x16xi1>
    %76 = vector.broadcast %cst_36 : f32 to vector<8x16xf32>
    %77 = arith.select %75, %73, %76 : vector<8x16xi1>, vector<8x16xf32>
    %cst_37 = arith.constant dense<0xFF800000> : vector<8xf32>
    %78 = vector.multi_reduction <maximumf>, %77, %cst_37 [1] : vector<8x16xf32> to vector<8xf32>
    %79 = vector.shape_cast %78 : vector<8xf32> to vector<8x1xf32>
    %80 = vector.broadcast %79 : vector<8x1xf32> to vector<8x16xf32>
    %81 = arith.subf %77, %80 : vector<8x16xf32>
    %82 = math.exp %81 : vector<8x16xf32>
    %cst_38 = arith.constant dense<0.000000e+00> : vector<8xf32>
    %83 = vector.multi_reduction <add>, %82, %cst_38 [1] : vector<8x16xf32> to vector<8xf32>
    %84 = vector.shape_cast %83 : vector<8xf32> to vector<8x1xf32>
    %85 = tpu.reciprocal %84 {approx = true} : vector<8x1xf32> -> vector<8x1xf32>
    %86 = vector.broadcast %85 : vector<8x1xf32> to vector<8x16xf32>
    %87 = arith.mulf %82, %86 : vector<8x16xf32>
    %88 = vector.shape_cast %87 : vector<8x16xf32> to vector<8x16x1xf32>
    %89 = arith.extf %1 : vector<8x16x128xbf16> to vector<8x16x128xf32>
    %90 = vector.broadcast %88 : vector<8x16x1xf32> to vector<8x16x128xf32>
    %91 = arith.mulf %90, %89 : vector<8x16x128xf32>
    %cst_39 = arith.constant dense<0.000000e+00> : vector<8x128xf32>
    %92 = vector.multi_reduction <add>, %91, %cst_39 [1] : vector<8x16x128xf32> to vector<8x128xf32>
    %93 = arith.truncf %92 : vector<8x128xf32> to vector<8x128xbf16>
    %c0_40 = arith.constant 0 : index
    %c0_41 = arith.constant 0 : index
    %94 = vector.load %arg10[%c0_40, %c0_41] : memref<128x128xbf16, #tpu.memory_space<vmem>>, vector<128x128xbf16>
    %cst_42 = arith.constant dense<0.000000e+00> : vector<8x128xf32>
    %95 = tpu.matmul %93, %94, %cst_42 {dimension_numbers = #tpu.dot_dimension_numbers<[1], [0], [0], [1], [0, 0, 1, 1], [], []>} : vector<8x128xbf16>, vector<128x128xbf16>, vector<8x128xf32> -> vector<8x128xf32>
    %96 = arith.addf %23, %95 : vector<8x128xf32>
    %c0_43 = arith.constant 0 : index
    %c0_44 = arith.constant 0 : index
    %97 = vector.load %arg11[%c0_43, %c0_44] : memref<1x128xf32, #tpu.memory_space<vmem>>, vector<1x128xf32>
    %98 = vector.broadcast %97 : vector<1x128xf32> to vector<8x128xf32>
    %99 = arith.addf %96, %98 : vector<8x128xf32>
    %cst_45 = arith.constant 0.000000e+00 : f32
    %100 = vector.broadcast %cst_45 : f32 to vector<8x128xf32>
    %101 = arith.maximumf %99, %100 : vector<8x128xf32>
    %c0_46 = arith.constant 0 : index
    %c0_47 = arith.constant 0 : index
    %102 = vector.load %arg12[%c0_46, %c0_47] : memref<1x128xf32, #tpu.memory_space<vmem>>, vector<1x128xf32>
    %103 = vector.broadcast %102 : vector<1x128xf32> to vector<8x128xf32>
    %104 = arith.mulf %101, %103 : vector<8x128xf32>
    %105 = vector.shape_cast %104 : vector<8x128xf32> to vector<8x1x128xf32>
    %106 = vector.broadcast %105 : vector<8x1x128xf32> to vector<8x16x128xf32>
    %107 = arith.mulf %19, %106 : vector<8x16x128xf32>
    %cst_48 = arith.constant dense<0.000000e+00> : vector<8x16xf32>
    %108 = vector.multi_reduction <add>, %107, %cst_48 [2] : vector<8x16x128xf32> to vector<8x16xf32>
    %cst_49 = arith.constant -1.000000e+30 : f32
    %109 = vector.shape_cast %26 : vector<1x16xi1> to vector<1x16xi1>
    %110 = vector.broadcast %109 : vector<1x16xi1> to vector<8x16xi1>
    %111 = vector.broadcast %cst_49 : f32 to vector<8x16xf32>
    %112 = arith.select %110, %108, %111 : vector<8x16xi1>, vector<8x16xf32>
    %cst_50 = arith.constant dense<0xFF800000> : vector<8xf32>
    %113 = vector.multi_reduction <maximumf>, %112, %cst_50 [1] : vector<8x16xf32> to vector<8xf32>
    %114 = vector.shape_cast %113 : vector<8xf32> to vector<8x1xf32>
    %115 = vector.broadcast %114 : vector<8x1xf32> to vector<8x16xf32>
    %116 = arith.subf %112, %115 : vector<8x16xf32>
    %117 = math.exp %116 : vector<8x16xf32>
    %cst_51 = arith.constant dense<0.000000e+00> : vector<8xf32>
    %118 = vector.multi_reduction <add>, %117, %cst_51 [1] : vector<8x16xf32> to vector<8xf32>
    %119 = vector.shape_cast %118 : vector<8xf32> to vector<8x1xf32>
    %120 = tpu.reciprocal %119 {approx = true} : vector<8x1xf32> -> vector<8x1xf32>
    %121 = vector.broadcast %120 : vector<8x1xf32> to vector<8x16xf32>
    %122 = arith.mulf %117, %121 : vector<8x16xf32>
    %123 = vector.shape_cast %122 : vector<8x16xf32> to vector<8x16x1xf32>
    %124 = arith.extf %1 : vector<8x16x128xbf16> to vector<8x16x128xf32>
    %125 = vector.broadcast %123 : vector<8x16x1xf32> to vector<8x16x128xf32>
    %126 = arith.mulf %125, %124 : vector<8x16x128xf32>
    %cst_52 = arith.constant dense<0.000000e+00> : vector<8x128xf32>
    %127 = vector.multi_reduction <add>, %126, %cst_52 [1] : vector<8x16x128xf32> to vector<8x128xf32>
    %128 = arith.truncf %127 : vector<8x128xf32> to vector<8x128xbf16>
    %c0_53 = arith.constant 0 : index
    %c0_54 = arith.constant 0 : index
    %129 = vector.load %arg13[%c0_53, %c0_54] : memref<128x128xbf16, #tpu.memory_space<vmem>>, vector<128x128xbf16>
    %cst_55 = arith.constant dense<0.000000e+00> : vector<8x128xf32>
    %130 = tpu.matmul %128, %129, %cst_55 {dimension_numbers = #tpu.dot_dimension_numbers<[1], [0], [0], [1], [0, 0, 1, 1], [], []>} : vector<8x128xbf16>, vector<128x128xbf16>, vector<8x128xf32> -> vector<8x128xf32>
    %c0_56 = arith.constant 0 : index
    %c0_57 = arith.constant 0 : index
    %131 = vector.load %arg14[%c0_56, %c0_57] : memref<1x128xf32, #tpu.memory_space<vmem>>, vector<1x128xf32>
    %132 = vector.broadcast %131 : vector<1x128xf32> to vector<8x128xf32>
    %133 = arith.addf %130, %132 : vector<8x128xf32>
    %cst_58 = arith.constant 0.000000e+00 : f32
    %134 = vector.broadcast %cst_58 : f32 to vector<8x128xf32>
    %135 = arith.maximumf %133, %134 : vector<8x128xf32>
    %136 = arith.truncf %135 : vector<8x128xf32> to vector<8x128xbf16>
    %c0_59 = arith.constant 0 : index
    %c0_60 = arith.constant 0 : index
    %137 = vector.load %arg15[%c0_59, %c0_60] : memref<128x128xbf16, #tpu.memory_space<vmem>>, vector<128x128xbf16>
    %cst_61 = arith.constant dense<0.000000e+00> : vector<8x128xf32>
    %138 = tpu.matmul %136, %137, %cst_61 {dimension_numbers = #tpu.dot_dimension_numbers<[1], [0], [0], [1], [0, 0, 1, 1], [], []>} : vector<8x128xbf16>, vector<128x128xbf16>, vector<8x128xf32> -> vector<8x128xf32>
    %c0_62 = arith.constant 0 : index
    %c0_63 = arith.constant 0 : index
    %139 = vector.load %arg16[%c0_62, %c0_63] : memref<1x128xf32, #tpu.memory_space<vmem>>, vector<1x128xf32>
    %140 = vector.broadcast %139 : vector<1x128xf32> to vector<8x128xf32>
    %141 = arith.addf %138, %140 : vector<8x128xf32>
    %c0_64 = arith.constant 0 : index
    %c0_65 = arith.constant 0 : index
    %142 = vector.load %arg17[%c0_64, %c0_65] : memref<8x128xf32, #tpu.memory_space<vmem>>, vector<8x128xf32>
    tpu.vector_store %arg17[%c0_64, %c0_65], %141 {strides = array<i32>} : memref<8x128xf32, #tpu.memory_space<vmem>>, vector<8x128xf32>,
    return
  }
  func.func @transform_0(%arg0: i32) -> (i32, i32) {
    %c0_i32 = arith.constant 0 : i32
    %c0_i32_0 = arith.constant 0 : i32
    return %arg0, %c0_i32 : i32, i32
  }
  func.func @transform_1(%arg0: i32) -> (i32, i32, i32) {
    %c0_i32 = arith.constant 0 : i32
    %c0_i32_0 = arith.constant 0 : i32
    %c0_i32_1 = arith.constant 0 : i32
    return %arg0, %c0_i32, %c0_i32_0 : i32, i32, i32
  }
  func.func @transform_2(%arg0: i32) -> (i32, i32) {
    %c0_i32 = arith.constant 0 : i32
    %c0_i32_0 = arith.constant 0 : i32
    %c0_i32_1 = arith.constant 0 : i32
    return %c0_i32, %c0_i32_0 : i32, i32
  }
  func.func @transform_3(%arg0: i32) -> (i32, i32) {
    %c0_i32 = arith.constant 0 : i32
    %c0_i32_0 = arith.constant 0 : i32
    %c0_i32_1 = arith.constant 0 : i32
    return %c0_i32, %c0_i32_0 : i32, i32
  }
  func.func @transform_4(%arg0: i32) -> (i32, i32) {
    %c0_i32 = arith.constant 0 : i32
    %c0_i32_0 = arith.constant 0 : i32
    %c0_i32_1 = arith.constant 0 : i32
    return %c0_i32, %c0_i32_0 : i32, i32
  }
  func.func @transform_5(%arg0: i32) -> (i32, i32) {
    %c0_i32 = arith.constant 0 : i32
    %c0_i32_0 = arith.constant 0 : i32
    %c0_i32_1 = arith.constant 0 : i32
    return %c0_i32, %c0_i32_0 : i32, i32
  }
  func.func @transform_6(%arg0: i32) -> (i32, i32) {
    %c0_i32 = arith.constant 0 : i32
    %c0_i32_0 = arith.constant 0 : i32
    %c0_i32_1 = arith.constant 0 : i32
    return %c0_i32, %c0_i32_0 : i32, i32
  }
  func.func @transform_7(%arg0: i32) -> (i32, i32) {
    %c0_i32 = arith.constant 0 : i32
    %c0_i32_0 = arith.constant 0 : i32
    %c0_i32_1 = arith.constant 0 : i32
    return %c0_i32, %c0_i32_0 : i32, i32
  }
  func.func @transform_8(%arg0: i32) -> (i32, i32) {
    %c0_i32 = arith.constant 0 : i32
    %c0_i32_0 = arith.constant 0 : i32
    %c0_i32_1 = arith.constant 0 : i32
    return %c0_i32, %c0_i32_0 : i32, i32
  }
  func.func @transform_9(%arg0: i32) -> (i32, i32) {
    %c0_i32 = arith.constant 0 : i32
    %c0_i32_0 = arith.constant 0 : i32
    %c0_i32_1 = arith.constant 0 : i32
    return %c0_i32, %c0_i32_0 : i32, i32
  }
  func.func @transform_10(%arg0: i32) -> (i32, i32) {
    %c0_i32 = arith.constant 0 : i32
    %c0_i32_0 = arith.constant 0 : i32
    %c0_i32_1 = arith.constant 0 : i32
    return %c0_i32, %c0_i32_0 : i32, i32
  }
  func.func @transform_11(%arg0: i32) -> (i32, i32) {
    %c0_i32 = arith.constant 0 : i32
    %c0_i32_0 = arith.constant 0 : i32
    %c0_i32_1 = arith.constant 0 : i32
    return %c0_i32, %c0_i32_0 : i32, i32
  }
  func.func @transform_12(%arg0: i32) -> (i32, i32) {
    %c0_i32 = arith.constant 0 : i32
    %c0_i32_0 = arith.constant 0 : i32
    %c0_i32_1 = arith.constant 0 : i32
    return %c0_i32, %c0_i32_0 : i32, i32
  }
  func.func @transform_13(%arg0: i32) -> (i32, i32) {
    %c0_i32 = arith.constant 0 : i32
    %c0_i32_0 = arith.constant 0 : i32
    %c0_i32_1 = arith.constant 0 : i32
    return %c0_i32, %c0_i32_0 : i32, i32
  }
  func.func @transform_14(%arg0: i32) -> (i32, i32) {
    %c0_i32 = arith.constant 0 : i32
    %c0_i32_0 = arith.constant 0 : i32
    %c0_i32_1 = arith.constant 0 : i32
    return %c0_i32, %c0_i32_0 : i32, i32
  }
  func.func @transform_15(%arg0: i32) -> (i32, i32) {
    %c0_i32 = arith.constant 0 : i32
    %c0_i32_0 = arith.constant 0 : i32
    %c0_i32_1 = arith.constant 0 : i32
    return %c0_i32, %c0_i32_0 : i32, i32
  }
  func.func @transform_16(%arg0: i32) -> (i32, i32) {
    %c0_i32 = arith.constant 0 : i32
    %c0_i32_0 = arith.constant 0 : i32
    return %arg0, %c0_i32 : i32, i32
  }
}

</mosaic_0001>

<llo_original>
// kernel: tpu_custom_call.1
$region0: #{tpu_custom_call.1}
  #allocation0 [shape = 'u32[]', space=smem, size = 0x4, offset = 0x4, fixed_abs, tag = 'smem constant byte address 0x4 - core index']
  #allocation1 [shape = 'u32[144,128]{1,0:T(1,128)}', space=vmem, size = 0x12000, scoped, tag = 'internal scratch']
  %s0 = inlined_call_operand.hbm [shape: bf16[8,128], index: 0, kind: input, shape index: {}]
  %s1 = inlined_call_operand.hbm [shape: bf16[8,16,128], index: 1, kind: input, shape index: {}]
  %s2 = inlined_call_operand.hbm [shape: bf16[128,128], index: 2, kind: input, shape index: {}]
  %s3 = inlined_call_operand.vmem [shape: f32[1,128], index: 3, kind: input, shape index: {}]
  %s4 = inlined_call_operand.hbm [shape: bf16[128,256], index: 4, kind: input, shape index: {}]
  %s5 = inlined_call_operand.vmem [shape: f32[1,256], index: 5, kind: input, shape index: {}]
  %s6 = inlined_call_operand.hbm [shape: bf16[128,256], index: 6, kind: input, shape index: {}]
  %s7 = inlined_call_operand.vmem [shape: f32[1,128], index: 7, kind: input, shape index: {}]
  %s8 = inlined_call_operand.vmem [shape: f32[1,128], index: 8, kind: input, shape index: {}]
  %s9 = inlined_call_operand.hbm [shape: bf16[128,128], index: 9, kind: input, shape index: {}]
  %s10 = inlined_call_operand.vmem [shape: f32[1,128], index: 10, kind: input, shape index: {}]
  %s11 = inlined_call_operand.vmem [shape: f32[1,128], index: 11, kind: input, shape index: {}]
  %s12 = inlined_call_operand.hbm [shape: bf16[128,128], index: 12, kind: input, shape index: {}]
  %s13 = inlined_call_operand.vmem [shape: f32[1,128], index: 13, kind: input, shape index: {}]
  %s14 = inlined_call_operand.hbm [shape: bf16[128,128], index: 14, kind: input, shape index: {}]
  %s15 = inlined_call_operand.vmem [shape: f32[1,128], index: 15, kind: input, shape index: {}]
  %s16 = inlined_call_operand.hbm [shape: f32[8,128], index: 16, kind: output, shape index: {}]
  %s17 = sld [smem:[#allocation0]]
  $region106: #{tpu_custom_call.1} parent=0
    _
  %s19 = ssub.s32 1, %s17
  %s20 = scalar_select 0, %s19, %s17
  $region1: #{tpu_custom_call.1} parent=0
    #allocation2 [shape = 'u8[2048]{0}', space=vmem, size = 0x800, scoped, tag = 'input window, operand 0, single buffered']
    #allocation3 [shape = 's32[1]{0}', space=sflag, size = 0x4, scoped, tag = 'scoped memory for tpu_custom_call.1']
    #allocation4 [shape = 's32[1]{0}', space=sflag, size = 0x4, scoped, tag = 'scoped memory for tpu_custom_call.1']
    #allocation5 [shape = 'u8[32768]{0}', space=vmem, size = 0x8000, scoped, tag = 'input window, operand 1, single buffered']
    #allocation6 [shape = 's32[1]{0}', space=sflag, size = 0x4, scoped, tag = 'scoped memory for tpu_custom_call.1']
    #allocation7 [shape = 'u8[32768]{0}', space=vmem, size = 0x8000, scoped, tag = 'input window, operand 2, single buffered']
    #allocation8 [shape = 'u8[65536]{0}', space=vmem, size = 0x10000, scoped, tag = 'input window, operand 4, single buffered']
    #allocation9 [shape = 's32[1]{0}', space=sflag, size = 0x4, scoped, tag = 'scoped memory for tpu_custom_call.1']
    #allocation10 [shape = 'u8[65536]{0}', space=vmem, size = 0x10000, scoped, tag = 'input window, operand 6, single buffered']
    #allocation11 [shape = 'u8[32768]{0}', space=vmem, size = 0x8000, scoped, tag = 'input window, operand 9, single buffered']
    #allocation12 [shape = 's32[1]{0}', space=sflag, size = 0x4, scoped, tag = 'scoped memory for tpu_custom_call.1']
    #allocation13 [shape = 'u8[32768]{0}', space=vmem, size = 0x8000, scoped, tag = 'input window, operand 12, single buffered']
    #allocation14 [shape = 'u8[32768]{0}', space=vmem, size = 0x8000, scoped, tag = 'input window, operand 14, single buffered']
    #allocation15 [shape = 's32[1]{0}', space=sflag, size = 0x4, scoped, tag = 'scoped memory for tpu_custom_call.1']
    #allocation16 [shape = 'u8[4096]{0}', space=vmem, size = 0x1000, scoped, tag = 'output window, operand 0, single buffered']
    %21 = vsyncpa [#allocation3], 0
    %22 = vsyncpa [#allocation6], 0
    %23 = vsyncpa [#allocation9], 0
    %24 = vsyncpa [#allocation12], 0
    %25 = vsyncpa [#allocation15], 0
    %26 = vsyncpa [#allocation4], 0
    // Predicated region
    $region2: #{tpu_custom_call.1} parent=1 // pred_check
      _
    $region3: #{tpu_custom_call.1} parent=1 // pred_check_branch
      %28 = sbr.rel (0) target = $region5
    $region4: #{tpu_custom_call.1} parent=1 // pred_region
      %s30 = ssub.s32 64, 64
      %31 = vsyncadd [#allocation3], %s30
      %s33 = sshll.u32 [#allocation2], 4
      %s34 = int_to_ptr.vmem [resolvable:$true] %s33
      %36 = dma.hbm_to_vmem [thread:$0]  %s0, 64, %s34, [#allocation3]
    $region5: #{tpu_custom_call.1} parent=1 // pred_fallthru
      _
    // Predicated region
    $region6: #{tpu_custom_call.1} parent=1 // pred_check
      _
    $region7: #{tpu_custom_call.1} parent=1 // pred_check_branch
      %38 = sbr.rel (0) target = $region9
    $region8: #{tpu_custom_call.1} parent=1 // pred_region
      %s40 = ssub.s32 1024, 1024
      %41 = vsyncadd [#allocation6], %s40
      %s42 = sshll.u32 [#allocation5], 4
      %s43 = int_to_ptr.vmem [resolvable:$true] %s42
      %48 = dma.hbm_to_vmem [thread:$0]  %s1, 1024, %s43, [#allocation6], 64, 64, 4
    $region9: #{tpu_custom_call.1} parent=1 // pred_fallthru
      _
    // Predicated region
    $region10: #{tpu_custom_call.1} parent=1 // pred_check
      _
    $region11: #{tpu_custom_call.1} parent=1 // pred_check_branch
      %50 = sbr.rel (0) target = $region13
    $region12: #{tpu_custom_call.1} parent=1 // pred_region
      %s52 = ssub.s32 1024, 1024
      %53 = vsyncadd [#allocation6], %s52
      %s54 = sshll.u32 [#allocation7], 4
      %s55 = int_to_ptr.vmem [resolvable:$true] %s54
      %60 = dma.hbm_to_vmem [thread:$0]  %s2, 1024, %s55, [#allocation6], 64, 64, 4
    $region13: #{tpu_custom_call.1} parent=1 // pred_fallthru
      _
    // Predicated region
    $region14: #{tpu_custom_call.1} parent=1 // pred_check
      _
    $region15: #{tpu_custom_call.1} parent=1 // pred_check_branch
      %62 = sbr.rel (0) target = $region17
    $region16: #{tpu_custom_call.1} parent=1 // pred_region
      _
    $region17: #{tpu_custom_call.1} parent=1 // pred_fallthru
      _
    // Predicated region
    $region18: #{tpu_custom_call.1} parent=1 // pred_check
      _
    $region19: #{tpu_custom_call.1} parent=1 // pred_check_branch
      %64 = sbr.rel (0) target = $region21
    $region20: #{tpu_custom_call.1} parent=1 // pred_region
      %s66 = ssub.s32 2048, 2048
      %67 = vsyncadd [#allocation9], %s66
      %s68 = sshll.u32 [#allocation8], 4
      %s69 = int_to_ptr.vmem [resolvable:$true] %s68
      %74 = dma.hbm_to_vmem [thread:$0]  %s4, 2048, %s69, [#allocation9], 128, 128, 8
    $region21: #{tpu_custom_call.1} parent=1 // pred_fallthru
      _
    // Predicated region
    $region22: #{tpu_custom_call.1} parent=1 // pred_check
      _
    $region23: #{tpu_custom_call.1} parent=1 // pred_check_branch
      %76 = sbr.rel (0) target = $region25
    $region24: #{tpu_custom_call.1} parent=1 // pred_region
      _
    $region25: #{tpu_custom_call.1} parent=1 // pred_fallthru
      _
    // Predicated region
    $region26: #{tpu_custom_call.1} parent=1 // pred_check
      _
    $region27: #{tpu_custom_call.1} parent=1 // pred_check_branch
      %78 = sbr.rel (0) target = $region29
    $region28: #{tpu_custom_call.1} parent=1 // pred_region
      %s80 = ssub.s32 2048, 2048
      %81 = vsyncadd [#allocation9], %s80
      %s82 = sshll.u32 [#allocation10], 4
      %s83 = int_to_ptr.vmem [resolvable:$true] %s82
      %88 = dma.hbm_to_vmem [thread:$0]  %s6, 2048, %s83, [#allocation9], 128, 128, 8
    $region29: #{tpu_custom_call.1} parent=1 // pred_fallthru
      _
    // Predicated region
    $region30: #{tpu_custom_call.1} parent=1 // pred_check
      _
    $region31: #{tpu_custom_call.1} parent=1 // pred_check_branch
      %90 = sbr.rel (0) target = $region33
    $region32: #{tpu_custom_call.1} parent=1 // pred_region
      _
    $region33: #{tpu_custom_call.1} parent=1 // pred_fallthru
      _
    // Predicated region
    $region34: #{tpu_custom_call.1} parent=1 // pred_check
      _
    $region35: #{tpu_custom_call.1} parent=1 // pred_check_branch
      %92 = sbr.rel (0) target = $region37
    $region36: #{tpu_custom_call.1} parent=1 // pred_region
      _
    $region37: #{tpu_custom_call.1} parent=1 // pred_fallthru
      _
    // Predicated region
    $region38: #{tpu_custom_call.1} parent=1 // pred_check
      _
    $region39: #{tpu_custom_call.1} parent=1 // pred_check_branch
      %94 = sbr.rel (0) target = $region41
    $region40: #{tpu_custom_call.1} parent=1 // pred_region
      %s96 = ssub.s32 1024, 1024
      %97 = vsyncadd [#allocation12], %s96
      %s98 = sshll.u32 [#allocation11], 4
      %s99 = int_to_ptr.vmem [resolvable:$true] %s98
      %104 = dma.hbm_to_vmem [thread:$0]  %s9, 1024, %s99, [#allocation12], 64, 64, 4
    $region41: #{tpu_custom_call.1} parent=1 // pred_fallthru
      _
    // Predicated region
    $region42: #{tpu_custom_call.1} parent=1 // pred_check
      _
    $region43: #{tpu_custom_call.1} parent=1 // pred_check_branch
      %106 = sbr.rel (0) target = $region45
    $region44: #{tpu_custom_call.1} parent=1 // pred_region
      _
    $region45: #{tpu_custom_call.1} parent=1 // pred_fallthru
      _
    // Predicated region
    $region46: #{tpu_custom_call.1} parent=1 // pred_check
      _
    $region47: #{tpu_custom_call.1} parent=1 // pred_check_branch
      %108 = sbr.rel (0) target = $region49
    $region48: #{tpu_custom_call.1} parent=1 // pred_region
      _
    $region49: #{tpu_custom_call.1} parent=1 // pred_fallthru
      _
    // Predicated region
    $region50: #{tpu_custom_call.1} parent=1 // pred_check
      _
    $region51: #{tpu_custom_call.1} parent=1 // pred_check_branch
      %110 = sbr.rel (0) target = $region53
    $region52: #{tpu_custom_call.1} parent=1 // pred_region
      %s112 = ssub.s32 1024, 1024
      %113 = vsyncadd [#allocation12], %s112
      %s114 = sshll.u32 [#allocation13], 4
      %s115 = int_to_ptr.vmem [resolvable:$true] %s114
      %120 = dma.hbm_to_vmem [thread:$0]  %s12, 1024, %s115, [#allocation12], 64, 64, 4
    $region53: #{tpu_custom_call.1} parent=1 // pred_fallthru
      _
    // Predicated region
    $region54: #{tpu_custom_call.1} parent=1 // pred_check
      _
    $region55: #{tpu_custom_call.1} parent=1 // pred_check_branch
      %122 = sbr.rel (0) target = $region57
    $region56: #{tpu_custom_call.1} parent=1 // pred_region
      _
    $region57: #{tpu_custom_call.1} parent=1 // pred_fallthru
      _
    // Predicated region
    $region58: #{tpu_custom_call.1} parent=1 // pred_check
      _
    $region59: #{tpu_custom_call.1} parent=1 // pred_check_branch
      %124 = sbr.rel (0) target = $region61
    $region60: #{tpu_custom_call.1} parent=1 // pred_region
      %s126 = ssub.s32 1024, 1024
      %127 = vsyncadd [#allocation15], %s126
      %s128 = sshll.u32 [#allocation14], 4
      %s129 = int_to_ptr.vmem [resolvable:$true] %s128
      %134 = dma.hbm_to_vmem [thread:$0]  %s14, 1024, %s129, [#allocation15], 64, 64, 4
    $region61: #{tpu_custom_call.1} parent=1 // pred_fallthru
      _
    // Predicated region
    $region62: #{tpu_custom_call.1} parent=1 // pred_check
      _
    $region63: #{tpu_custom_call.1} parent=1 // pred_check_branch
      %136 = sbr.rel (0) target = $region65
    $region64: #{tpu_custom_call.1} parent=1 // pred_region
      _
    $region65: #{tpu_custom_call.1} parent=1 // pred_fallthru
      _
    // Predicated region
    $region66: #{tpu_custom_call.1} parent=1 // pred_check
      _
    $region67: #{tpu_custom_call.1} parent=1 // pred_check_branch
      %138 = sbr.rel (0) target = $region69
    $region68: #{tpu_custom_call.1} parent=1 // pred_region
      %139 = dma.done [#allocation3], 64
    $region69: #{tpu_custom_call.1} parent=1 // pred_fallthru
      _
    // Predicated region
    $region70: #{tpu_custom_call.1} parent=1 // pred_check
      _
    $region71: #{tpu_custom_call.1} parent=1 // pred_check_branch
      %141 = sbr.rel (0) target = $region73
    $region72: #{tpu_custom_call.1} parent=1 // pred_region
      %142 = dma.done [#allocation6], 1024
    $region73: #{tpu_custom_call.1} parent=1 // pred_fallthru
      _
    // Predicated region
    $region74: #{tpu_custom_call.1} parent=1 // pred_check
      _
    $region75: #{tpu_custom_call.1} parent=1 // pred_check_branch
      %144 = sbr.rel (0) target = $region77
    $region76: #{tpu_custom_call.1} parent=1 // pred_region
      %145 = dma.done [#allocation6], 1024
    $region77: #{tpu_custom_call.1} parent=1 // pred_fallthru
      _
    // Predicated region
    $region78: #{tpu_custom_call.1} parent=1 // pred_check
      _
    $region79: #{tpu_custom_call.1} parent=1 // pred_check_branch
      %147 = sbr.rel (0) target = $region81
    $region80: #{tpu_custom_call.1} parent=1 // pred_region
      %148 = dma.done [#allocation9], 2048
    $region81: #{tpu_custom_call.1} parent=1 // pred_fallthru
      _
    // Predicated region
    $region82: #{tpu_custom_call.1} parent=1 // pred_check
      _
    $region83: #{tpu_custom_call.1} parent=1 // pred_check_branch
      %150 = sbr.rel (0) target = $region85
    $region84: #{tpu_custom_call.1} parent=1 // pred_region
      %151 = dma.done [#allocation9], 2048
    $region85: #{tpu_custom_call.1} parent=1 // pred_fallthru
      _
    // Predicated region
    $region86: #{tpu_custom_call.1} parent=1 // pred_check
      _
    $region87: #{tpu_custom_call.1} parent=1 // pred_check_branch
      %153 = sbr.rel (0) target = $region89
    $region88: #{tpu_custom_call.1} parent=1 // pred_region
      %154 = dma.done [#allocation12], 1024
    $region89: #{tpu_custom_call.1} parent=1 // pred_fallthru
      _
    // Predicated region
    $region90: #{tpu_custom_call.1} parent=1 // pred_check
      _
    $region91: #{tpu_custom_call.1} parent=1 // pred_check_branch
      %156 = sbr.rel (0) target = $region93
    $region92: #{tpu_custom_call.1} parent=1 // pred_region
      %157 = dma.done [#allocation12], 1024
    $region93: #{tpu_custom_call.1} parent=1 // pred_fallthru
      _
    // Predicated region
    $region94: #{tpu_custom_call.1} parent=1 // pred_check
      _
    $region95: #{tpu_custom_call.1} parent=1 // pred_check_branch
      %159 = sbr.rel (0) target = $region97
    $region96: #{tpu_custom_call.1} parent=1 // pred_region
      %160 = dma.done [#allocation15], 1024
    $region97: #{tpu_custom_call.1} parent=1 // pred_fallthru
      _
    %v162 = vld [vmem:[#allocation2] sm:$0xf]
    %v163 = vld [vmem:[#allocation5] sm:$0xf]
    %v164 = vld [vmem:[#allocation5 + $0x4] sm:$0xf]
    %v165 = vld [vmem:[#allocation5 + $0x8] sm:$0xf]
    %v166 = vld [vmem:[#allocation5 + $0xc] sm:$0xf]
    %v167 = vld [vmem:[#allocation5 + $0x10] sm:$0xf]
    %v168 = vld [vmem:[#allocation5 + $0x14] sm:$0xf]
    %v169 = vld [vmem:[#allocation5 + $0x18] sm:$0xf]
    %v170 = vld [vmem:[#allocation5 + $0x1c] sm:$0xf]
    %v171 = vld [vmem:[#allocation5 + $0x20] sm:$0xf]
    %v172 = vld [vmem:[#allocation5 + $0x24] sm:$0xf]
    %v173 = vld [vmem:[#allocation5 + $0x28] sm:$0xf]
    %v174 = vld [vmem:[#allocation5 + $0x2c] sm:$0xf]
    %v175 = vld [vmem:[#allocation5 + $0x30] sm:$0xf]
    %v176 = vld [vmem:[#allocation5 + $0x34] sm:$0xf]
    %v177 = vld [vmem:[#allocation5 + $0x38] sm:$0xf]
    %v178 = vld [vmem:[#allocation5 + $0x3c] sm:$0xf]
    %v179 = vld [vmem:[#allocation7] sm:$0xf]
    %v180 = vld [vmem:[#allocation7 + $0x4] sm:$0xf]
    %v181 = vld [vmem:[#allocation7 + $0x8] sm:$0xf]
    %v182 = vld [vmem:[#allocation7 + $0xc] sm:$0xf]
    %v183 = vld [vmem:[#allocation7 + $0x10] sm:$0xf]
    %v184 = vld [vmem:[#allocation7 + $0x14] sm:$0xf]
    %v185 = vld [vmem:[#allocation7 + $0x18] sm:$0xf]
    %v186 = vld [vmem:[#allocation7 + $0x1c] sm:$0xf]
    %v187 = vld [vmem:[#allocation7 + $0x20] sm:$0xf]
    %v188 = vld [vmem:[#allocation7 + $0x24] sm:$0xf]
    %v189 = vld [vmem:[#allocation7 + $0x28] sm:$0xf]
    %v190 = vld [vmem:[#allocation7 + $0x2c] sm:$0xf]
    %v191 = vld [vmem:[#allocation7 + $0x30] sm:$0xf]
    %v192 = vld [vmem:[#allocation7 + $0x34] sm:$0xf]
    %v193 = vld [vmem:[#allocation7 + $0x38] sm:$0xf]
    %v194 = vld [vmem:[#allocation7 + $0x3c] sm:$0xf]
    %v195 = vld [vmem:[%s3] sm:$0x1]
    %v197 = vlaneseq
    %v198 = vshrl.u32 %v197, 7
    %v199 = vsub.s32 0, %v198
    %v200 = vrot.slane %v195, %v199
    %v218 = vunpack.c.l.b16 %v179
    %v219 = vunpack.c.l.b16 %v180
    %v220 = vunpack.c.l.b16 %v181
    %v221 = vunpack.c.l.b16 %v182
    %v222 = vunpack.c.l.b16 %v183
    %v223 = vunpack.c.l.b16 %v184
    %v224 = vunpack.c.l.b16 %v185
    %v225 = vunpack.c.l.b16 %v186
    %v226 = vunpack.c.l.b16 %v187
    %v227 = vunpack.c.l.b16 %v188
    %v228 = vunpack.c.l.b16 %v189
    %v229 = vunpack.c.l.b16 %v190
    %v230 = vunpack.c.l.b16 %v191
    %v231 = vunpack.c.l.b16 %v192
    %v232 = vunpack.c.l.b16 %v193
    %v233 = vunpack.c.l.b16 %v194
    %v234 = vpack.c.b16 %v219, %v218
    %v235 = vpack.c.b16 %v221, %v220
    %v236 = vpack.c.b16 %v223, %v222
    %v237 = vpack.c.b16 %v225, %v224
    %v238 = vpack.c.b16 %v227, %v226
    %v239 = vpack.c.b16 %v229, %v228
    %v240 = vpack.c.b16 %v231, %v230
    %v241 = vpack.c.b16 %v233, %v232
    %250 = vmatprep.subr.bf16.mxu0 0
    %251 = vmatpush1.bf16.msra.mxu0 %v234
    %252 = vmatprep.subr.bf16.mxu0 0
    %253 = vmatpush1.bf16.msra.mxu0 %v235
    %254 = vmatprep.subr.bf16.mxu0 0
    %255 = vmatpush1.bf16.msra.mxu0 %v236
    %256 = vmatprep.subr.bf16.mxu0 0
    %257 = vmatpush1.bf16.msra.mxu0 %v237
    %258 = vmatprep.subr.bf16.mxu0 0
    %259 = vmatpush1.bf16.msra.mxu0 %v238
    %260 = vmatprep.subr.bf16.mxu0 0
    %261 = vmatpush1.bf16.msra.mxu0 %v239
    %262 = vmatprep.subr.bf16.mxu0 0
    %263 = vmatpush1.bf16.msra.mxu0 %v240
    %264 = vmatprep.subr.bf16.mxu0 0
    %265 = vmatpush1.bf16.msra.mxu0 %v241
    %266 = vmatprep.subr.bf16.mxu0 0
    %267 = vmatpush1.bf16.msra.mxu0 0
    %268 = vmatprep.subr.bf16.mxu0 0
    %269 = vmatpush1.bf16.msra.mxu0 0
    %270 = vmatprep.subr.bf16.mxu0 0
    %271 = vmatpush1.bf16.msra.mxu0 0
    %272 = vmatprep.subr.bf16.mxu0 0
    %273 = vmatpush1.bf16.msra.mxu0 0
    %274 = vmatprep.subr.bf16.mxu0 0
    %275 = vmatpush1.bf16.msra.mxu0 0
    %276 = vmatprep.subr.bf16.mxu0 0
    %277 = vmatpush1.bf16.msra.mxu0 0
    %278 = vmatprep.subr.bf16.mxu0 0
    %279 = vmatpush1.bf16.msra.mxu0 0
    %280 = vmatprep.subr.bf16.mxu0 0
    %281 = vmatpush1.bf16.msra.mxu0 0
    %282 = vmatprep.mubr.bf16.mxu0 0
    %283 = vmatmul.mubr.bf16.gmra.mrb[0].mxu0 %v162
    %v284 = vpop.f32.mrb[0].mxu0
    %v285 = vadd.f32 %v200, %v284
    %v286 = vpop.f32.mrb[0].mxu0
    %v287 = vpop.f32.mrb[0].mxu0
    %v288 = vpop.f32.mrb[0].mxu0
    %289 = vdwg.mxu0
    %v290 = vtanh.pop %v285
    %v291 = vpack.c.bf16 %v290, %v290
    %v292 = vld [vmem:[#allocation8] sm:$0xff]
    %v293 = vld [vmem:[#allocation8 + $0x8] sm:$0xff]
    %v294 = vld [vmem:[#allocation8 + $0x10] sm:$0xff]
    %v295 = vld [vmem:[#allocation8 + $0x18] sm:$0xff]
    %v296 = vld [vmem:[#allocation8 + $0x20] sm:$0xff]
    %v297 = vld [vmem:[#allocation8 + $0x28] sm:$0xff]
    %v298 = vld [vmem:[#allocation8 + $0x30] sm:$0xff]
    %v299 = vld [vmem:[#allocation8 + $0x38] sm:$0xff]
    %v300 = vld [vmem:[#allocation8 + $0x40] sm:$0xff]
    %v301 = vld [vmem:[#allocation8 + $0x48] sm:$0xff]
    %v302 = vld [vmem:[#allocation8 + $0x50] sm:$0xff]
    %v303 = vld [vmem:[#allocation8 + $0x58] sm:$0xff]
    %v304 = vld [vmem:[#allocation8 + $0x60] sm:$0xff]
    %v305 = vld [vmem:[#allocation8 + $0x68] sm:$0xff]
    %v306 = vld [vmem:[#allocation8 + $0x70] sm:$0xff]
    %v307 = vld [vmem:[#allocation8 + $0x78] sm:$0xff]
    %v308 = vld [vmem:[%s5] sm:$0x3]
    %v310 = vlaneseq
    %v311 = vshrl.u32 %v310, 7
    %v312 = vsub.s32 0, %v311
    %v313 = vrot.slane %v308, %v312
    %v314 = vlaneseq
    %v315 = vshrl.u32 %v314, 7
    %v316 = vsub.s32 1, %v315
    %v317 = vrot.slane %v308, %v316
    %v336 = vunpack.c.l.b16 %v163
    %v337 = vunpack.c.l.b16 %v164
    %v338 = vunpack.c.l.b16 %v165
    %v339 = vunpack.c.l.b16 %v166
    %v340 = vunpack.c.l.b16 %v167
    %v341 = vunpack.c.l.b16 %v168
    %v342 = vunpack.c.l.b16 %v169
    %v343 = vunpack.c.l.b16 %v170
    %v344 = vunpack.c.l.b16 %v171
    %v345 = vunpack.c.l.b16 %v172
    %v346 = vunpack.c.l.b16 %v173
    %v347 = vunpack.c.l.b16 %v174
    %v348 = vunpack.c.l.b16 %v175
    %v349 = vunpack.c.l.b16 %v176
    %v350 = vunpack.c.l.b16 %v177
    %v351 = vunpack.c.l.b16 %v178
    %v352 = vpack.c.b16 %v337, %v336
    %v353 = vpack.c.b16 %v339, %v338
    %v354 = vpack.c.b16 %v341, %v340
    %v355 = vpack.c.b16 %v343, %v342
    %v356 = vpack.c.b16 %v345, %v344
    %v357 = vpack.c.b16 %v347, %v346
    %v358 = vpack.c.b16 %v349, %v348
    %v359 = vpack.c.b16 %v351, %v350
    %v384 = vunpack.c.l.b16 %v292
    %v385 = vunpack.c.h.b16 %v292
    %v386 = vunpack.c.l.b16 %v293
    %v387 = vunpack.c.h.b16 %v293
    %v388 = vunpack.c.l.b16 %v294
    %v389 = vunpack.c.h.b16 %v294
    %v390 = vunpack.c.l.b16 %v295
    %v391 = vunpack.c.h.b16 %v295
    %v392 = vunpack.c.l.b16 %v296
    %v393 = vunpack.c.h.b16 %v296
    %v394 = vunpack.c.l.b16 %v297
    %v395 = vunpack.c.h.b16 %v297
    %v396 = vunpack.c.l.b16 %v298
    %v397 = vunpack.c.h.b16 %v298
    %v398 = vunpack.c.l.b16 %v299
    %v399 = vunpack.c.h.b16 %v299
    %v400 = vunpack.c.l.b16 %v300
    %v401 = vunpack.c.h.b16 %v300
    %v402 = vunpack.c.l.b16 %v301
    %v403 = vunpack.c.h.b16 %v301
    %v404 = vunpack.c.l.b16 %v302
    %v405 = vunpack.c.h.b16 %v302
    %v406 = vunpack.c.l.b16 %v303
    %v407 = vunpack.c.h.b16 %v303
    %v408 = vunpack.c.l.b16 %v304
    %v409 = vunpack.c.h.b16 %v304
    %v410 = vunpack.c.l.b16 %v305
    %v411 = vunpack.c.h.b16 %v305
    %v412 = vunpack.c.l.b16 %v306
    %v413 = vunpack.c.h.b16 %v306
    %v414 = vunpack.c.l.b16 %v307
    %v415 = vunpack.c.h.b16 %v307
    %v416 = vpack.c.b16 %v386, %v384
    %v417 = vpack.c.b16 %v387, %v385
    %v418 = vpack.c.b16 %v390, %v388
    %v419 = vpack.c.b16 %v391, %v389
    %v420 = vpack.c.b16 %v394, %v392
    %v421 = vpack.c.b16 %v395, %v393
    %v422 = vpack.c.b16 %v398, %v396
    %v423 = vpack.c.b16 %v399, %v397
    %v424 = vpack.c.b16 %v402, %v400
    %v425 = vpack.c.b16 %v403, %v401
    %v426 = vpack.c.b16 %v406, %v404
    %v427 = vpack.c.b16 %v407, %v405
    %v428 = vpack.c.b16 %v410, %v408
    %v429 = vpack.c.b16 %v411, %v409
    %v430 = vpack.c.b16 %v414, %v412
    %v431 = vpack.c.b16 %v415, %v413
    %448 = vmatprep.subr.bf16.mxu0 %v417
    %449 = vmatpush1.bf16.msra.mxu0 %v416
    %450 = vmatprep.subr.bf16.mxu0 %v419
    %451 = vmatpush1.bf16.msra.mxu0 %v418
    %452 = vmatprep.subr.bf16.mxu0 %v421
    %453 = vmatpush1.bf16.msra.mxu0 %v420
    %454 = vmatprep.subr.bf16.mxu0 %v423
    %455 = vmatpush1.bf16.msra.mxu0 %v422
    %456 = vmatprep.subr.bf16.mxu0 %v425
    %457 = vmatpush1.bf16.msra.mxu0 %v424
    %458 = vmatprep.subr.bf16.mxu0 %v427
    %459 = vmatpush1.bf16.msra.mxu0 %v426
    %460 = vmatprep.subr.bf16.mxu0 %v429
    %461 = vmatpush1.bf16.msra.mxu0 %v428
    %462 = vmatprep.subr.bf16.mxu0 %v431
    %463 = vmatpush1.bf16.msra.mxu0 %v430
    %464 = vmatprep.subr.bf16.mxu0 0
    %465 = vmatpush1.bf16.msra.mxu0 0
    %466 = vmatprep.subr.bf16.mxu0 0
    %467 = vmatpush1.bf16.msra.mxu0 0
    %468 = vmatprep.subr.bf16.mxu0 0
    %469 = vmatpush1.bf16.msra.mxu0 0
    %470 = vmatprep.subr.bf16.mxu0 0
    %471 = vmatpush1.bf16.msra.mxu0 0
    %472 = vmatprep.subr.bf16.mxu0 0
    %473 = vmatpush1.bf16.msra.mxu0 0
    %474 = vmatprep.subr.bf16.mxu0 0
    %475 = vmatpush1.bf16.msra.mxu0 0
    %476 = vmatprep.subr.bf16.mxu0 0
    %477 = vmatpush1.bf16.msra.mxu0 0
    %478 = vmatprep.subr.bf16.mxu0 0
    %479 = vmatpush1.bf16.msra.mxu0 0
    %480 = vmatprep.mubr.bf16.mxu0 0
    %481 = vmatmul.mubr.bf16.gmra.mrb[0].mxu0 %v352
    %v482 = vpop.f32.mrb[0].mxu0
    %v483 = vadd.f32 %v313, %v482
    %v484 = vpop.f32.mrb[0].mxu0
    %v485 = vadd.f32 %v317, %v484
    %v486 = vpop.f32.mrb[0].mxu0
    %v487 = vadd.f32 %v313, %v486
    %v488 = vpop.f32.mrb[0].mxu0
    %v489 = vadd.f32 %v317, %v488
    %490 = vmatprep.mubr.bf16.mxu0 0
    %491 = vmatmul.mubr.bf16.gmra.mrb[0].mxu0 %v353
    %v492 = vpop.f32.mrb[0].mxu0
    %v493 = vadd.f32 %v313, %v492
    %v494 = vpop.f32.mrb[0].mxu0
    %v495 = vadd.f32 %v317, %v494
    %v496 = vpop.f32.mrb[0].mxu0
    %v497 = vadd.f32 %v313, %v496
    %v498 = vpop.f32.mrb[0].mxu0
    %v499 = vadd.f32 %v317, %v498
    %500 = vmatprep.mubr.bf16.mxu0 0
    %501 = vmatmul.mubr.bf16.gmra.mrb[0].mxu0 %v354
    %v502 = vpop.f32.mrb[0].mxu0
    %v503 = vadd.f32 %v313, %v502
    %v504 = vpop.f32.mrb[0].mxu0
    %v505 = vadd.f32 %v317, %v504
    %v506 = vpop.f32.mrb[0].mxu0
    %v507 = vadd.f32 %v313, %v506
    %v508 = vpop.f32.mrb[0].mxu0
    %v509 = vadd.f32 %v317, %v508
    %510 = vmatprep.mubr.bf16.mxu0 0
    %511 = vmatmul.mubr.bf16.gmra.mrb[0].mxu0 %v355
    %v512 = vpop.f32.mrb[0].mxu0
    %v513 = vadd.f32 %v313, %v512
    %v514 = vpop.f32.mrb[0].mxu0
    %v515 = vadd.f32 %v317, %v514
    %v516 = vpop.f32.mrb[0].mxu0
    %v517 = vadd.f32 %v313, %v516
    %v518 = vpop.f32.mrb[0].mxu0
    %v519 = vadd.f32 %v317, %v518
    %520 = vmatprep.mubr.bf16.mxu0 0
    %521 = vmatmul.mubr.bf16.gmra.mrb[0].mxu0 %v356
    %v522 = vpop.f32.mrb[0].mxu0
    %v523 = vadd.f32 %v313, %v522
    %v524 = vpop.f32.mrb[0].mxu0
    %v525 = vadd.f32 %v317, %v524
    %v526 = vpop.f32.mrb[0].mxu0
    %v527 = vadd.f32 %v313, %v526
    %v528 = vpop.f32.mrb[0].mxu0
    %v529 = vadd.f32 %v317, %v528
    %530 = vmatprep.mubr.bf16.mxu0 0
    %531 = vmatmul.mubr.bf16.gmra.mrb[0].mxu0 %v357
    %v532 = vpop.f32.mrb[0].mxu0
    %v533 = vadd.f32 %v313, %v532
    %v534 = vpop.f32.mrb[0].mxu0
    %v535 = vadd.f32 %v317, %v534
    %v536 = vpop.f32.mrb[0].mxu0
    %v537 = vadd.f32 %v313, %v536
    %v538 = vpop.f32.mrb[0].mxu0
    %v539 = vadd.f32 %v317, %v538
    %540 = vmatprep.mubr.bf16.mxu0 0
    %541 = vmatmul.mubr.bf16.gmra.mrb[0].mxu0 %v358
    %v542 = vpop.f32.mrb[0].mxu0
    %v543 = vadd.f32 %v313, %v542
    %v544 = vpop.f32.mrb[0].mxu0
    %v545 = vadd.f32 %v317, %v544
    %v546 = vpop.f32.mrb[0].mxu0
    %v547 = vadd.f32 %v313, %v546
    %v548 = vpop.f32.mrb[0].mxu0
    %v549 = vadd.f32 %v317, %v548
    %550 = vmatprep.mubr.bf16.mxu0 0
    %551 = vmatmul.mubr.bf16.gmra.mrb[0].mxu0 %v359
    %v552 = vpop.f32.mrb[0].mxu0
    %v553 = vadd.f32 %v313, %v552
    %v554 = vpop.f32.mrb[0].mxu0
    %v555 = vadd.f32 %v317, %v554
    %v556 = vpop.f32.mrb[0].mxu0
    %v557 = vadd.f32 %v313, %v556
    %v558 = vpop.f32.mrb[0].mxu0
    %v559 = vadd.f32 %v317, %v558
    %560 = vdwg.mxu0
    %v561 = vmax.f32 %v483, 0.0
    %v562 = vmax.f32 %v485, 0.0
    %v563 = vmax.f32 %v487, 0.0
    %v564 = vmax.f32 %v489, 0.0
    %v565 = vmax.f32 %v493, 0.0
    %v566 = vmax.f32 %v495, 0.0
    %v567 = vmax.f32 %v497, 0.0
    %v568 = vmax.f32 %v499, 0.0
    %v569 = vmax.f32 %v503, 0.0
    %v570 = vmax.f32 %v505, 0.0
    %v571 = vmax.f32 %v507, 0.0
    %v572 = vmax.f32 %v509, 0.0
    %v573 = vmax.f32 %v513, 0.0
    %v574 = vmax.f32 %v515, 0.0
    %v575 = vmax.f32 %v517, 0.0
    %v576 = vmax.f32 %v519, 0.0
    %v577 = vmax.f32 %v523, 0.0
    %v578 = vmax.f32 %v525, 0.0
    %v579 = vmax.f32 %v527, 0.0
    %v580 = vmax.f32 %v529, 0.0
    %v581 = vmax.f32 %v533, 0.0
    %v582 = vmax.f32 %v535, 0.0
    %v583 = vmax.f32 %v537, 0.0
    %v584 = vmax.f32 %v539, 0.0
    %v585 = vmax.f32 %v543, 0.0
    %v586 = vmax.f32 %v545, 0.0
    %v587 = vmax.f32 %v547, 0.0
    %v588 = vmax.f32 %v549, 0.0
    %v589 = vmax.f32 %v553, 0.0
    %v590 = vmax.f32 %v555, 0.0
    %v591 = vmax.f32 %v557, 0.0
    %v592 = vmax.f32 %v559, 0.0
    %v593 = vld [vmem:[#allocation10] sm:$0xff]
    %v594 = vld [vmem:[#allocation10 + $0x8] sm:$0xff]
    %v595 = vld [vmem:[#allocation10 + $0x10] sm:$0xff]
    %v596 = vld [vmem:[#allocation10 + $0x18] sm:$0xff]
    %v597 = vld [vmem:[#allocation10 + $0x20] sm:$0xff]
    %v598 = vld [vmem:[#allocation10 + $0x28] sm:$0xff]
    %v599 = vld [vmem:[#allocation10 + $0x30] sm:$0xff]
    %v600 = vld [vmem:[#allocation10 + $0x38] sm:$0xff]
    %v601 = vld [vmem:[#allocation10 + $0x40] sm:$0xff]
    %v602 = vld [vmem:[#allocation10 + $0x48] sm:$0xff]
    %v603 = vld [vmem:[#allocation10 + $0x50] sm:$0xff]
    %v604 = vld [vmem:[#allocation10 + $0x58] sm:$0xff]
    %v605 = vld [vmem:[#allocation10 + $0x60] sm:$0xff]
    %v606 = vld [vmem:[#allocation10 + $0x68] sm:$0xff]
    %v607 = vld [vmem:[#allocation10 + $0x70] sm:$0xff]
    %v608 = vld [vmem:[#allocation10 + $0x78] sm:$0xff]
    %v625 = vunpack.c.l.b16 %v593
    %v626 = vunpack.c.h.b16 %v593
    %v627 = vunpack.c.l.b16 %v594
    %v628 = vunpack.c.h.b16 %v594
    %v629 = vunpack.c.l.b16 %v595
    %v630 = vunpack.c.h.b16 %v595
    %v631 = vunpack.c.l.b16 %v596
    %v632 = vunpack.c.h.b16 %v596
    %v633 = vunpack.c.l.b16 %v597
    %v634 = vunpack.c.h.b16 %v597
    %v635 = vunpack.c.l.b16 %v598
    %v636 = vunpack.c.h.b16 %v598
    %v637 = vunpack.c.l.b16 %v599
    %v638 = vunpack.c.h.b16 %v599
    %v639 = vunpack.c.l.b16 %v600
    %v640 = vunpack.c.h.b16 %v600
    %v641 = vunpack.c.l.b16 %v601
    %v642 = vunpack.c.h.b16 %v601
    %v643 = vunpack.c.l.b16 %v602
    %v644 = vunpack.c.h.b16 %v602
    %v645 = vunpack.c.l.b16 %v603
    %v646 = vunpack.c.h.b16 %v603
    %v647 = vunpack.c.l.b16 %v604
    %v648 = vunpack.c.h.b16 %v604
    %v649 = vunpack.c.l.b16 %v605
    %v650 = vunpack.c.h.b16 %v605
    %v651 = vunpack.c.l.b16 %v606
    %v652 = vunpack.c.h.b16 %v606
    %v653 = vunpack.c.l.b16 %v607
    %v654 = vunpack.c.h.b16 %v607
    %v655 = vunpack.c.l.b16 %v608
    %v656 = vunpack.c.h.b16 %v608
    %v657 = vpack.c.b16 %v627, %v625
    %v658 = vpack.c.b16 %v628, %v626
    %v659 = vpack.c.b16 %v631, %v629
    %v660 = vpack.c.b16 %v632, %v630
    %v661 = vpack.c.b16 %v635, %v633
    %v662 = vpack.c.b16 %v636, %v634
    %v663 = vpack.c.b16 %v639, %v637
    %v664 = vpack.c.b16 %v640, %v638
    %v665 = vpack.c.b16 %v643, %v641
    %v666 = vpack.c.b16 %v644, %v642
    %v667 = vpack.c.b16 %v647, %v645
    %v668 = vpack.c.b16 %v648, %v646
    %v669 = vpack.c.b16 %v651, %v649
    %v670 = vpack.c.b16 %v652, %v650
    %v671 = vpack.c.b16 %v655, %v653
    %v672 = vpack.c.b16 %v656, %v654
    %689 = vmatprep.subr.bf16.mxu0 %v658
    %690 = vmatpush1.bf16.msra.mxu0 %v657
    %691 = vmatprep.subr.bf16.mxu0 %v660
    %692 = vmatpush1.bf16.msra.mxu0 %v659
    %693 = vmatprep.subr.bf16.mxu0 %v662
    %694 = vmatpush1.bf16.msra.mxu0 %v661
    %695 = vmatprep.subr.bf16.mxu0 %v664
    %696 = vmatpush1.bf16.msra.mxu0 %v663
    %697 = vmatprep.subr.bf16.mxu0 %v666
    %698 = vmatpush1.bf16.msra.mxu0 %v665
    %699 = vmatprep.subr.bf16.mxu0 %v668
    %700 = vmatpush1.bf16.msra.mxu0 %v667
    %701 = vmatprep.subr.bf16.mxu0 %v670
    %702 = vmatpush1.bf16.msra.mxu0 %v669
    %703 = vmatprep.subr.bf16.mxu0 %v672
    %704 = vmatpush1.bf16.msra.mxu0 %v671
    %705 = vmatprep.subr.bf16.mxu0 0
    %706 = vmatpush1.bf16.msra.mxu0 0
    %707 = vmatprep.subr.bf16.mxu0 0
    %708 = vmatpush1.bf16.msra.mxu0 0
    %709 = vmatprep.subr.bf16.mxu0 0
    %710 = vmatpush1.bf16.msra.mxu0 0
    %711 = vmatprep.subr.bf16.mxu0 0
    %712 = vmatpush1.bf16.msra.mxu0 0
    %713 = vmatprep.subr.bf16.mxu0 0
    %714 = vmatpush1.bf16.msra.mxu0 0
    %715 = vmatprep.subr.bf16.mxu0 0
    %716 = vmatpush1.bf16.msra.mxu0 0
    %717 = vmatprep.subr.bf16.mxu0 0
    %718 = vmatpush1.bf16.msra.mxu0 0
    %719 = vmatprep.subr.bf16.mxu0 0
    %720 = vmatpush1.bf16.msra.mxu0 0
    %721 = vmatprep.mubr.bf16.mxu0 0
    %722 = vmatmul.mubr.bf16.gmra.mrb[0].mxu0 %v291
    %v723 = vpop.f32.mrb[0].mxu0
    %v724 = vadd.f32 0.0, %v723
    %v725 = vpop.f32.mrb[0].mxu0
    %v726 = vadd.f32 0.0, %v725
    %v727 = vpop.f32.mrb[0].mxu0
    %v728 = vpop.f32.mrb[0].mxu0
    %729 = vdwg.mxu0
    %v730 = vlaneseq
    %v731 = vand.u32 %v730, 127
    %vm732 = vcmp.lt.s32.totalorder %v731, 8
    %v733 = vld [vmem:[%s7] sm:$0x1]
    %v735 = vlaneseq
    %v736 = vshrl.u32 %v735, 7
    %v737 = vsub.s32 0, %v736
    %v738 = vrot.slane %v733, %v737
    %v740 = vadd.f32 %v724, %v738
    %v741 = vmax.f32 %v740, 0.0
    %v742 = vld [vmem:[%s8] sm:$0x1]
    %v744 = vlaneseq
    %v745 = vshrl.u32 %v744, 7
    %v746 = vsub.s32 0, %v745
    %v747 = vrot.slane %v742, %v746
    %v749 = vmul.f32 %v741, %v747
    %v751 = vcombine.high %v749, %v749
    %v753 = vunpack.c.l.s4 1966171168
    %v754 = vunpack.c.0.s8 %v753
    %v755 = vlaneseq
    %v756 = vshrl.u32 %v755, 7
    %v757 = vsub.s32 %v754, %v756
    %v758 = vrot.slane %v749, %v757
    %v760 = vunpack.c.l.s4 1966171168
    %v761 = vunpack.c.0.s8 %v760
    %v762 = vlaneseq
    %v763 = vshrl.u32 %v762, 7
    %v764 = vsub.s32 %v761, %v763
    %v765 = vrot.slane %v751, %v764
    %v766 = vcombine.high %v758, %v758
    %v767 = vcombine.high %v765, %v765
    %v769 = vunpack.c.l.s4 1966171168
    %v770 = vunpack.c.0.s8 %v769
    %v771 = vlaneseq
    %v772 = vshrl.u32 %v771, 7
    %v773 = vsub.s32 %v770, %v772
    %v774 = vrot.slane %v758, %v773
    %v776 = vunpack.c.l.s4 1966171168
    %v777 = vunpack.c.0.s8 %v776
    %v778 = vlaneseq
    %v779 = vshrl.u32 %v778, 7
    %v780 = vsub.s32 %v777, %v779
    %v781 = vrot.slane %v765, %v780
    %v783 = vunpack.c.l.s4 1966171168
    %v784 = vunpack.c.0.s8 %v783
    %v785 = vlaneseq
    %v786 = vshrl.u32 %v785, 7
    %v787 = vsub.s32 %v784, %v786
    %v788 = vrot.slane %v766, %v787
    %v790 = vunpack.c.l.s4 1966171168
    %v791 = vunpack.c.0.s8 %v790
    %v792 = vlaneseq
    %v793 = vshrl.u32 %v792, 7
    %v794 = vsub.s32 %v791, %v793
    %v795 = vrot.slane %v767, %v794
    %v796 = vcombine.high %v774, %v774
    %v797 = vcombine.high %v781, %v781
    %v798 = vcombine.high %v788, %v788
    %v799 = vcombine.high %v795, %v795
    %v800 = vlaneseq
    %v801 = vshrl.u32 %v800, 7
    %v802 = vsub.s32 0, %v801
    %v803 = vrot.slane %v774, %v802
    %v804 = vlaneseq
    %v805 = vshrl.u32 %v804, 7
    %v806 = vsub.s32 0, %v805
    %v807 = vrot.slane %v788, %v806
    %v808 = vlaneseq
    %v809 = vshrl.u32 %v808, 7
    %v810 = vsub.s32 0, %v809
    %v811 = vrot.slane %v796, %v810
    %v812 = vlaneseq
    %v813 = vshrl.u32 %v812, 7
    %v814 = vsub.s32 0, %v813
    %v815 = vrot.slane %v798, %v814
    %v816 = vlaneseq
    %v817 = vshrl.u32 %v816, 7
    %v818 = vsub.s32 0, %v817
    %v819 = vrot.slane %v781, %v818
    %v820 = vlaneseq
    %v821 = vshrl.u32 %v820, 7
    %v822 = vsub.s32 0, %v821
    %v823 = vrot.slane %v795, %v822
    %v824 = vlaneseq
    %v825 = vshrl.u32 %v824, 7
    %v826 = vsub.s32 0, %v825
    %v827 = vrot.slane %v797, %v826
    %v828 = vlaneseq
    %v829 = vshrl.u32 %v828, 7
    %v830 = vsub.s32 0, %v829
    %v831 = vrot.slane %v799, %v830
    %v840 = vmul.f32 %v561, %v803
    %v841 = vmul.f32 %v563, %v803
    %v842 = vmul.f32 %v565, %v807
    %v843 = vmul.f32 %v567, %v807
    %v844 = vmul.f32 %v569, %v811
    %v845 = vmul.f32 %v571, %v811
    %v846 = vmul.f32 %v573, %v815
    %v847 = vmul.f32 %v575, %v815
    %v848 = vmul.f32 %v577, %v819
    %v849 = vmul.f32 %v579, %v819
    %v850 = vmul.f32 %v581, %v823
    %v851 = vmul.f32 %v583, %v823
    %v852 = vmul.f32 %v585, %v827
    %v853 = vmul.f32 %v587, %v827
    %v854 = vmul.f32 %v589, %v831
    %v855 = vmul.f32 %v591, %v831
    %856 = vadd.xlane.f32.xlu0 %v840
    %v857 = vpop.xlane.xlu0 %856
    %858 = vadd.xlane.f32.xlu0 %v841
    %v859 = vpop.xlane.xlu0 %858
    %860 = vadd.xlane.f32.xlu0 %v842
    %v861 = vpop.xlane.xlu0 %860
    %862 = vadd.xlane.f32.xlu0 %v843
    %v863 = vpop.xlane.xlu0 %862
    %864 = vadd.xlane.f32.xlu0 %v844
    %v865 = vpop.xlane.xlu0 %864
    %866 = vadd.xlane.f32.xlu0 %v845
    %v867 = vpop.xlane.xlu0 %866
    %868 = vadd.xlane.f32.xlu0 %v846
    %v869 = vpop.xlane.xlu0 %868
    %870 = vadd.xlane.f32.xlu0 %v847
    %v871 = vpop.xlane.xlu0 %870
    %872 = vadd.xlane.f32.xlu0 %v848
    %v873 = vpop.xlane.xlu0 %872
    %874 = vadd.xlane.f32.xlu0 %v849
    %v875 = vpop.xlane.xlu0 %874
    %876 = vadd.xlane.f32.xlu0 %v850
    %v877 = vpop.xlane.xlu0 %876
    %878 = vadd.xlane.f32.xlu0 %v851
    %v879 = vpop.xlane.xlu0 %878
    %880 = vadd.xlane.f32.xlu0 %v852
    %v881 = vpop.xlane.xlu0 %880
    %882 = vadd.xlane.f32.xlu0 %v853
    %v883 = vpop.xlane.xlu0 %882
    %884 = vadd.xlane.f32.xlu0 %v854
    %v885 = vpop.xlane.xlu0 %884
    %886 = vadd.xlane.f32.xlu0 %v855
    %v887 = vpop.xlane.xlu0 %886
    %v888 = vsel %vm732, 1, 0
    %vm889 = vcmp.eq.s32.totalorder %v888, 1
    %v906 = vlaneseq
    %v907 = vshrl.u32 %v906, 7
    %v908 = vsub.s32 %v731, %v907
    %v909 = vrot.slane %v857, %v908
    %v910 = vadd.s32 %v731, 4294967288
    %v911 = vlaneseq
    %v912 = vshrl.u32 %v911, 7
    %v913 = vsub.s32 %v910, %v912
    %v914 = vrot.slane %v859, %v913
    %vm915 = vcmask 130112
    %v916 = vsel %vm915, %v914, %v909
    %v917 = vlaneseq
    %v918 = vshrl.u32 %v917, 7
    %v919 = vsub.s32 %v731, %v918
    %v920 = vrot.slane %v861, %v919
    %v921 = vlaneseq
    %v922 = vshrl.u32 %v921, 7
    %v923 = vsub.s32 %v910, %v922
    %v924 = vrot.slane %v863, %v923
    %v925 = vsel %vm915, %v924, %v920
    %v926 = vlaneseq
    %v927 = vshrl.u32 %v926, 7
    %v928 = vsub.s32 %v731, %v927
    %v929 = vrot.slane %v865, %v928
    %v930 = vlaneseq
    %v931 = vshrl.u32 %v930, 7
    %v932 = vsub.s32 %v910, %v931
    %v933 = vrot.slane %v867, %v932
    %v934 = vsel %vm915, %v933, %v929
    %v935 = vlaneseq
    %v936 = vshrl.u32 %v935, 7
    %v937 = vsub.s32 %v731, %v936
    %v938 = vrot.slane %v869, %v937
    %v939 = vlaneseq
    %v940 = vshrl.u32 %v939, 7
    %v941 = vsub.s32 %v910, %v940
    %v942 = vrot.slane %v871, %v941
    %v943 = vsel %vm915, %v942, %v938
    %v944 = vlaneseq
    %v945 = vshrl.u32 %v944, 7
    %v946 = vsub.s32 %v731, %v945
    %v947 = vrot.slane %v873, %v946
    %v948 = vlaneseq
    %v949 = vshrl.u32 %v948, 7
    %v950 = vsub.s32 %v910, %v949
    %v951 = vrot.slane %v875, %v950
    %v952 = vsel %vm915, %v951, %v947
    %v953 = vlaneseq
    %v954 = vshrl.u32 %v953, 7
    %v955 = vsub.s32 %v731, %v954
    %v956 = vrot.slane %v877, %v955
    %v957 = vlaneseq
    %v958 = vshrl.u32 %v957, 7
    %v959 = vsub.s32 %v910, %v958
    %v960 = vrot.slane %v879, %v959
    %v961 = vsel %vm915, %v960, %v956
    %v962 = vlaneseq
    %v963 = vshrl.u32 %v962, 7
    %v964 = vsub.s32 %v731, %v963
    %v965 = vrot.slane %v881, %v964
    %v966 = vlaneseq
    %v967 = vshrl.u32 %v966, 7
    %v968 = vsub.s32 %v910, %v967
    %v969 = vrot.slane %v883, %v968
    %v970 = vsel %vm915, %v969, %v965
    %v971 = vlaneseq
    %v972 = vshrl.u32 %v971, 7
    %v973 = vsub.s32 %v731, %v972
    %v974 = vrot.slane %v885, %v973
    %v975 = vlaneseq
    %v976 = vshrl.u32 %v975, 7
    %v977 = vsub.s32 %v910, %v976
    %v978 = vrot.slane %v887, %v977
    %v979 = vsel %vm915, %v978, %v974
    %vm980 = vcmask 1041409
    %v981 = vsel %vm980, %v925, %v916
    %vm982 = vcmask 1042434
    %v983 = vsel %vm982, %v934, %v981
    %vm984 = vcmask 1043459
    %v985 = vsel %vm984, %v943, %v983
    %vm986 = vcmask 1044484
    %v987 = vsel %vm986, %v952, %v985
    %vm988 = vcmask 1045509
    %v989 = vsel %vm988, %v961, %v987
    %vm990 = vcmask 1046534
    %v991 = vsel %vm990, %v970, %v989
    %vm992 = vcmask 1047559
    %v993 = vsel %vm992, %v979, %v991
    %v995 = vsel %vm889, %v993, -1e+30
    %vm996 = vcmask 130048
    %v997 = vsel %vm996, %v995, -inf
    %998 = vmax.xlane.f32.xlu0 %v997
    %v999 = vpop.xlane.xlu0 %998
    %v1000 = vsub.f32 %v995, %v999
    %v1001 = vmul.f32 %v1000, 1.442695
    %v1002 = vpow.pop %v1001
    %v1003 = vsel %vm996, %v1002, 0.0
    %1004 = vadd.xlane.f32.xlu0 %v1003
    %v1005 = vpop.xlane.xlu0 %1004
    %v1006 = vrcp.pop %v1005
    %v1007 = vmul.f32 %v1002, %v1006
    %v1008 = vlaneseq
    %v1009 = vshrl.u32 %v1008, 7
    %v1010 = vsub.s32 0, %v1009
    %v1011 = vrot.slane %v1007, %v1010
    %1013 = vbcast.lane.b32.xlu0 %v1011, 256
    %v1014 = vpop.permute.xlu0 %1013
    %s1016 = sor.u32 256, 8
    %1017 = vbcast.lane.b32.xlu0 %v1011, %s1016
    %v1018 = vpop.permute.xlu0 %1017
    %v1019 = vlaneseq
    %v1020 = vshrl.u32 %v1019, 7
    %v1021 = vsub.s32 1, %v1020
    %v1022 = vrot.slane %v1007, %v1021
    %1024 = vbcast.lane.b32.xlu0 %v1022, 256
    %v1025 = vpop.permute.xlu0 %1024
    %s1027 = sor.u32 256, 8
    %1028 = vbcast.lane.b32.xlu0 %v1022, %s1027
    %v1029 = vpop.permute.xlu0 %1028
    %v1030 = vlaneseq
    %v1031 = vshrl.u32 %v1030, 7
    %v1032 = vsub.s32 2, %v1031
    %v1033 = vrot.slane %v1007, %v1032
    %1035 = vbcast.lane.b32.xlu0 %v1033, 256
    %v1036 = vpop.permute.xlu0 %1035
    %s1038 = sor.u32 256, 8
    %1039 = vbcast.lane.b32.xlu0 %v1033, %s1038
    %v1040 = vpop.permute.xlu0 %1039
    %v1041 = vlaneseq
    %v1042 = vshrl.u32 %v1041, 7
    %v1043 = vsub.s32 3, %v1042
    %v1044 = vrot.slane %v1007, %v1043
    %1046 = vbcast.lane.b32.xlu0 %v1044, 256
    %v1047 = vpop.permute.xlu0 %1046
    %s1049 = sor.u32 256, 8
    %1050 = vbcast.lane.b32.xlu0 %v1044, %s1049
    %v1051 = vpop.permute.xlu0 %1050
    %v1052 = vlaneseq
    %v1053 = vshrl.u32 %v1052, 7
    %v1054 = vsub.s32 4, %v1053
    %v1055 = vrot.slane %v1007, %v1054
    %1057 = vbcast.lane.b32.xlu0 %v1055, 256
    %v1058 = vpop.permute.xlu0 %1057
    %s1060 = sor.u32 256, 8
    %1061 = vbcast.lane.b32.xlu0 %v1055, %s1060
    %v1062 = vpop.permute.xlu0 %1061
    %v1063 = vlaneseq
    %v1064 = vshrl.u32 %v1063, 7
    %v1065 = vsub.s32 5, %v1064
    %v1066 = vrot.slane %v1007, %v1065
    %1068 = vbcast.lane.b32.xlu0 %v1066, 256
    %v1069 = vpop.permute.xlu0 %1068
    %s1071 = sor.u32 256, 8
    %1072 = vbcast.lane.b32.xlu0 %v1066, %s1071
    %v1073 = vpop.permute.xlu0 %1072
    %v1074 = vlaneseq
    %v1075 = vshrl.u32 %v1074, 7
    %v1076 = vsub.s32 6, %v1075
    %v1077 = vrot.slane %v1007, %v1076
    %1079 = vbcast.lane.b32.xlu0 %v1077, 256
    %v1080 = vpop.permute.xlu0 %1079
    %s1082 = sor.u32 256, 8
    %1083 = vbcast.lane.b32.xlu0 %v1077, %s1082
    %v1084 = vpop.permute.xlu0 %1083
    %v1085 = vlaneseq
    %v1086 = vshrl.u32 %v1085, 7
    %v1087 = vsub.s32 7, %v1086
    %v1088 = vrot.slane %v1007, %v1087
    %1090 = vbcast.lane.b32.xlu0 %v1088, 256
    %v1091 = vpop.permute.xlu0 %1090
    %s1093 = sor.u32 256, 8
    %1094 = vbcast.lane.b32.xlu0 %v1088, %s1093
    %v1095 = vpop.permute.xlu0 %1094
    %v1096 = vunpack.c.l.bf16 %v163
    %v1097 = vunpack.c.l.bf16 %v164
    %v1098 = vunpack.c.l.bf16 %v165
    %v1099 = vunpack.c.l.bf16 %v166
    %v1100 = vunpack.c.l.bf16 %v167
    %v1101 = vunpack.c.l.bf16 %v168
    %v1102 = vunpack.c.l.bf16 %v169
    %v1103 = vunpack.c.l.bf16 %v170
    %v1104 = vunpack.c.l.bf16 %v171
    %v1105 = vunpack.c.l.bf16 %v172
    %v1106 = vunpack.c.l.bf16 %v173
    %v1107 = vunpack.c.l.bf16 %v174
    %v1108 = vunpack.c.l.bf16 %v175
    %v1109 = vunpack.c.l.bf16 %v176
    %v1110 = vunpack.c.l.bf16 %v177
    %v1111 = vunpack.c.l.bf16 %v178
    %v1112 = vmul.f32 %v1014, %v1096
    %v1113 = vmul.f32 %v1018, %v1097
    %v1114 = vmul.f32 %v1025, %v1098
    %v1115 = vmul.f32 %v1029, %v1099
    %v1116 = vmul.f32 %v1036, %v1100
    %v1117 = vmul.f32 %v1040, %v1101
    %v1118 = vmul.f32 %v1047, %v1102
    %v1119 = vmul.f32 %v1051, %v1103
    %v1120 = vmul.f32 %v1058, %v1104
    %v1121 = vmul.f32 %v1062, %v1105
    %v1122 = vmul.f32 %v1069, %v1106
    %v1123 = vmul.f32 %v1073, %v1107
    %v1124 = vmul.f32 %v1080, %v1108
    %v1125 = vmul.f32 %v1084, %v1109
    %v1126 = vmul.f32 %v1091, %v1110
    %v1127 = vmul.f32 %v1095, %v1111
    %v1128 = vadd.f32 %v1112, %v1113
    %v1129 = vrot.slane %v1128, 4
    %v1130 = vadd.f32 %v1128, %v1129
    %v1131 = vrot.slane %v1130, 2
    %v1132 = vadd.f32 %v1130, %v1131
    %v1133 = vrot.slane %v1132, 1
    %v1134 = vadd.f32 %v1132, %v1133
    %v1135 = vadd.f32 %v1114, %v1115
    %v1136 = vrot.slane %v1135, 4
    %v1137 = vadd.f32 %v1135, %v1136
    %v1138 = vrot.slane %v1137, 2
    %v1139 = vadd.f32 %v1137, %v1138
    %v1140 = vrot.slane %v1139, 1
    %v1141 = vadd.f32 %v1139, %v1140
    %v1142 = vadd.f32 %v1116, %v1117
    %v1143 = vrot.slane %v1142, 4
    %v1144 = vadd.f32 %v1142, %v1143
    %v1145 = vrot.slane %v1144, 2
    %v1146 = vadd.f32 %v1144, %v1145
    %v1147 = vrot.slane %v1146, 1
    %v1148 = vadd.f32 %v1146, %v1147
    %v1149 = vadd.f32 %v1118, %v1119
    %v1150 = vrot.slane %v1149, 4
    %v1151 = vadd.f32 %v1149, %v1150
    %v1152 = vrot.slane %v1151, 2
    %v1153 = vadd.f32 %v1151, %v1152
    %v1154 = vrot.slane %v1153, 1
    %v1155 = vadd.f32 %v1153, %v1154
    %v1156 = vadd.f32 %v1120, %v1121
    %v1157 = vrot.slane %v1156, 4
    %v1158 = vadd.f32 %v1156, %v1157
    %v1159 = vrot.slane %v1158, 2
    %v1160 = vadd.f32 %v1158, %v1159
    %v1161 = vrot.slane %v1160, 1
    %v1162 = vadd.f32 %v1160, %v1161
    %v1163 = vadd.f32 %v1122, %v1123
    %v1164 = vrot.slane %v1163, 4
    %v1165 = vadd.f32 %v1163, %v1164
    %v1166 = vrot.slane %v1165, 2
    %v1167 = vadd.f32 %v1165, %v1166
    %v1168 = vrot.slane %v1167, 1
    %v1169 = vadd.f32 %v1167, %v1168
    %v1170 = vadd.f32 %v1124, %v1125
    %v1171 = vrot.slane %v1170, 4
    %v1172 = vadd.f32 %v1170, %v1171
    %v1173 = vrot.slane %v1172, 2
    %v1174 = vadd.f32 %v1172, %v1173
    %v1175 = vrot.slane %v1174, 1
    %v1176 = vadd.f32 %v1174, %v1175
    %v1177 = vadd.f32 %v1126, %v1127
    %v1178 = vrot.slane %v1177, 4
    %v1179 = vadd.f32 %v1177, %v1178
    %v1180 = vrot.slane %v1179, 2
    %v1181 = vadd.f32 %v1179, %v1180
    %v1182 = vrot.slane %v1181, 1
    %v1183 = vadd.f32 %v1181, %v1182
    %v1184 = vpack.c.bf16 %v1134, %v1134
    %v1185 = vpack.c.bf16 %v1141, %v1141
    %v1186 = vpack.c.bf16 %v1148, %v1148
    %v1187 = vpack.c.bf16 %v1155, %v1155
    %v1188 = vpack.c.bf16 %v1162, %v1162
    %v1189 = vpack.c.bf16 %v1169, %v1169
    %v1190 = vpack.c.bf16 %v1176, %v1176
    %v1191 = vpack.c.bf16 %v1183, %v1183
    %v1192 = vld [vmem:[#allocation11] sm:$0xf]
    %v1193 = vld [vmem:[#allocation11 + $0x4] sm:$0xf]
    %v1194 = vld [vmem:[#allocation11 + $0x8] sm:$0xf]
    %v1195 = vld [vmem:[#allocation11 + $0xc] sm:$0xf]
    %v1196 = vld [vmem:[#allocation11 + $0x10] sm:$0xf]
    %v1197 = vld [vmem:[#allocation11 + $0x14] sm:$0xf]
    %v1198 = vld [vmem:[#allocation11 + $0x18] sm:$0xf]
    %v1199 = vld [vmem:[#allocation11 + $0x1c] sm:$0xf]
    %v1200 = vld [vmem:[#allocation11 + $0x20] sm:$0xf]
    %v1201 = vld [vmem:[#allocation11 + $0x24] sm:$0xf]
    %v1202 = vld [vmem:[#allocation11 + $0x28] sm:$0xf]
    %v1203 = vld [vmem:[#allocation11 + $0x2c] sm:$0xf]
    %v1204 = vld [vmem:[#allocation11 + $0x30] sm:$0xf]
    %v1205 = vld [vmem:[#allocation11 + $0x34] sm:$0xf]
    %v1206 = vld [vmem:[#allocation11 + $0x38] sm:$0xf]
    %v1207 = vld [vmem:[#allocation11 + $0x3c] sm:$0xf]
    %v1216 = vunpack.c.l.b16 %v1184
    %v1217 = vunpack.c.l.b16 %v1185
    %v1218 = vunpack.c.l.b16 %v1186
    %v1219 = vunpack.c.l.b16 %v1187
    %v1220 = vunpack.c.l.b16 %v1188
    %v1221 = vunpack.c.l.b16 %v1189
    %v1222 = vunpack.c.l.b16 %v1190
    %v1223 = vunpack.c.l.b16 %v1191
    %v1224 = vsel %vm980, %v1217, %v1216
    %v1225 = vsel %vm982, %v1218, %v1224
    %v1226 = vsel %vm984, %v1219, %v1225
    %v1227 = vsel %vm986, %v1220, %v1226
    %v1228 = vsel %vm988, %v1221, %v1227
    %v1229 = vsel %vm990, %v1222, %v1228
    %v1230 = vsel %vm992, %v1223, %v1229
    %v1231 = vpack.c.b16 %v1230, %v1230
    %v1249 = vunpack.c.l.b16 %v1192
    %v1250 = vunpack.c.l.b16 %v1193
    %v1251 = vunpack.c.l.b16 %v1194
    %v1252 = vunpack.c.l.b16 %v1195
    %v1253 = vunpack.c.l.b16 %v1196
    %v1254 = vunpack.c.l.b16 %v1197
    %v1255 = vunpack.c.l.b16 %v1198
    %v1256 = vunpack.c.l.b16 %v1199
    %v1257 = vunpack.c.l.b16 %v1200
    %v1258 = vunpack.c.l.b16 %v1201
    %v1259 = vunpack.c.l.b16 %v1202
    %v1260 = vunpack.c.l.b16 %v1203
    %v1261 = vunpack.c.l.b16 %v1204
    %v1262 = vunpack.c.l.b16 %v1205
    %v1263 = vunpack.c.l.b16 %v1206
    %v1264 = vunpack.c.l.b16 %v1207
    %v1265 = vpack.c.b16 %v1250, %v1249
    %v1266 = vpack.c.b16 %v1252, %v1251
    %v1267 = vpack.c.b16 %v1254, %v1253
    %v1268 = vpack.c.b16 %v1256, %v1255
    %v1269 = vpack.c.b16 %v1258, %v1257
    %v1270 = vpack.c.b16 %v1260, %v1259
    %v1271 = vpack.c.b16 %v1262, %v1261
    %v1272 = vpack.c.b16 %v1264, %v1263
    %1281 = vmatprep.subr.bf16.mxu0 0
    %1282 = vmatpush1.bf16.msra.mxu0 %v1265
    %1283 = vmatprep.subr.bf16.mxu0 0
    %1284 = vmatpush1.bf16.msra.mxu0 %v1266
    %1285 = vmatprep.subr.bf16.mxu0 0
    %1286 = vmatpush1.bf16.msra.mxu0 %v1267
    %1287 = vmatprep.subr.bf16.mxu0 0
    %1288 = vmatpush1.bf16.msra.mxu0 %v1268
    %1289 = vmatprep.subr.bf16.mxu0 0
    %1290 = vmatpush1.bf16.msra.mxu0 %v1269
    %1291 = vmatprep.subr.bf16.mxu0 0
    %1292 = vmatpush1.bf16.msra.mxu0 %v1270
    %1293 = vmatprep.subr.bf16.mxu0 0
    %1294 = vmatpush1.bf16.msra.mxu0 %v1271
    %1295 = vmatprep.subr.bf16.mxu0 0
    %1296 = vmatpush1.bf16.msra.mxu0 %v1272
    %1297 = vmatprep.subr.bf16.mxu0 0
    %1298 = vmatpush1.bf16.msra.mxu0 0
    %1299 = vmatprep.subr.bf16.mxu0 0
    %1300 = vmatpush1.bf16.msra.mxu0 0
    %1301 = vmatprep.subr.bf16.mxu0 0
    %1302 = vmatpush1.bf16.msra.mxu0 0
    %1303 = vmatprep.subr.bf16.mxu0 0
    %1304 = vmatpush1.bf16.msra.mxu0 0
    %1305 = vmatprep.subr.bf16.mxu0 0
    %1306 = vmatpush1.bf16.msra.mxu0 0
    %1307 = vmatprep.subr.bf16.mxu0 0
    %1308 = vmatpush1.bf16.msra.mxu0 0
    %1309 = vmatprep.subr.bf16.mxu0 0
    %1310 = vmatpush1.bf16.msra.mxu0 0
    %1311 = vmatprep.subr.bf16.mxu0 0
    %1312 = vmatpush1.bf16.msra.mxu0 0
    %1313 = vmatprep.mubr.bf16.mxu0 0
    %1314 = vmatmul.mubr.bf16.gmra.mrb[0].mxu0 %v1231
    %v1315 = vpop.f32.mrb[0].mxu0
    %v1316 = vadd.f32 0.0, %v1315
    %v1317 = vpop.f32.mrb[0].mxu0
    %v1318 = vpop.f32.mrb[0].mxu0
    %v1319 = vpop.f32.mrb[0].mxu0
    %1320 = vdwg.mxu0
    %v1321 = vadd.f32 %v726, %v1316
    %v1322 = vld [vmem:[%s10] sm:$0x1]
    %v1324 = vlaneseq
    %v1325 = vshrl.u32 %v1324, 7
    %v1326 = vsub.s32 0, %v1325
    %v1327 = vrot.slane %v1322, %v1326
    %v1329 = vadd.f32 %v1321, %v1327
    %v1330 = vmax.f32 %v1329, 0.0
    %v1331 = vld [vmem:[%s11] sm:$0x1]
    %v1333 = vlaneseq
    %v1334 = vshrl.u32 %v1333, 7
    %v1335 = vsub.s32 0, %v1334
    %v1336 = vrot.slane %v1331, %v1335
    %v1338 = vmul.f32 %v1330, %v1336
    %v1340 = vcombine.high %v1338, %v1338
    %v1342 = vunpack.c.l.s4 1966171168
    %v1343 = vunpack.c.0.s8 %v1342
    %v1344 = vlaneseq
    %v1345 = vshrl.u32 %v1344, 7
    %v1346 = vsub.s32 %v1343, %v1345
    %v1347 = vrot.slane %v1338, %v1346
    %v1349 = vunpack.c.l.s4 1966171168
    %v1350 = vunpack.c.0.s8 %v1349
    %v1351 = vlaneseq
    %v1352 = vshrl.u32 %v1351, 7
    %v1353 = vsub.s32 %v1350, %v1352
    %v1354 = vrot.slane %v1340, %v1353
    %v1355 = vcombine.high %v1347, %v1347
    %v1356 = vcombine.high %v1354, %v1354
    %v1358 = vunpack.c.l.s4 1966171168
    %v1359 = vunpack.c.0.s8 %v1358
    %v1360 = vlaneseq
    %v1361 = vshrl.u32 %v1360, 7
    %v1362 = vsub.s32 %v1359, %v1361
    %v1363 = vrot.slane %v1347, %v1362
    %v1365 = vunpack.c.l.s4 1966171168
    %v1366 = vunpack.c.0.s8 %v1365
    %v1367 = vlaneseq
    %v1368 = vshrl.u32 %v1367, 7
    %v1369 = vsub.s32 %v1366, %v1368
    %v1370 = vrot.slane %v1354, %v1369
    %v1372 = vunpack.c.l.s4 1966171168
    %v1373 = vunpack.c.0.s8 %v1372
    %v1374 = vlaneseq
    %v1375 = vshrl.u32 %v1374, 7
    %v1376 = vsub.s32 %v1373, %v1375
    %v1377 = vrot.slane %v1355, %v1376
    %v1379 = vunpack.c.l.s4 1966171168
    %v1380 = vunpack.c.0.s8 %v1379
    %v1381 = vlaneseq
    %v1382 = vshrl.u32 %v1381, 7
    %v1383 = vsub.s32 %v1380, %v1382
    %v1384 = vrot.slane %v1356, %v1383
    %v1385 = vcombine.high %v1363, %v1363
    %v1386 = vcombine.high %v1370, %v1370
    %v1387 = vcombine.high %v1377, %v1377
    %v1388 = vcombine.high %v1384, %v1384
    %v1389 = vlaneseq
    %v1390 = vshrl.u32 %v1389, 7
    %v1391 = vsub.s32 0, %v1390
    %v1392 = vrot.slane %v1363, %v1391
    %v1393 = vlaneseq
    %v1394 = vshrl.u32 %v1393, 7
    %v1395 = vsub.s32 0, %v1394
    %v1396 = vrot.slane %v1377, %v1395
    %v1397 = vlaneseq
    %v1398 = vshrl.u32 %v1397, 7
    %v1399 = vsub.s32 0, %v1398
    %v1400 = vrot.slane %v1385, %v1399
    %v1401 = vlaneseq
    %v1402 = vshrl.u32 %v1401, 7
    %v1403 = vsub.s32 0, %v1402
    %v1404 = vrot.slane %v1387, %v1403
    %v1405 = vlaneseq
    %v1406 = vshrl.u32 %v1405, 7
    %v1407 = vsub.s32 0, %v1406
    %v1408 = vrot.slane %v1370, %v1407
    %v1409 = vlaneseq
    %v1410 = vshrl.u32 %v1409, 7
    %v1411 = vsub.s32 0, %v1410
    %v1412 = vrot.slane %v1384, %v1411
    %v1413 = vlaneseq
    %v1414 = vshrl.u32 %v1413, 7
    %v1415 = vsub.s32 0, %v1414
    %v1416 = vrot.slane %v1386, %v1415
    %v1417 = vlaneseq
    %v1418 = vshrl.u32 %v1417, 7
    %v1419 = vsub.s32 0, %v1418
    %v1420 = vrot.slane %v1388, %v1419
    %v1429 = vmul.f32 %v562, %v1392
    %v1430 = vmul.f32 %v564, %v1392
    %v1431 = vmul.f32 %v566, %v1396
    %v1432 = vmul.f32 %v568, %v1396
    %v1433 = vmul.f32 %v570, %v1400
    %v1434 = vmul.f32 %v572, %v1400
    %v1435 = vmul.f32 %v574, %v1404
    %v1436 = vmul.f32 %v576, %v1404
    %v1437 = vmul.f32 %v578, %v1408
    %v1438 = vmul.f32 %v580, %v1408
    %v1439 = vmul.f32 %v582, %v1412
    %v1440 = vmul.f32 %v584, %v1412
    %v1441 = vmul.f32 %v586, %v1416
    %v1442 = vmul.f32 %v588, %v1416
    %v1443 = vmul.f32 %v590, %v1420
    %v1444 = vmul.f32 %v592, %v1420
    %1445 = vadd.xlane.f32.xlu0 %v1429
    %v1446 = vpop.xlane.xlu0 %1445
    %1447 = vadd.xlane.f32.xlu0 %v1430
    %v1448 = vpop.xlane.xlu0 %1447
    %1449 = vadd.xlane.f32.xlu0 %v1431
    %v1450 = vpop.xlane.xlu0 %1449
    %1451 = vadd.xlane.f32.xlu0 %v1432
    %v1452 = vpop.xlane.xlu0 %1451
    %1453 = vadd.xlane.f32.xlu0 %v1433
    %v1454 = vpop.xlane.xlu0 %1453
    %1455 = vadd.xlane.f32.xlu0 %v1434
    %v1456 = vpop.xlane.xlu0 %1455
    %1457 = vadd.xlane.f32.xlu0 %v1435
    %v1458 = vpop.xlane.xlu0 %1457
    %1459 = vadd.xlane.f32.xlu0 %v1436
    %v1460 = vpop.xlane.xlu0 %1459
    %1461 = vadd.xlane.f32.xlu0 %v1437
    %v1462 = vpop.xlane.xlu0 %1461
    %1463 = vadd.xlane.f32.xlu0 %v1438
    %v1464 = vpop.xlane.xlu0 %1463
    %1465 = vadd.xlane.f32.xlu0 %v1439
    %v1466 = vpop.xlane.xlu0 %1465
    %1467 = vadd.xlane.f32.xlu0 %v1440
    %v1468 = vpop.xlane.xlu0 %1467
    %1469 = vadd.xlane.f32.xlu0 %v1441
    %v1470 = vpop.xlane.xlu0 %1469
    %1471 = vadd.xlane.f32.xlu0 %v1442
    %v1472 = vpop.xlane.xlu0 %1471
    %1473 = vadd.xlane.f32.xlu0 %v1443
    %v1474 = vpop.xlane.xlu0 %1473
    %1475 = vadd.xlane.f32.xlu0 %v1444
    %v1476 = vpop.xlane.xlu0 %1475
    %v1493 = vlaneseq
    %v1494 = vshrl.u32 %v1493, 7
    %v1495 = vsub.s32 %v731, %v1494
    %v1496 = vrot.slane %v1446, %v1495
    %v1497 = vlaneseq
    %v1498 = vshrl.u32 %v1497, 7
    %v1499 = vsub.s32 %v910, %v1498
    %v1500 = vrot.slane %v1448, %v1499
    %v1501 = vsel %vm915, %v1500, %v1496
    %v1502 = vlaneseq
    %v1503 = vshrl.u32 %v1502, 7
    %v1504 = vsub.s32 %v731, %v1503
    %v1505 = vrot.slane %v1450, %v1504
    %v1506 = vlaneseq
    %v1507 = vshrl.u32 %v1506, 7
    %v1508 = vsub.s32 %v910, %v1507
    %v1509 = vrot.slane %v1452, %v1508
    %v1510 = vsel %vm915, %v1509, %v1505
    %v1511 = vlaneseq
    %v1512 = vshrl.u32 %v1511, 7
    %v1513 = vsub.s32 %v731, %v1512
    %v1514 = vrot.slane %v1454, %v1513
    %v1515 = vlaneseq
    %v1516 = vshrl.u32 %v1515, 7
    %v1517 = vsub.s32 %v910, %v1516
    %v1518 = vrot.slane %v1456, %v1517
    %v1519 = vsel %vm915, %v1518, %v1514
    %v1520 = vlaneseq
    %v1521 = vshrl.u32 %v1520, 7
    %v1522 = vsub.s32 %v731, %v1521
    %v1523 = vrot.slane %v1458, %v1522
    %v1524 = vlaneseq
    %v1525 = vshrl.u32 %v1524, 7
    %v1526 = vsub.s32 %v910, %v1525
    %v1527 = vrot.slane %v1460, %v1526
    %v1528 = vsel %vm915, %v1527, %v1523
    %v1529 = vlaneseq
    %v1530 = vshrl.u32 %v1529, 7
    %v1531 = vsub.s32 %v731, %v1530
    %v1532 = vrot.slane %v1462, %v1531
    %v1533 = vlaneseq
    %v1534 = vshrl.u32 %v1533, 7
    %v1535 = vsub.s32 %v910, %v1534
    %v1536 = vrot.slane %v1464, %v1535
    %v1537 = vsel %vm915, %v1536, %v1532
    %v1538 = vlaneseq
    %v1539 = vshrl.u32 %v1538, 7
    %v1540 = vsub.s32 %v731, %v1539
    %v1541 = vrot.slane %v1466, %v1540
    %v1542 = vlaneseq
    %v1543 = vshrl.u32 %v1542, 7
    %v1544 = vsub.s32 %v910, %v1543
    %v1545 = vrot.slane %v1468, %v1544
    %v1546 = vsel %vm915, %v1545, %v1541
    %v1547 = vlaneseq
    %v1548 = vshrl.u32 %v1547, 7
    %v1549 = vsub.s32 %v731, %v1548
    %v1550 = vrot.slane %v1470, %v1549
    %v1551 = vlaneseq
    %v1552 = vshrl.u32 %v1551, 7
    %v1553 = vsub.s32 %v910, %v1552
    %v1554 = vrot.slane %v1472, %v1553
    %v1555 = vsel %vm915, %v1554, %v1550
    %v1556 = vlaneseq
    %v1557 = vshrl.u32 %v1556, 7
    %v1558 = vsub.s32 %v731, %v1557
    %v1559 = vrot.slane %v1474, %v1558
    %v1560 = vlaneseq
    %v1561 = vshrl.u32 %v1560, 7
    %v1562 = vsub.s32 %v910, %v1561
    %v1563 = vrot.slane %v1476, %v1562
    %v1564 = vsel %vm915, %v1563, %v1559
    %v1565 = vsel %vm980, %v1510, %v1501
    %v1566 = vsel %vm982, %v1519, %v1565
    %v1567 = vsel %vm984, %v1528, %v1566
    %v1568 = vsel %vm986, %v1537, %v1567
    %v1569 = vsel %vm988, %v1546, %v1568
    %v1570 = vsel %vm990, %v1555, %v1569
    %v1571 = vsel %vm992, %v1564, %v1570
    %v1573 = vsel %vm889, %v1571, -1e+30
    %v1574 = vsel %vm996, %v1573, -inf
    %1575 = vmax.xlane.f32.xlu0 %v1574
    %v1576 = vpop.xlane.xlu0 %1575
    %v1577 = vsub.f32 %v1573, %v1576
    %v1578 = vmul.f32 %v1577, 1.442695
    %v1579 = vpow.pop %v1578
    %v1580 = vsel %vm996, %v1579, 0.0
    %1581 = vadd.xlane.f32.xlu0 %v1580
    %v1582 = vpop.xlane.xlu0 %1581
    %v1583 = vrcp.pop %v1582
    %v1584 = vmul.f32 %v1579, %v1583
    %v1585 = vlaneseq
    %v1586 = vshrl.u32 %v1585, 7
    %v1587 = vsub.s32 0, %v1586
    %v1588 = vrot.slane %v1584, %v1587
    %1590 = vbcast.lane.b32.xlu0 %v1588, 256
    %v1591 = vpop.permute.xlu0 %1590
    %s1593 = sor.u32 256, 8
    %1594 = vbcast.lane.b32.xlu0 %v1588, %s1593
    %v1595 = vpop.permute.xlu0 %1594
    %v1596 = vlaneseq
    %v1597 = vshrl.u32 %v1596, 7
    %v1598 = vsub.s32 1, %v1597
    %v1599 = vrot.slane %v1584, %v1598
    %1601 = vbcast.lane.b32.xlu0 %v1599, 256
    %v1602 = vpop.permute.xlu0 %1601
    %s1604 = sor.u32 256, 8
    %1605 = vbcast.lane.b32.xlu0 %v1599, %s1604
    %v1606 = vpop.permute.xlu0 %1605
    %v1607 = vlaneseq
    %v1608 = vshrl.u32 %v1607, 7
    %v1609 = vsub.s32 2, %v1608
    %v1610 = vrot.slane %v1584, %v1609
    %1612 = vbcast.lane.b32.xlu0 %v1610, 256
    %v1613 = vpop.permute.xlu0 %1612
    %s1615 = sor.u32 256, 8
    %1616 = vbcast.lane.b32.xlu0 %v1610, %s1615
    %v1617 = vpop.permute.xlu0 %1616
    %v1618 = vlaneseq
    %v1619 = vshrl.u32 %v1618, 7
    %v1620 = vsub.s32 3, %v1619
    %v1621 = vrot.slane %v1584, %v1620
    %1623 = vbcast.lane.b32.xlu0 %v1621, 256
    %v1624 = vpop.permute.xlu0 %1623
    %s1626 = sor.u32 256, 8
    %1627 = vbcast.lane.b32.xlu0 %v1621, %s1626
    %v1628 = vpop.permute.xlu0 %1627
    %v1629 = vlaneseq
    %v1630 = vshrl.u32 %v1629, 7
    %v1631 = vsub.s32 4, %v1630
    %v1632 = vrot.slane %v1584, %v1631
    %1634 = vbcast.lane.b32.xlu0 %v1632, 256
    %v1635 = vpop.permute.xlu0 %1634
    %s1637 = sor.u32 256, 8
    %1638 = vbcast.lane.b32.xlu0 %v1632, %s1637
    %v1639 = vpop.permute.xlu0 %1638
    %v1640 = vlaneseq
    %v1641 = vshrl.u32 %v1640, 7
    %v1642 = vsub.s32 5, %v1641
    %v1643 = vrot.slane %v1584, %v1642
    %1645 = vbcast.lane.b32.xlu0 %v1643, 256
    %v1646 = vpop.permute.xlu0 %1645
    %s1648 = sor.u32 256, 8
    %1649 = vbcast.lane.b32.xlu0 %v1643, %s1648
    %v1650 = vpop.permute.xlu0 %1649
    %v1651 = vlaneseq
    %v1652 = vshrl.u32 %v1651, 7
    %v1653 = vsub.s32 6, %v1652
    %v1654 = vrot.slane %v1584, %v1653
    %1656 = vbcast.lane.b32.xlu0 %v1654, 256
    %v1657 = vpop.permute.xlu0 %1656
    %s1659 = sor.u32 256, 8
    %1660 = vbcast.lane.b32.xlu0 %v1654, %s1659
    %v1661 = vpop.permute.xlu0 %1660
    %v1662 = vlaneseq
    %v1663 = vshrl.u32 %v1662, 7
    %v1664 = vsub.s32 7, %v1663
    %v1665 = vrot.slane %v1584, %v1664
    %1667 = vbcast.lane.b32.xlu0 %v1665, 256
    %v1668 = vpop.permute.xlu0 %1667
    %s1670 = sor.u32 256, 8
    %1671 = vbcast.lane.b32.xlu0 %v1665, %s1670
    %v1672 = vpop.permute.xlu0 %1671
    %v1673 = vmul.f32 %v1591, %v1096
    %v1674 = vmul.f32 %v1595, %v1097
    %v1675 = vmul.f32 %v1602, %v1098
    %v1676 = vmul.f32 %v1606, %v1099
    %v1677 = vmul.f32 %v1613, %v1100
    %v1678 = vmul.f32 %v1617, %v1101
    %v1679 = vmul.f32 %v1624, %v1102
    %v1680 = vmul.f32 %v1628, %v1103
    %v1681 = vmul.f32 %v1635, %v1104
    %v1682 = vmul.f32 %v1639, %v1105
    %v1683 = vmul.f32 %v1646, %v1106
    %v1684 = vmul.f32 %v1650, %v1107
    %v1685 = vmul.f32 %v1657, %v1108
    %v1686 = vmul.f32 %v1661, %v1109
    %v1687 = vmul.f32 %v1668, %v1110
    %v1688 = vmul.f32 %v1672, %v1111
    %v1689 = vadd.f32 %v1673, %v1674
    %v1690 = vrot.slane %v1689, 4
    %v1691 = vadd.f32 %v1689, %v1690
    %v1692 = vrot.slane %v1691, 2
    %v1693 = vadd.f32 %v1691, %v1692
    %v1694 = vrot.slane %v1693, 1
    %v1695 = vadd.f32 %v1693, %v1694
    %v1696 = vadd.f32 %v1675, %v1676
    %v1697 = vrot.slane %v1696, 4
    %v1698 = vadd.f32 %v1696, %v1697
    %v1699 = vrot.slane %v1698, 2
    %v1700 = vadd.f32 %v1698, %v1699
    %v1701 = vrot.slane %v1700, 1
    %v1702 = vadd.f32 %v1700, %v1701
    %v1703 = vadd.f32 %v1677, %v1678
    %v1704 = vrot.slane %v1703, 4
    %v1705 = vadd.f32 %v1703, %v1704
    %v1706 = vrot.slane %v1705, 2
    %v1707 = vadd.f32 %v1705, %v1706
    %v1708 = vrot.slane %v1707, 1
    %v1709 = vadd.f32 %v1707, %v1708
    %v1710 = vadd.f32 %v1679, %v1680
    %v1711 = vrot.slane %v1710, 4
    %v1712 = vadd.f32 %v1710, %v1711
    %v1713 = vrot.slane %v1712, 2
    %v1714 = vadd.f32 %v1712, %v1713
    %v1715 = vrot.slane %v1714, 1
    %v1716 = vadd.f32 %v1714, %v1715
    %v1717 = vadd.f32 %v1681, %v1682
    %v1718 = vrot.slane %v1717, 4
    %v1719 = vadd.f32 %v1717, %v1718
    %v1720 = vrot.slane %v1719, 2
    %v1721 = vadd.f32 %v1719, %v1720
    %v1722 = vrot.slane %v1721, 1
    %v1723 = vadd.f32 %v1721, %v1722
    %v1724 = vadd.f32 %v1683, %v1684
    %v1725 = vrot.slane %v1724, 4
    %v1726 = vadd.f32 %v1724, %v1725
    %v1727 = vrot.slane %v1726, 2
    %v1728 = vadd.f32 %v1726, %v1727
    %v1729 = vrot.slane %v1728, 1
    %v1730 = vadd.f32 %v1728, %v1729
    %v1731 = vadd.f32 %v1685, %v1686
    %v1732 = vrot.slane %v1731, 4
    %v1733 = vadd.f32 %v1731, %v1732
    %v1734 = vrot.slane %v1733, 2
    %v1735 = vadd.f32 %v1733, %v1734
    %v1736 = vrot.slane %v1735, 1
    %v1737 = vadd.f32 %v1735, %v1736
    %v1738 = vadd.f32 %v1687, %v1688
    %v1739 = vrot.slane %v1738, 4
    %v1740 = vadd.f32 %v1738, %v1739
    %v1741 = vrot.slane %v1740, 2
    %v1742 = vadd.f32 %v1740, %v1741
    %v1743 = vrot.slane %v1742, 1
    %v1744 = vadd.f32 %v1742, %v1743
    %v1745 = vpack.c.bf16 %v1695, %v1695
    %v1746 = vpack.c.bf16 %v1702, %v1702
    %v1747 = vpack.c.bf16 %v1709, %v1709
    %v1748 = vpack.c.bf16 %v1716, %v1716
    %v1749 = vpack.c.bf16 %v1723, %v1723
    %v1750 = vpack.c.bf16 %v1730, %v1730
    %v1751 = vpack.c.bf16 %v1737, %v1737
    %v1752 = vpack.c.bf16 %v1744, %v1744
    %v1761 = vunpack.c.l.b16 %v1745
    %v1762 = vunpack.c.l.b16 %v1746
    %v1763 = vunpack.c.l.b16 %v1747
    %v1764 = vunpack.c.l.b16 %v1748
    %v1765 = vunpack.c.l.b16 %v1749
    %v1766 = vunpack.c.l.b16 %v1750
    %v1767 = vunpack.c.l.b16 %v1751
    %v1768 = vunpack.c.l.b16 %v1752
    %v1769 = vsel %vm980, %v1762, %v1761
    %v1770 = vsel %vm982, %v1763, %v1769
    %v1771 = vsel %vm984, %v1764, %v1770
    %v1772 = vsel %vm986, %v1765, %v1771
    %v1773 = vsel %vm988, %v1766, %v1772
    %v1774 = vsel %vm990, %v1767, %v1773
    %v1775 = vsel %vm992, %v1768, %v1774
    %v1776 = vpack.c.b16 %v1775, %v1775
    %1778 = vmatprep.subr.bf16.mxu0 0
    %1779 = vmatpush1.bf16.msra.mxu0 %v1265
    %1780 = vmatprep.subr.bf16.mxu0 0
    %1781 = vmatpush1.bf16.msra.mxu0 %v1266
    %1782 = vmatprep.subr.bf16.mxu0 0
    %1783 = vmatpush1.bf16.msra.mxu0 %v1267
    %1784 = vmatprep.subr.bf16.mxu0 0
    %1785 = vmatpush1.bf16.msra.mxu0 %v1268
    %1786 = vmatprep.subr.bf16.mxu0 0
    %1787 = vmatpush1.bf16.msra.mxu0 %v1269
    %1788 = vmatprep.subr.bf16.mxu0 0
    %1789 = vmatpush1.bf16.msra.mxu0 %v1270
    %1790 = vmatprep.subr.bf16.mxu0 0
    %1791 = vmatpush1.bf16.msra.mxu0 %v1271
    %1792 = vmatprep.subr.bf16.mxu0 0
    %1793 = vmatpush1.bf16.msra.mxu0 %v1272
    %1794 = vmatprep.subr.bf16.mxu0 0
    %1795 = vmatpush1.bf16.msra.mxu0 0
    %1796 = vmatprep.subr.bf16.mxu0 0
    %1797 = vmatpush1.bf16.msra.mxu0 0
    %1798 = vmatprep.subr.bf16.mxu0 0
    %1799 = vmatpush1.bf16.msra.mxu0 0
    %1800 = vmatprep.subr.bf16.mxu0 0
    %1801 = vmatpush1.bf16.msra.mxu0 0
    %1802 = vmatprep.subr.bf16.mxu0 0
    %1803 = vmatpush1.bf16.msra.mxu0 0
    %1804 = vmatprep.subr.bf16.mxu0 0
    %1805 = vmatpush1.bf16.msra.mxu0 0
    %1806 = vmatprep.subr.bf16.mxu0 0
    %1807 = vmatpush1.bf16.msra.mxu0 0
    %1808 = vmatprep.subr.bf16.mxu0 0
    %1809 = vmatpush1.bf16.msra.mxu0 0
    %1810 = vmatprep.mubr.bf16.mxu0 0
    %1811 = vmatmul.mubr.bf16.gmra.mrb[0].mxu0 %v1776
    %v1812 = vpop.f32.mrb[0].mxu0
    %v1813 = vadd.f32 0.0, %v1812
    %v1814 = vpop.f32.mrb[0].mxu0
    %v1815 = vpop.f32.mrb[0].mxu0
    %v1816 = vpop.f32.mrb[0].mxu0
    %1817 = vdwg.mxu0
    %v1818 = vadd.f32 %v726, %v1813
    %v1819 = vadd.f32 %v1818, %v1327
    %v1820 = vmax.f32 %v1819, 0.0
    %v1821 = vmul.f32 %v1820, %v1336
    %v1823 = vcombine.high %v1821, %v1821
    %v1825 = vunpack.c.l.s4 1966171168
    %v1826 = vunpack.c.0.s8 %v1825
    %v1827 = vlaneseq
    %v1828 = vshrl.u32 %v1827, 7
    %v1829 = vsub.s32 %v1826, %v1828
    %v1830 = vrot.slane %v1821, %v1829
    %v1832 = vunpack.c.l.s4 1966171168
    %v1833 = vunpack.c.0.s8 %v1832
    %v1834 = vlaneseq
    %v1835 = vshrl.u32 %v1834, 7
    %v1836 = vsub.s32 %v1833, %v1835
    %v1837 = vrot.slane %v1823, %v1836
    %v1838 = vcombine.high %v1830, %v1830
    %v1839 = vcombine.high %v1837, %v1837
    %v1841 = vunpack.c.l.s4 1966171168
    %v1842 = vunpack.c.0.s8 %v1841
    %v1843 = vlaneseq
    %v1844 = vshrl.u32 %v1843, 7
    %v1845 = vsub.s32 %v1842, %v1844
    %v1846 = vrot.slane %v1830, %v1845
    %v1848 = vunpack.c.l.s4 1966171168
    %v1849 = vunpack.c.0.s8 %v1848
    %v1850 = vlaneseq
    %v1851 = vshrl.u32 %v1850, 7
    %v1852 = vsub.s32 %v1849, %v1851
    %v1853 = vrot.slane %v1837, %v1852
    %v1855 = vunpack.c.l.s4 1966171168
    %v1856 = vunpack.c.0.s8 %v1855
    %v1857 = vlaneseq
    %v1858 = vshrl.u32 %v1857, 7
    %v1859 = vsub.s32 %v1856, %v1858
    %v1860 = vrot.slane %v1838, %v1859
    %v1862 = vunpack.c.l.s4 1966171168
    %v1863 = vunpack.c.0.s8 %v1862
    %v1864 = vlaneseq
    %v1865 = vshrl.u32 %v1864, 7
    %v1866 = vsub.s32 %v1863, %v1865
    %v1867 = vrot.slane %v1839, %v1866
    %v1868 = vcombine.high %v1846, %v1846
    %v1869 = vcombine.high %v1853, %v1853
    %v1870 = vcombine.high %v1860, %v1860
    %v1871 = vcombine.high %v1867, %v1867
    %v1872 = vlaneseq
    %v1873 = vshrl.u32 %v1872, 7
    %v1874 = vsub.s32 0, %v1873
    %v1875 = vrot.slane %v1846, %v1874
    %v1876 = vlaneseq
    %v1877 = vshrl.u32 %v1876, 7
    %v1878 = vsub.s32 0, %v1877
    %v1879 = vrot.slane %v1860, %v1878
    %v1880 = vlaneseq
    %v1881 = vshrl.u32 %v1880, 7
    %v1882 = vsub.s32 0, %v1881
    %v1883 = vrot.slane %v1868, %v1882
    %v1884 = vlaneseq
    %v1885 = vshrl.u32 %v1884, 7
    %v1886 = vsub.s32 0, %v1885
    %v1887 = vrot.slane %v1870, %v1886
    %v1888 = vlaneseq
    %v1889 = vshrl.u32 %v1888, 7
    %v1890 = vsub.s32 0, %v1889
    %v1891 = vrot.slane %v1853, %v1890
    %v1892 = vlaneseq
    %v1893 = vshrl.u32 %v1892, 7
    %v1894 = vsub.s32 0, %v1893
    %v1895 = vrot.slane %v1867, %v1894
    %v1896 = vlaneseq
    %v1897 = vshrl.u32 %v1896, 7
    %v1898 = vsub.s32 0, %v1897
    %v1899 = vrot.slane %v1869, %v1898
    %v1900 = vlaneseq
    %v1901 = vshrl.u32 %v1900, 7
    %v1902 = vsub.s32 0, %v1901
    %v1903 = vrot.slane %v1871, %v1902
    %v1912 = vmul.f32 %v562, %v1875
    %v1913 = vmul.f32 %v564, %v1875
    %v1914 = vmul.f32 %v566, %v1879
    %v1915 = vmul.f32 %v568, %v1879
    %v1916 = vmul.f32 %v570, %v1883
    %v1917 = vmul.f32 %v572, %v1883
    %v1918 = vmul.f32 %v574, %v1887
    %v1919 = vmul.f32 %v576, %v1887
    %v1920 = vmul.f32 %v578, %v1891
    %v1921 = vmul.f32 %v580, %v1891
    %v1922 = vmul.f32 %v582, %v1895
    %v1923 = vmul.f32 %v584, %v1895
    %v1924 = vmul.f32 %v586, %v1899
    %v1925 = vmul.f32 %v588, %v1899
    %v1926 = vmul.f32 %v590, %v1903
    %v1927 = vmul.f32 %v592, %v1903
    %1928 = vadd.xlane.f32.xlu0 %v1912
    %v1929 = vpop.xlane.xlu0 %1928
    %1930 = vadd.xlane.f32.xlu0 %v1913
    %v1931 = vpop.xlane.xlu0 %1930
    %1932 = vadd.xlane.f32.xlu0 %v1914
    %v1933 = vpop.xlane.xlu0 %1932
    %1934 = vadd.xlane.f32.xlu0 %v1915
    %v1935 = vpop.xlane.xlu0 %1934
    %1936 = vadd.xlane.f32.xlu0 %v1916
    %v1937 = vpop.xlane.xlu0 %1936
    %1938 = vadd.xlane.f32.xlu0 %v1917
    %v1939 = vpop.xlane.xlu0 %1938
    %1940 = vadd.xlane.f32.xlu0 %v1918
    %v1941 = vpop.xlane.xlu0 %1940
    %1942 = vadd.xlane.f32.xlu0 %v1919
    %v1943 = vpop.xlane.xlu0 %1942
    %1944 = vadd.xlane.f32.xlu0 %v1920
    %v1945 = vpop.xlane.xlu0 %1944
    %1946 = vadd.xlane.f32.xlu0 %v1921
    %v1947 = vpop.xlane.xlu0 %1946
    %1948 = vadd.xlane.f32.xlu0 %v1922
    %v1949 = vpop.xlane.xlu0 %1948
    %1950 = vadd.xlane.f32.xlu0 %v1923
    %v1951 = vpop.xlane.xlu0 %1950
    %1952 = vadd.xlane.f32.xlu0 %v1924
    %v1953 = vpop.xlane.xlu0 %1952
    %1954 = vadd.xlane.f32.xlu0 %v1925
    %v1955 = vpop.xlane.xlu0 %1954
    %1956 = vadd.xlane.f32.xlu0 %v1926
    %v1957 = vpop.xlane.xlu0 %1956
    %1958 = vadd.xlane.f32.xlu0 %v1927
    %v1959 = vpop.xlane.xlu0 %1958
    %v1976 = vlaneseq
    %v1977 = vshrl.u32 %v1976, 7
    %v1978 = vsub.s32 %v731, %v1977
    %v1979 = vrot.slane %v1929, %v1978
    %v1980 = vlaneseq
    %v1981 = vshrl.u32 %v1980, 7
    %v1982 = vsub.s32 %v910, %v1981
    %v1983 = vrot.slane %v1931, %v1982
    %v1984 = vsel %vm915, %v1983, %v1979
    %v1985 = vlaneseq
    %v1986 = vshrl.u32 %v1985, 7
    %v1987 = vsub.s32 %v731, %v1986
    %v1988 = vrot.slane %v1933, %v1987
    %v1989 = vlaneseq
    %v1990 = vshrl.u32 %v1989, 7
    %v1991 = vsub.s32 %v910, %v1990
    %v1992 = vrot.slane %v1935, %v1991
    %v1993 = vsel %vm915, %v1992, %v1988
    %v1994 = vlaneseq
    %v1995 = vshrl.u32 %v1994, 7
    %v1996 = vsub.s32 %v731, %v1995
    %v1997 = vrot.slane %v1937, %v1996
    %v1998 = vlaneseq
    %v1999 = vshrl.u32 %v1998, 7
    %v2000 = vsub.s32 %v910, %v1999
    %v2001 = vrot.slane %v1939, %v2000
    %v2002 = vsel %vm915, %v2001, %v1997
    %v2003 = vlaneseq
    %v2004 = vshrl.u32 %v2003, 7
    %v2005 = vsub.s32 %v731, %v2004
    %v2006 = vrot.slane %v1941, %v2005
    %v2007 = vlaneseq
    %v2008 = vshrl.u32 %v2007, 7
    %v2009 = vsub.s32 %v910, %v2008
    %v2010 = vrot.slane %v1943, %v2009
    %v2011 = vsel %vm915, %v2010, %v2006
    %v2012 = vlaneseq
    %v2013 = vshrl.u32 %v2012, 7
    %v2014 = vsub.s32 %v731, %v2013
    %v2015 = vrot.slane %v1945, %v2014
    %v2016 = vlaneseq
    %v2017 = vshrl.u32 %v2016, 7
    %v2018 = vsub.s32 %v910, %v2017
    %v2019 = vrot.slane %v1947, %v2018
    %v2020 = vsel %vm915, %v2019, %v2015
    %v2021 = vlaneseq
    %v2022 = vshrl.u32 %v2021, 7
    %v2023 = vsub.s32 %v731, %v2022
    %v2024 = vrot.slane %v1949, %v2023
    %v2025 = vlaneseq
    %v2026 = vshrl.u32 %v2025, 7
    %v2027 = vsub.s32 %v910, %v2026
    %v2028 = vrot.slane %v1951, %v2027
    %v2029 = vsel %vm915, %v2028, %v2024
    %v2030 = vlaneseq
    %v2031 = vshrl.u32 %v2030, 7
    %v2032 = vsub.s32 %v731, %v2031
    %v2033 = vrot.slane %v1953, %v2032
    %v2034 = vlaneseq
    %v2035 = vshrl.u32 %v2034, 7
    %v2036 = vsub.s32 %v910, %v2035
    %v2037 = vrot.slane %v1955, %v2036
    %v2038 = vsel %vm915, %v2037, %v2033
    %v2039 = vlaneseq
    %v2040 = vshrl.u32 %v2039, 7
    %v2041 = vsub.s32 %v731, %v2040
    %v2042 = vrot.slane %v1957, %v2041
    %v2043 = vlaneseq
    %v2044 = vshrl.u32 %v2043, 7
    %v2045 = vsub.s32 %v910, %v2044
    %v2046 = vrot.slane %v1959, %v2045
    %v2047 = vsel %vm915, %v2046, %v2042
    %v2048 = vsel %vm980, %v1993, %v1984
    %v2049 = vsel %vm982, %v2002, %v2048
    %v2050 = vsel %vm984, %v2011, %v2049
    %v2051 = vsel %vm986, %v2020, %v2050
    %v2052 = vsel %vm988, %v2029, %v2051
    %v2053 = vsel %vm990, %v2038, %v2052
    %v2054 = vsel %vm992, %v2047, %v2053
    %v2056 = vsel %vm889, %v2054, -1e+30
    %v2057 = vsel %vm996, %v2056, -inf
    %2058 = vmax.xlane.f32.xlu0 %v2057
    %v2059 = vpop.xlane.xlu0 %2058
    %v2060 = vsub.f32 %v2056, %v2059
    %v2061 = vmul.f32 %v2060, 1.442695
    %v2062 = vpow.pop %v2061
    %v2063 = vsel %vm996, %v2062, 0.0
    %2064 = vadd.xlane.f32.xlu0 %v2063
    %v2065 = vpop.xlane.xlu0 %2064
    %v2066 = vrcp.pop %v2065
    %v2067 = vmul.f32 %v2062, %v2066
    %v2068 = vlaneseq
    %v2069 = vshrl.u32 %v2068, 7
    %v2070 = vsub.s32 0, %v2069
    %v2071 = vrot.slane %v2067, %v2070
    %2073 = vbcast.lane.b32.xlu0 %v2071, 256
    %v2074 = vpop.permute.xlu0 %2073
    %s2076 = sor.u32 256, 8
    %2077 = vbcast.lane.b32.xlu0 %v2071, %s2076
    %v2078 = vpop.permute.xlu0 %2077
    %v2079 = vlaneseq
    %v2080 = vshrl.u32 %v2079, 7
    %v2081 = vsub.s32 1, %v2080
    %v2082 = vrot.slane %v2067, %v2081
    %2084 = vbcast.lane.b32.xlu0 %v2082, 256
    %v2085 = vpop.permute.xlu0 %2084
    %s2087 = sor.u32 256, 8
    %2088 = vbcast.lane.b32.xlu0 %v2082, %s2087
    %v2089 = vpop.permute.xlu0 %2088
    %v2090 = vlaneseq
    %v2091 = vshrl.u32 %v2090, 7
    %v2092 = vsub.s32 2, %v2091
    %v2093 = vrot.slane %v2067, %v2092
    %2095 = vbcast.lane.b32.xlu0 %v2093, 256
    %v2096 = vpop.permute.xlu0 %2095
    %s2098 = sor.u32 256, 8
    %2099 = vbcast.lane.b32.xlu0 %v2093, %s2098
    %v2100 = vpop.permute.xlu0 %2099
    %v2101 = vlaneseq
    %v2102 = vshrl.u32 %v2101, 7
    %v2103 = vsub.s32 3, %v2102
    %v2104 = vrot.slane %v2067, %v2103
    %2106 = vbcast.lane.b32.xlu0 %v2104, 256
    %v2107 = vpop.permute.xlu0 %2106
    %s2109 = sor.u32 256, 8
    %2110 = vbcast.lane.b32.xlu0 %v2104, %s2109
    %v2111 = vpop.permute.xlu0 %2110
    %v2112 = vlaneseq
    %v2113 = vshrl.u32 %v2112, 7
    %v2114 = vsub.s32 4, %v2113
    %v2115 = vrot.slane %v2067, %v2114
    %2117 = vbcast.lane.b32.xlu0 %v2115, 256
    %v2118 = vpop.permute.xlu0 %2117
    %s2120 = sor.u32 256, 8
    %2121 = vbcast.lane.b32.xlu0 %v2115, %s2120
    %v2122 = vpop.permute.xlu0 %2121
    %v2123 = vlaneseq
    %v2124 = vshrl.u32 %v2123, 7
    %v2125 = vsub.s32 5, %v2124
    %v2126 = vrot.slane %v2067, %v2125
    %2128 = vbcast.lane.b32.xlu0 %v2126, 256
    %v2129 = vpop.permute.xlu0 %2128
    %s2131 = sor.u32 256, 8
    %2132 = vbcast.lane.b32.xlu0 %v2126, %s2131
    %v2133 = vpop.permute.xlu0 %2132
    %v2134 = vlaneseq
    %v2135 = vshrl.u32 %v2134, 7
    %v2136 = vsub.s32 6, %v2135
    %v2137 = vrot.slane %v2067, %v2136
    %2139 = vbcast.lane.b32.xlu0 %v2137, 256
    %v2140 = vpop.permute.xlu0 %2139
    %s2142 = sor.u32 256, 8
    %2143 = vbcast.lane.b32.xlu0 %v2137, %s2142
    %v2144 = vpop.permute.xlu0 %2143
    %v2145 = vlaneseq
    %v2146 = vshrl.u32 %v2145, 7
    %v2147 = vsub.s32 7, %v2146
    %v2148 = vrot.slane %v2067, %v2147
    %2150 = vbcast.lane.b32.xlu0 %v2148, 256
    %v2151 = vpop.permute.xlu0 %2150
    %s2153 = sor.u32 256, 8
    %2154 = vbcast.lane.b32.xlu0 %v2148, %s2153
    %v2155 = vpop.permute.xlu0 %2154
    %v2156 = vmul.f32 %v2074, %v1096
    %v2157 = vmul.f32 %v2078, %v1097
    %v2158 = vmul.f32 %v2085, %v1098
    %v2159 = vmul.f32 %v2089, %v1099
    %v2160 = vmul.f32 %v2096, %v1100
    %v2161 = vmul.f32 %v2100, %v1101
    %v2162 = vmul.f32 %v2107, %v1102
    %v2163 = vmul.f32 %v2111, %v1103
    %v2164 = vmul.f32 %v2118, %v1104
    %v2165 = vmul.f32 %v2122, %v1105
    %v2166 = vmul.f32 %v2129, %v1106
    %v2167 = vmul.f32 %v2133, %v1107
    %v2168 = vmul.f32 %v2140, %v1108
    %v2169 = vmul.f32 %v2144, %v1109
    %v2170 = vmul.f32 %v2151, %v1110
    %v2171 = vmul.f32 %v2155, %v1111
    %v2172 = vadd.f32 %v2156, %v2157
    %v2173 = vrot.slane %v2172, 4
    %v2174 = vadd.f32 %v2172, %v2173
    %v2175 = vrot.slane %v2174, 2
    %v2176 = vadd.f32 %v2174, %v2175
    %v2177 = vrot.slane %v2176, 1
    %v2178 = vadd.f32 %v2176, %v2177
    %v2179 = vadd.f32 %v2158, %v2159
    %v2180 = vrot.slane %v2179, 4
    %v2181 = vadd.f32 %v2179, %v2180
    %v2182 = vrot.slane %v2181, 2
    %v2183 = vadd.f32 %v2181, %v2182
    %v2184 = vrot.slane %v2183, 1
    %v2185 = vadd.f32 %v2183, %v2184
    %v2186 = vadd.f32 %v2160, %v2161
    %v2187 = vrot.slane %v2186, 4
    %v2188 = vadd.f32 %v2186, %v2187
    %v2189 = vrot.slane %v2188, 2
    %v2190 = vadd.f32 %v2188, %v2189
    %v2191 = vrot.slane %v2190, 1
    %v2192 = vadd.f32 %v2190, %v2191
    %v2193 = vadd.f32 %v2162, %v2163
    %v2194 = vrot.slane %v2193, 4
    %v2195 = vadd.f32 %v2193, %v2194
    %v2196 = vrot.slane %v2195, 2
    %v2197 = vadd.f32 %v2195, %v2196
    %v2198 = vrot.slane %v2197, 1
    %v2199 = vadd.f32 %v2197, %v2198
    %v2200 = vadd.f32 %v2164, %v2165
    %v2201 = vrot.slane %v2200, 4
    %v2202 = vadd.f32 %v2200, %v2201
    %v2203 = vrot.slane %v2202, 2
    %v2204 = vadd.f32 %v2202, %v2203
    %v2205 = vrot.slane %v2204, 1
    %v2206 = vadd.f32 %v2204, %v2205
    %v2207 = vadd.f32 %v2166, %v2167
    %v2208 = vrot.slane %v2207, 4
    %v2209 = vadd.f32 %v2207, %v2208
    %v2210 = vrot.slane %v2209, 2
    %v2211 = vadd.f32 %v2209, %v2210
    %v2212 = vrot.slane %v2211, 1
    %v2213 = vadd.f32 %v2211, %v2212
    %v2214 = vadd.f32 %v2168, %v2169
    %v2215 = vrot.slane %v2214, 4
    %v2216 = vadd.f32 %v2214, %v2215
    %v2217 = vrot.slane %v2216, 2
    %v2218 = vadd.f32 %v2216, %v2217
    %v2219 = vrot.slane %v2218, 1
    %v2220 = vadd.f32 %v2218, %v2219
    %v2221 = vadd.f32 %v2170, %v2171
    %v2222 = vrot.slane %v2221, 4
    %v2223 = vadd.f32 %v2221, %v2222
    %v2224 = vrot.slane %v2223, 2
    %v2225 = vadd.f32 %v2223, %v2224
    %v2226 = vrot.slane %v2225, 1
    %v2227 = vadd.f32 %v2225, %v2226
    %v2228 = vpack.c.bf16 %v2178, %v2178
    %v2229 = vpack.c.bf16 %v2185, %v2185
    %v2230 = vpack.c.bf16 %v2192, %v2192
    %v2231 = vpack.c.bf16 %v2199, %v2199
    %v2232 = vpack.c.bf16 %v2206, %v2206
    %v2233 = vpack.c.bf16 %v2213, %v2213
    %v2234 = vpack.c.bf16 %v2220, %v2220
    %v2235 = vpack.c.bf16 %v2227, %v2227
    %v2236 = vld [vmem:[#allocation13] sm:$0xf]
    %v2237 = vld [vmem:[#allocation13 + $0x4] sm:$0xf]
    %v2238 = vld [vmem:[#allocation13 + $0x8] sm:$0xf]
    %v2239 = vld [vmem:[#allocation13 + $0xc] sm:$0xf]
    %v2240 = vld [vmem:[#allocation13 + $0x10] sm:$0xf]
    %v2241 = vld [vmem:[#allocation13 + $0x14] sm:$0xf]
    %v2242 = vld [vmem:[#allocation13 + $0x18] sm:$0xf]
    %v2243 = vld [vmem:[#allocation13 + $0x1c] sm:$0xf]
    %v2244 = vld [vmem:[#allocation13 + $0x20] sm:$0xf]
    %v2245 = vld [vmem:[#allocation13 + $0x24] sm:$0xf]
    %v2246 = vld [vmem:[#allocation13 + $0x28] sm:$0xf]
    %v2247 = vld [vmem:[#allocation13 + $0x2c] sm:$0xf]
    %v2248 = vld [vmem:[#allocation13 + $0x30] sm:$0xf]
    %v2249 = vld [vmem:[#allocation13 + $0x34] sm:$0xf]
    %v2250 = vld [vmem:[#allocation13 + $0x38] sm:$0xf]
    %v2251 = vld [vmem:[#allocation13 + $0x3c] sm:$0xf]
    %v2252 = vld [vmem:[%s13] sm:$0x1]
    %v2254 = vlaneseq
    %v2255 = vshrl.u32 %v2254, 7
    %v2256 = vsub.s32 0, %v2255
    %v2257 = vrot.slane %v2252, %v2256
    %v2267 = vunpack.c.l.b16 %v2228
    %v2268 = vunpack.c.l.b16 %v2229
    %v2269 = vunpack.c.l.b16 %v2230
    %v2270 = vunpack.c.l.b16 %v2231
    %v2271 = vunpack.c.l.b16 %v2232
    %v2272 = vunpack.c.l.b16 %v2233
    %v2273 = vunpack.c.l.b16 %v2234
    %v2274 = vunpack.c.l.b16 %v2235
    %v2275 = vsel %vm980, %v2268, %v2267
    %v2276 = vsel %vm982, %v2269, %v2275
    %v2277 = vsel %vm984, %v2270, %v2276
    %v2278 = vsel %vm986, %v2271, %v2277
    %v2279 = vsel %vm988, %v2272, %v2278
    %v2280 = vsel %vm990, %v2273, %v2279
    %v2281 = vsel %vm992, %v2274, %v2280
    %v2282 = vpack.c.b16 %v2281, %v2281
    %v2300 = vunpack.c.l.b16 %v2236
    %v2301 = vunpack.c.l.b16 %v2237
    %v2302 = vunpack.c.l.b16 %v2238
    %v2303 = vunpack.c.l.b16 %v2239
    %v2304 = vunpack.c.l.b16 %v2240
    %v2305 = vunpack.c.l.b16 %v2241
    %v2306 = vunpack.c.l.b16 %v2242
    %v2307 = vunpack.c.l.b16 %v2243
    %v2308 = vunpack.c.l.b16 %v2244
    %v2309 = vunpack.c.l.b16 %v2245
    %v2310 = vunpack.c.l.b16 %v2246
    %v2311 = vunpack.c.l.b16 %v2247
    %v2312 = vunpack.c.l.b16 %v2248
    %v2313 = vunpack.c.l.b16 %v2249
    %v2314 = vunpack.c.l.b16 %v2250
    %v2315 = vunpack.c.l.b16 %v2251
    %v2316 = vpack.c.b16 %v2301, %v2300
    %v2317 = vpack.c.b16 %v2303, %v2302
    %v2318 = vpack.c.b16 %v2305, %v2304
    %v2319 = vpack.c.b16 %v2307, %v2306
    %v2320 = vpack.c.b16 %v2309, %v2308
    %v2321 = vpack.c.b16 %v2311, %v2310
    %v2322 = vpack.c.b16 %v2313, %v2312
    %v2323 = vpack.c.b16 %v2315, %v2314
    %2332 = vmatprep.subr.bf16.mxu0 0
    %2333 = vmatpush1.bf16.msra.mxu0 %v2316
    %2334 = vmatprep.subr.bf16.mxu0 0
    %2335 = vmatpush1.bf16.msra.mxu0 %v2317
    %2336 = vmatprep.subr.bf16.mxu0 0
    %2337 = vmatpush1.bf16.msra.mxu0 %v2318
    %2338 = vmatprep.subr.bf16.mxu0 0
    %2339 = vmatpush1.bf16.msra.mxu0 %v2319
    %2340 = vmatprep.subr.bf16.mxu0 0
    %2341 = vmatpush1.bf16.msra.mxu0 %v2320
    %2342 = vmatprep.subr.bf16.mxu0 0
    %2343 = vmatpush1.bf16.msra.mxu0 %v2321
    %2344 = vmatprep.subr.bf16.mxu0 0
    %2345 = vmatpush1.bf16.msra.mxu0 %v2322
    %2346 = vmatprep.subr.bf16.mxu0 0
    %2347 = vmatpush1.bf16.msra.mxu0 %v2323
    %2348 = vmatprep.subr.bf16.mxu0 0
    %2349 = vmatpush1.bf16.msra.mxu0 0
    %2350 = vmatprep.subr.bf16.mxu0 0
    %2351 = vmatpush1.bf16.msra.mxu0 0
    %2352 = vmatprep.subr.bf16.mxu0 0
    %2353 = vmatpush1.bf16.msra.mxu0 0
    %2354 = vmatprep.subr.bf16.mxu0 0
    %2355 = vmatpush1.bf16.msra.mxu0 0
    %2356 = vmatprep.subr.bf16.mxu0 0
    %2357 = vmatpush1.bf16.msra.mxu0 0
    %2358 = vmatprep.subr.bf16.mxu0 0
    %2359 = vmatpush1.bf16.msra.mxu0 0
    %2360 = vmatprep.subr.bf16.mxu0 0
    %2361 = vmatpush1.bf16.msra.mxu0 0
    %2362 = vmatprep.subr.bf16.mxu0 0
    %2363 = vmatpush1.bf16.msra.mxu0 0
    %2364 = vmatprep.mubr.bf16.mxu0 0
    %2365 = vmatmul.mubr.bf16.gmra.mrb[0].mxu0 %v2282
    %v2366 = vpop.f32.mrb[0].mxu0
    %v2367 = vadd.f32 %v2257, %v2366
    %v2368 = vpop.f32.mrb[0].mxu0
    %v2369 = vpop.f32.mrb[0].mxu0
    %v2370 = vpop.f32.mrb[0].mxu0
    %2371 = vdwg.mxu0
    %v2372 = vmax.f32 %v2367, 0.0
    %v2373 = vpack.c.bf16 %v2372, %v2372
    %v2374 = vld [vmem:[#allocation14] sm:$0xf]
    %v2375 = vld [vmem:[#allocation14 + $0x4] sm:$0xf]
    %v2376 = vld [vmem:[#allocation14 + $0x8] sm:$0xf]
    %v2377 = vld [vmem:[#allocation14 + $0xc] sm:$0xf]
    %v2378 = vld [vmem:[#allocation14 + $0x10] sm:$0xf]
    %v2379 = vld [vmem:[#allocation14 + $0x14] sm:$0xf]
    %v2380 = vld [vmem:[#allocation14 + $0x18] sm:$0xf]
    %v2381 = vld [vmem:[#allocation14 + $0x1c] sm:$0xf]
    %v2382 = vld [vmem:[#allocation14 + $0x20] sm:$0xf]
    %v2383 = vld [vmem:[#allocation14 + $0x24] sm:$0xf]
    %v2384 = vld [vmem:[#allocation14 + $0x28] sm:$0xf]
    %v2385 = vld [vmem:[#allocation14 + $0x2c] sm:$0xf]
    %v2386 = vld [vmem:[#allocation14 + $0x30] sm:$0xf]
    %v2387 = vld [vmem:[#allocation14 + $0x34] sm:$0xf]
    %v2388 = vld [vmem:[#allocation14 + $0x38] sm:$0xf]
    %v2389 = vld [vmem:[#allocation14 + $0x3c] sm:$0xf]
    %v2390 = vld [vmem:[%s15] sm:$0x1]
    %v2392 = vlaneseq
    %v2393 = vshrl.u32 %v2392, 7
    %v2394 = vsub.s32 0, %v2393
    %v2395 = vrot.slane %v2390, %v2394
    %v2413 = vunpack.c.l.b16 %v2374
    %v2414 = vunpack.c.l.b16 %v2375
    %v2415 = vunpack.c.l.b16 %v2376
    %v2416 = vunpack.c.l.b16 %v2377
    %v2417 = vunpack.c.l.b16 %v2378
    %v2418 = vunpack.c.l.b16 %v2379
    %v2419 = vunpack.c.l.b16 %v2380
    %v2420 = vunpack.c.l.b16 %v2381
    %v2421 = vunpack.c.l.b16 %v2382
    %v2422 = vunpack.c.l.b16 %v2383
    %v2423 = vunpack.c.l.b16 %v2384
    %v2424 = vunpack.c.l.b16 %v2385
    %v2425 = vunpack.c.l.b16 %v2386
    %v2426 = vunpack.c.l.b16 %v2387
    %v2427 = vunpack.c.l.b16 %v2388
    %v2428 = vunpack.c.l.b16 %v2389
    %v2429 = vpack.c.b16 %v2414, %v2413
    %v2430 = vpack.c.b16 %v2416, %v2415
    %v2431 = vpack.c.b16 %v2418, %v2417
    %v2432 = vpack.c.b16 %v2420, %v2419
    %v2433 = vpack.c.b16 %v2422, %v2421
    %v2434 = vpack.c.b16 %v2424, %v2423
    %v2435 = vpack.c.b16 %v2426, %v2425
    %v2436 = vpack.c.b16 %v2428, %v2427
    %2445 = vmatprep.subr.bf16.mxu0 0
    %2446 = vmatpush1.bf16.msra.mxu0 %v2429
    %2447 = vmatprep.subr.bf16.mxu0 0
    %2448 = vmatpush1.bf16.msra.mxu0 %v2430
    %2449 = vmatprep.subr.bf16.mxu0 0
    %2450 = vmatpush1.bf16.msra.mxu0 %v2431
    %2451 = vmatprep.subr.bf16.mxu0 0
    %2452 = vmatpush1.bf16.msra.mxu0 %v2432
    %2453 = vmatprep.subr.bf16.mxu0 0
    %2454 = vmatpush1.bf16.msra.mxu0 %v2433
    %2455 = vmatprep.subr.bf16.mxu0 0
    %2456 = vmatpush1.bf16.msra.mxu0 %v2434
    %2457 = vmatprep.subr.bf16.mxu0 0
    %2458 = vmatpush1.bf16.msra.mxu0 %v2435
    %2459 = vmatprep.subr.bf16.mxu0 0
    %2460 = vmatpush1.bf16.msra.mxu0 %v2436
    %2461 = vmatprep.subr.bf16.mxu0 0
    %2462 = vmatpush1.bf16.msra.mxu0 0
    %2463 = vmatprep.subr.bf16.mxu0 0
    %2464 = vmatpush1.bf16.msra.mxu0 0
    %2465 = vmatprep.subr.bf16.mxu0 0
    %2466 = vmatpush1.bf16.msra.mxu0 0
    %2467 = vmatprep.subr.bf16.mxu0 0
    %2468 = vmatpush1.bf16.msra.mxu0 0
    %2469 = vmatprep.subr.bf16.mxu0 0
    %2470 = vmatpush1.bf16.msra.mxu0 0
    %2471 = vmatprep.subr.bf16.mxu0 0
    %2472 = vmatpush1.bf16.msra.mxu0 0
    %2473 = vmatprep.subr.bf16.mxu0 0
    %2474 = vmatpush1.bf16.msra.mxu0 0
    %2475 = vmatprep.subr.bf16.mxu0 0
    %2476 = vmatpush1.bf16.msra.mxu0 0
    %2477 = vmatprep.mubr.bf16.mxu0 0
    %2478 = vmatmul.mubr.bf16.gmra.mrb[0].mxu0 %v2373
    %v2479 = vpop.f32.mrb[0].mxu0
    %v2480 = vadd.f32 %v2395, %v2479
    %v2481 = vpop.f32.mrb[0].mxu0
    %v2482 = vpop.f32.mrb[0].mxu0
    %v2483 = vpop.f32.mrb[0].mxu0
    %2484 = vdwg.mxu0
    %2485 = vst [vmem:[#allocation16] sm:$0xff] %v2480
    // Predicated region
    $region98: #{tpu_custom_call.1} parent=1 // pred_check
      _
    $region99: #{tpu_custom_call.1} parent=1 // pred_check_branch
      %2487 = sbr.rel (0) target = $region101
    $region100: #{tpu_custom_call.1} parent=1 // pred_region
      %s2489 = ssub.s32 128, 128
      %2490 = vsyncadd [#allocation4], %s2489
      %s2492 = sshll.u32 [#allocation16], 4
      %s2493 = int_to_ptr.vmem [resolvable:$true] %s2492
      %2495 = dma.vmem_to_hbm [thread:$0]  %s2493, 128, %s16, [#allocation4]
    $region101: #{tpu_custom_call.1} parent=1 // pred_fallthru
      _
    // Predicated region
    $region102: #{tpu_custom_call.1} parent=1 // pred_check
      _
    $region103: #{tpu_custom_call.1} parent=1 // pred_check_branch
      %2497 = sbr.rel (0) target = $region105
    $region104: #{tpu_custom_call.1} parent=1 // pred_region
      %2498 = dma.done [#allocation4], 128
    $region105: #{tpu_custom_call.1} parent=1 // pred_fallthru
      _
    %2499 = vsyncpa [#allocation3], 1
    %2500 = vsyncpa [#allocation6], 1
    %2501 = vsyncpa [#allocation9], 1
    %2502 = vsyncpa [#allocation12], 1
    %2503 = vsyncpa [#allocation15], 1
    %2504 = vsyncpa [#allocation4], 1

// kernel: tpu_custom_call.1
$region0: #{tpu_custom_call.1}
  #allocation0 [shape = 'u32[]', space=smem, size = 0x4, offset = 0x4, fixed_abs, tag = 'smem constant byte address 0x4 - core index']
  #allocation1 [shape = 'u32[144,128]{1,0:T(1,128)}', space=vmem, size = 0x12000, scoped, tag = 'internal scratch']
  %s0 = inlined_call_operand.hbm [shape: bf16[8,128], index: 0, kind: input, shape index: {}]
  %s1 = inlined_call_operand.hbm [shape: bf16[8,16,128], index: 1, kind: input, shape index: {}]
  %s2 = inlined_call_operand.hbm [shape: bf16[128,128], index: 2, kind: input, shape index: {}]
  %s3 = inlined_call_operand.vmem [shape: f32[1,128], index: 3, kind: input, shape index: {}]
  %s4 = inlined_call_operand.hbm [shape: bf16[128,256], index: 4, kind: input, shape index: {}]
  %s5 = inlined_call_operand.vmem [shape: f32[1,256], index: 5, kind: input, shape index: {}]
  %s6 = inlined_call_operand.hbm [shape: bf16[128,256], index: 6, kind: input, shape index: {}]
  %s7 = inlined_call_operand.vmem [shape: f32[1,128], index: 7, kind: input, shape index: {}]
  %s8 = inlined_call_operand.vmem [shape: f32[1,128], index: 8, kind: input, shape index: {}]
  %s9 = inlined_call_operand.hbm [shape: bf16[128,128], index: 9, kind: input, shape index: {}]
  %s10 = inlined_call_operand.vmem [shape: f32[1,128], index: 10, kind: input, shape index: {}]
  %s11 = inlined_call_operand.vmem [shape: f32[1,128], index: 11, kind: input, shape index: {}]
  %s12 = inlined_call_operand.hbm [shape: bf16[128,128], index: 12, kind: input, shape index: {}]
  %s13 = inlined_call_operand.vmem [shape: f32[1,128], index: 13, kind: input, shape index: {}]
  %s14 = inlined_call_operand.hbm [shape: bf16[128,128], index: 14, kind: input, shape index: {}]
  %s15 = inlined_call_operand.vmem [shape: f32[1,128], index: 15, kind: input, shape index: {}]
  %s16 = inlined_call_operand.hbm [shape: f32[8,128], index: 16, kind: output, shape index: {}]
  %s17 = sld [smem:[#allocation0]]
  $region106: #{tpu_custom_call.1} parent=0
    _
  %s19 = ssub.s32 1, %s17
  %s20 = scalar_select 0, %s19, %s17
  $region1: #{tpu_custom_call.1} parent=0
    #allocation2 [shape = 'u8[2048]{0}', space=vmem, size = 0x800, scoped, tag = 'input window, operand 0, single buffered']
    #allocation3 [shape = 's32[1]{0}', space=sflag, size = 0x4, scoped, tag = 'scoped memory for tpu_custom_call.1']
    #allocation4 [shape = 's32[1]{0}', space=sflag, size = 0x4, scoped, tag = 'scoped memory for tpu_custom_call.1']
    #allocation5 [shape = 'u8[32768]{0}', space=vmem, size = 0x8000, scoped, tag = 'input window, operand 1, single buffered']
    #allocation6 [shape = 's32[1]{0}', space=sflag, size = 0x4, scoped, tag = 'scoped memory for tpu_custom_call.1']
    #allocation7 [shape = 'u8[32768]{0}', space=vmem, size = 0x8000, scoped, tag = 'input window, operand 2, single buffered']
    #allocation8 [shape = 'u8[65536]{0}', space=vmem, size = 0x10000, scoped, tag = 'input window, operand 4, single buffered']
    #allocation9 [shape = 's32[1]{0}', space=sflag, size = 0x4, scoped, tag = 'scoped memory for tpu_custom_call.1']
    #allocation10 [shape = 'u8[65536]{0}', space=vmem, size = 0x10000, scoped, tag = 'input window, operand 6, single buffered']
    #allocation11 [shape = 'u8[32768]{0}', space=vmem, size = 0x8000, scoped, tag = 'input window, operand 9, single buffered']
    #allocation12 [shape = 's32[1]{0}', space=sflag, size = 0x4, scoped, tag = 'scoped memory for tpu_custom_call.1']
    #allocation13 [shape = 'u8[32768]{0}', space=vmem, size = 0x8000, scoped, tag = 'input window, operand 12, single buffered']
    #allocation14 [shape = 'u8[32768]{0}', space=vmem, size = 0x8000, scoped, tag = 'input window, operand 14, single buffered']
    #allocation15 [shape = 's32[1]{0}', space=sflag, size = 0x4, scoped, tag = 'scoped memory for tpu_custom_call.1']
    #allocation16 [shape = 'u8[4096]{0}', space=vmem, size = 0x1000, scoped, tag = 'output window, operand 0, single buffered']
    %21 = vsyncpa [#allocation3], 0
    %22 = vsyncpa [#allocation6], 0
    %23 = vsyncpa [#allocation9], 0
    %24 = vsyncpa [#allocation12], 0
    %25 = vsyncpa [#allocation15], 0
    %26 = vsyncpa [#allocation4], 0
    // Predicated region
    $region2: #{tpu_custom_call.1} parent=1 // pred_check
      _
    $region3: #{tpu_custom_call.1} parent=1 // pred_check_branch
      %28 = sbr.rel (0) target = $region5
    $region4: #{tpu_custom_call.1} parent=1 // pred_region
      %s30 = ssub.s32 64, 64
      %31 = vsyncadd [#allocation3], %s30
      %s33 = sshll.u32 [#allocation2], 4
      %s34 = int_to_ptr.vmem [resolvable:$true] %s33
      %36 = dma.hbm_to_vmem [thread:$0]  %s0, 64, %s34, [#allocation3]
    $region5: #{tpu_custom_call.1} parent=1 // pred_fallthru
      _
    // Predicated region
    $region6: #{tpu_custom_call.1} parent=1 // pred_check
      _
    $region7: #{tpu_custom_call.1} parent=1 // pred_check_branch
      %38 = sbr.rel (0) target = $region9
    $region8: #{tpu_custom_call.1} parent=1 // pred_region
      %s40 = ssub.s32 1024, 1024
      %41 = vsyncadd [#allocation6], %s40
      %s42 = sshll.u32 [#allocation5], 4
      %s43 = int_to_ptr.vmem [resolvable:$true] %s42
      %48 = dma.hbm_to_vmem [thread:$0]  %s1, 1024, %s43, [#allocation6], 64, 64, 4
    $region9: #{tpu_custom_call.1} parent=1 // pred_fallthru
      _
    // Predicated region
    $region10: #{tpu_custom_call.1} parent=1 // pred_check
      _
    $region11: #{tpu_custom_call.1} parent=1 // pred_check_branch
      %50 = sbr.rel (0) target = $region13
    $region12: #{tpu_custom_call.1} parent=1 // pred_region
      %s52 = ssub.s32 1024, 1024
      %53 = vsyncadd [#allocation6], %s52
      %s54 = sshll.u32 [#allocation7], 4
      %s55 = int_to_ptr.vmem [resolvable:$true] %s54
      %60 = dma.hbm_to_vmem [thread:$0]  %s2, 1024, %s55, [#allocation6], 64, 64, 4
    $region13: #{tpu_custom_call.1} parent=1 // pred_fallthru
      _
    // Predicated region
    $region14: #{tpu_custom_call.1} parent=1 // pred_check
      _
    $region15: #{tpu_custom_call.1} parent=1 // pred_check_branch
      %62 = sbr.rel (0) target = $region17
    $region16: #{tpu_custom_call.1} parent=1 // pred_region
      _
    $region17: #{tpu_custom_call.1} parent=1 // pred_fallthru
      _
    // Predicated region
    $region18: #{tpu_custom_call.1} parent=1 // pred_check
      _
    $region19: #{tpu_custom_call.1} parent=1 // pred_check_branch
      %64 = sbr.rel (0) target = $region21
    $region20: #{tpu_custom_call.1} parent=1 // pred_region
      %s66 = ssub.s32 2048, 2048
      %67 = vsyncadd [#allocation9], %s66
      %s68 = sshll.u32 [#allocation8], 4
      %s69 = int_to_ptr.vmem [resolvable:$true] %s68
      %74 = dma.hbm_to_vmem [thread:$0]  %s4, 2048, %s69, [#allocation9], 128, 128, 8
    $region21: #{tpu_custom_call.1} parent=1 // pred_fallthru
      _
    // Predicated region
    $region22: #{tpu_custom_call.1} parent=1 // pred_check
      _
    $region23: #{tpu_custom_call.1} parent=1 // pred_check_branch
      %76 = sbr.rel (0) target = $region25
    $region24: #{tpu_custom_call.1} parent=1 // pred_region
      _
    $region25: #{tpu_custom_call.1} parent=1 // pred_fallthru
      _
    // Predicated region
    $region26: #{tpu_custom_call.1} parent=1 // pred_check
      _
    $region27: #{tpu_custom_call.1} parent=1 // pred_check_branch
      %78 = sbr.rel (0) target = $region29
    $region28: #{tpu_custom_call.1} parent=1 // pred_region
      %s80 = ssub.s32 2048, 2048
      %81 = vsyncadd [#allocation9], %s80
      %s82 = sshll.u32 [#allocation10], 4
      %s83 = int_to_ptr.vmem [resolvable:$true] %s82
      %88 = dma.hbm_to_vmem [thread:$0]  %s6, 2048, %s83, [#allocation9], 128, 128, 8
    $region29: #{tpu_custom_call.1} parent=1 // pred_fallthru
      _
    // Predicated region
    $region30: #{tpu_custom_call.1} parent=1 // pred_check
      _
    $region31: #{tpu_custom_call.1} parent=1 // pred_check_branch
      %90 = sbr.rel (0) target = $region33
    $region32: #{tpu_custom_call.1} parent=1 // pred_region
      _
    $region33: #{tpu_custom_call.1} parent=1 // pred_fallthru
      _
    // Predicated region
    $region34: #{tpu_custom_call.1} parent=1 // pred_check
      _
    $region35: #{tpu_custom_call.1} parent=1 // pred_check_branch
      %92 = sbr.rel (0) target = $region37
    $region36: #{tpu_custom_call.1} parent=1 // pred_region
      _
    $region37: #{tpu_custom_call.1} parent=1 // pred_fallthru
      _
    // Predicated region
    $region38: #{tpu_custom_call.1} parent=1 // pred_check
      _
    $region39: #{tpu_custom_call.1} parent=1 // pred_check_branch
      %94 = sbr.rel (0) target = $region41
    $region40: #{tpu_custom_call.1} parent=1 // pred_region
      %s96 = ssub.s32 1024, 1024
      %97 = vsyncadd [#allocation12], %s96
      %s98 = sshll.u32 [#allocation11], 4
      %s99 = int_to_ptr.vmem [resolvable:$true] %s98
      %104 = dma.hbm_to_vmem [thread:$0]  %s9, 1024, %s99, [#allocation12], 64, 64, 4
    $region41: #{tpu_custom_call.1} parent=1 // pred_fallthru
      _
    // Predicated region
    $region42: #{tpu_custom_call.1} parent=1 // pred_check
      _
    $region43: #{tpu_custom_call.1} parent=1 // pred_check_branch
      %106 = sbr.rel (0) target = $region45
    $region44: #{tpu_custom_call.1} parent=1 // pred_region
      _
    $region45: #{tpu_custom_call.1} parent=1 // pred_fallthru
      _
    // Predicated region
    $region46: #{tpu_custom_call.1} parent=1 // pred_check
      _
    $region47: #{tpu_custom_call.1} parent=1 // pred_check_branch
      %108 = sbr.rel (0) target = $region49
    $region48: #{tpu_custom_call.1} parent=1 // pred_region
      _
    $region49: #{tpu_custom_call.1} parent=1 // pred_fallthru
      _
    // Predicated region
    $region50: #{tpu_custom_call.1} parent=1 // pred_check
      _
    $region51: #{tpu_custom_call.1} parent=1 // pred_check_branch
      %110 = sbr.rel (0) target = $region53
    $region52: #{tpu_custom_call.1} parent=1 // pred_region
      %s112 = ssub.s32 1024, 1024
      %113 = vsyncadd [#allocation12], %s112
      %s114 = sshll.u32 [#allocation13], 4
      %s115 = int_to_ptr.vmem [resolvable:$true] %s114
      %120 = dma.hbm_to_vmem [thread:$0]  %s12, 1024, %s115, [#allocation12], 64, 64, 4
    $region53: #{tpu_custom_call.1} parent=1 // pred_fallthru
      _
    // Predicated region
    $region54: #{tpu_custom_call.1} parent=1 // pred_check
      _
    $region55: #{tpu_custom_call.1} parent=1 // pred_check_branch
      %122 = sbr.rel (0) target = $region57
    $region56: #{tpu_custom_call.1} parent=1 // pred_region
      _
    $region57: #{tpu_custom_call.1} parent=1 // pred_fallthru
      _
    // Predicated region
    $region58: #{tpu_custom_call.1} parent=1 // pred_check
      _
    $region59: #{tpu_custom_call.1} parent=1 // pred_check_branch
      %124 = sbr.rel (0) target = $region61
    $region60: #{tpu_custom_call.1} parent=1 // pred_region
      %s126 = ssub.s32 1024, 1024
      %127 = vsyncadd [#allocation15], %s126
      %s128 = sshll.u32 [#allocation14], 4
      %s129 = int_to_ptr.vmem [resolvable:$true] %s128
      %134 = dma.hbm_to_vmem [thread:$0]  %s14, 1024, %s129, [#allocation15], 64, 64, 4
    $region61: #{tpu_custom_call.1} parent=1 // pred_fallthru
      _
    // Predicated region
    $region62: #{tpu_custom_call.1} parent=1 // pred_check
      _
    $region63: #{tpu_custom_call.1} parent=1 // pred_check_branch
      %136 = sbr.rel (0) target = $region65
    $region64: #{tpu_custom_call.1} parent=1 // pred_region
      _
    $region65: #{tpu_custom_call.1} parent=1 // pred_fallthru
      _
    // Predicated region
    $region66: #{tpu_custom_call.1} parent=1 // pred_check
      _
    $region67: #{tpu_custom_call.1} parent=1 // pred_check_branch
      %138 = sbr.rel (0) target = $region69
    $region68: #{tpu_custom_call.1} parent=1 // pred_region
      %139 = dma.done [#allocation3], 64
    $region69: #{tpu_custom_call.1} parent=1 // pred_fallthru
      _
    // Predicated region
    $region70: #{tpu_custom_call.1} parent=1 // pred_check
      _
    $region71: #{tpu_custom_call.1} parent=1 // pred_check_branch
      %141 = sbr.rel (0) target = $region73
    $region72: #{tpu_custom_call.1} parent=1 // pred_region
      %142 = dma.done [#allocation6], 1024
    $region73: #{tpu_custom_call.1} parent=1 // pred_fallthru
      _
    // Predicated region
    $region74: #{tpu_custom_call.1} parent=1 // pred_check
      _
    $region75: #{tpu_custom_call.1} parent=1 // pred_check_branch
      %144 = sbr.rel (0) target = $region77
    $region76: #{tpu_custom_call.1} parent=1 // pred_region
      %145 = dma.done [#allocation6], 1024
    $region77: #{tpu_custom_call.1} parent=1 // pred_fallthru
      _
    // Predicated region
    $region78: #{tpu_custom_call.1} parent=1 // pred_check
      _
    $region79: #{tpu_custom_call.1} parent=1 // pred_check_branch
      %147 = sbr.rel (0) target = $region81
    $region80: #{tpu_custom_call.1} parent=1 // pred_region
      %148 = dma.done [#allocation9], 2048
    $region81: #{tpu_custom_call.1} parent=1 // pred_fallthru
      _
    // Predicated region
    $region82: #{tpu_custom_call.1} parent=1 // pred_check
      _
    $region83: #{tpu_custom_call.1} parent=1 // pred_check_branch
      %150 = sbr.rel (0) target = $region85
    $region84: #{tpu_custom_call.1} parent=1 // pred_region
      %151 = dma.done [#allocation9], 2048
    $region85: #{tpu_custom_call.1} parent=1 // pred_fallthru
      _
    // Predicated region
    $region86: #{tpu_custom_call.1} parent=1 // pred_check
      _
    $region87: #{tpu_custom_call.1} parent=1 // pred_check_branch
      %153 = sbr.rel (0) target = $region89
    $region88: #{tpu_custom_call.1} parent=1 // pred_region
      %154 = dma.done [#allocation12], 1024
    $region89: #{tpu_custom_call.1} parent=1 // pred_fallthru
      _
    // Predicated region
    $region90: #{tpu_custom_call.1} parent=1 // pred_check
      _
    $region91: #{tpu_custom_call.1} parent=1 // pred_check_branch
      %156 = sbr.rel (0) target = $region93
    $region92: #{tpu_custom_call.1} parent=1 // pred_region
      %157 = dma.done [#allocation12], 1024
    $region93: #{tpu_custom_call.1} parent=1 // pred_fallthru
      _
    // Predicated region
    $region94: #{tpu_custom_call.1} parent=1 // pred_check
      _
    $region95: #{tpu_custom_call.1} parent=1 // pred_check_branch
      %159 = sbr.rel (0) target = $region97
    $region96: #{tpu_custom_call.1} parent=1 // pred_region
      %160 = dma.done [#allocation15], 1024
    $region97: #{tpu_custom_call.1} parent=1 // pred_fallthru
      _
    %v162 = vld [vmem:[#allocation2] sm:$0xf]
    %v163 = vld [vmem:[#allocation5] sm:$0xf]
    %v164 = vld [vmem:[#allocation5 + $0x4] sm:$0xf]
    %v165 = vld [vmem:[#allocation5 + $0x8] sm:$0xf]
    %v166 = vld [vmem:[#allocation5 + $0xc] sm:$0xf]
    %v167 = vld [vmem:[#allocation5 + $0x10] sm:$0xf]
    %v168 = vld [vmem:[#allocation5 + $0x14] sm:$0xf]
    %v169 = vld [vmem:[#allocation5 + $0x18] sm:$0xf]
    %v170 = vld [vmem:[#allocation5 + $0x1c] sm:$0xf]
    %v171 = vld [vmem:[#allocation5 + $0x20] sm:$0xf]
    %v172 = vld [vmem:[#allocation5 + $0x24] sm:$0xf]
    %v173 = vld [vmem:[#allocation5 + $0x28] sm:$0xf]
    %v174 = vld [vmem:[#allocation5 + $0x2c] sm:$0xf]
    %v175 = vld [vmem:[#allocation5 + $0x30] sm:$0xf]
    %v176 = vld [vmem:[#allocation5 + $0x34] sm:$0xf]
    %v177 = vld [vmem:[#allocation5 + $0x38] sm:$0xf]
    %v178 = vld [vmem:[#allocation5 + $0x3c] sm:$0xf]
    %v179 = vld [vmem:[#allocation7] sm:$0xf]
    %v180 = vld [vmem:[#allocation7 + $0x4] sm:$0xf]
    %v181 = vld [vmem:[#allocation7 + $0x8] sm:$0xf]
    %v182 = vld [vmem:[#allocation7 + $0xc] sm:$0xf]
    %v183 = vld [vmem:[#allocation7 + $0x10] sm:$0xf]
    %v184 = vld [vmem:[#allocation7 + $0x14] sm:$0xf]
    %v185 = vld [vmem:[#allocation7 + $0x18] sm:$0xf]
    %v186 = vld [vmem:[#allocation7 + $0x1c] sm:$0xf]
    %v187 = vld [vmem:[#allocation7 + $0x20] sm:$0xf]
    %v188 = vld [vmem:[#allocation7 + $0x24] sm:$0xf]
    %v189 = vld [vmem:[#allocation7 + $0x28] sm:$0xf]
    %v190 = vld [vmem:[#allocation7 + $0x2c] sm:$0xf]
    %v191 = vld [vmem:[#allocation7 + $0x30] sm:$0xf]
    %v192 = vld [vmem:[#allocation7 + $0x34] sm:$0xf]
    %v193 = vld [vmem:[#allocation7 + $0x38] sm:$0xf]
    %v194 = vld [vmem:[#allocation7 + $0x3c] sm:$0xf]
    %v195 = vld [vmem:[%s3] sm:$0x1]
    %v197 = vlaneseq
    %v198 = vshrl.u32 %v197, 7
    %v199 = vsub.s32 0, %v198
    %v200 = vrot.slane %v195, %v199
    %v218 = vunpack.c.l.b16 %v179
    %v219 = vunpack.c.l.b16 %v180
    %v220 = vunpack.c.l.b16 %v181
    %v221 = vunpack.c.l.b16 %v182
    %v222 = vunpack.c.l.b16 %v183
    %v223 = vunpack.c.l.b16 %v184
    %v224 = vunpack.c.l.b16 %v185
    %v225 = vunpack.c.l.b16 %v186
    %v226 = vunpack.c.l.b16 %v187
    %v227 = vunpack.c.l.b16 %v188
    %v228 = vunpack.c.l.b16 %v189
    %v229 = vunpack.c.l.b16 %v190
    %v230 = vunpack.c.l.b16 %v191
    %v231 = vunpack.c.l.b16 %v192
    %v232 = vunpack.c.l.b16 %v193
    %v233 = vunpack.c.l.b16 %v194
    %v234 = vpack.c.b16 %v219, %v218
    %v235 = vpack.c.b16 %v221, %v220
    %v236 = vpack.c.b16 %v223, %v222
    %v237 = vpack.c.b16 %v225, %v224
    %v238 = vpack.c.b16 %v227, %v226
    %v239 = vpack.c.b16 %v229, %v228
    %v240 = vpack.c.b16 %v231, %v230
    %v241 = vpack.c.b16 %v233, %v232
    %250 = vmatprep.subr.bf16.mxu0 0
    %251 = vmatpush1.bf16.msra.mxu0 %v234
    %252 = vmatprep.subr.bf16.mxu0 0
    %253 = vmatpush1.bf16.msra.mxu0 %v235
    %254 = vmatprep.subr.bf16.mxu0 0
    %255 = vmatpush1.bf16.msra.mxu0 %v236
    %256 = vmatprep.subr.bf16.mxu0 0
    %257 = vmatpush1.bf16.msra.mxu0 %v237
    %258 = vmatprep.subr.bf16.mxu0 0
    %259 = vmatpush1.bf16.msra.mxu0 %v238
    %260 = vmatprep.subr.bf16.mxu0 0
    %261 = vmatpush1.bf16.msra.mxu0 %v239
    %262 = vmatprep.subr.bf16.mxu0 0
    %263 = vmatpush1.bf16.msra.mxu0 %v240
    %264 = vmatprep.subr.bf16.mxu0 0
    %265 = vmatpush1.bf16.msra.mxu0 %v241
    %266 = vmatprep.subr.bf16.mxu0 0
    %267 = vmatpush1.bf16.msra.mxu0 0
    %268 = vmatprep.subr.bf16.mxu0 0
    %269 = vmatpush1.bf16.msra.mxu0 0
    %270 = vmatprep.subr.bf16.mxu0 0
    %271 = vmatpush1.bf16.msra.mxu0 0
    %272 = vmatprep.subr.bf16.mxu0 0
    %273 = vmatpush1.bf16.msra.mxu0 0
    %274 = vmatprep.subr.bf16.mxu0 0
    %275 = vmatpush1.bf16.msra.mxu0 0
    %276 = vmatprep.subr.bf16.mxu0 0
    %277 = vmatpush1.bf16.msra.mxu0 0
    %278 = vmatprep.subr.bf16.mxu0 0
    %279 = vmatpush1.bf16.msra.mxu0 0
    %280 = vmatprep.subr.bf16.mxu0 0
    %281 = vmatpush1.bf16.msra.mxu0 0
    %282 = vmatprep.mubr.bf16.mxu0 0
    %283 = vmatmul.mubr.bf16.gmra.mrb[0].mxu0 %v162
    %v284 = vpop.f32.mrb[0].mxu0
    %v285 = vadd.f32 %v200, %v284
    %v286 = vpop.f32.mrb[0].mxu0
    %v287 = vpop.f32.mrb[0].mxu0
    %v288 = vpop.f32.mrb[0].mxu0
    %289 = vdwg.mxu0
    %v290 = vtanh.pop %v285
    %v291 = vpack.c.bf16 %v290, %v290
    %v292 = vld [vmem:[#allocation8] sm:$0xff]
    %v293 = vld [vmem:[#allocation8 + $0x8] sm:$0xff]
    %v294 = vld [vmem:[#allocation8 + $0x10] sm:$0xff]
    %v295 = vld [vmem:[#allocation8 + $0x18] sm:$0xff]
    %v296 = vld [vmem:[#allocation8 + $0x20] sm:$0xff]
    %v297 = vld [vmem:[#allocation8 + $0x28] sm:$0xff]
    %v298 = vld [vmem:[#allocation8 + $0x30] sm:$0xff]
    %v299 = vld [vmem:[#allocation8 + $0x38] sm:$0xff]
    %v300 = vld [vmem:[#allocation8 + $0x40] sm:$0xff]
    %v301 = vld [vmem:[#allocation8 + $0x48] sm:$0xff]
    %v302 = vld [vmem:[#allocation8 + $0x50] sm:$0xff]
    %v303 = vld [vmem:[#allocation8 + $0x58] sm:$0xff]
    %v304 = vld [vmem:[#allocation8 + $0x60] sm:$0xff]
    %v305 = vld [vmem:[#allocation8 + $0x68] sm:$0xff]
    %v306 = vld [vmem:[#allocation8 + $0x70] sm:$0xff]
    %v307 = vld [vmem:[#allocation8 + $0x78] sm:$0xff]
    %v308 = vld [vmem:[%s5] sm:$0x3]
    %v310 = vlaneseq
    %v311 = vshrl.u32 %v310, 7
    %v312 = vsub.s32 0, %v311
    %v313 = vrot.slane %v308, %v312
    %v314 = vlaneseq
    %v315 = vshrl.u32 %v314, 7
    %v316 = vsub.s32 1, %v315
    %v317 = vrot.slane %v308, %v316
    %v336 = vunpack.c.l.b16 %v163
    %v337 = vunpack.c.l.b16 %v164
    %v338 = vunpack.c.l.b16 %v165
    %v339 = vunpack.c.l.b16 %v166
    %v340 = vunpack.c.l.b16 %v167
    %v341 = vunpack.c.l.b16 %v168
    %v342 = vunpack.c.l.b16 %v169
    %v343 = vunpack.c.l.b16 %v170
    %v344 = vunpack.c.l.b16 %v171
    %v345 = vunpack.c.l.b16 %v172
    %v346 = vunpack.c.l.b16 %v173
    %v347 = vunpack.c.l.b16 %v174
    %v348 = vunpack.c.l.b16 %v175
    %v349 = vunpack.c.l.b16 %v176
    %v350 = vunpack.c.l.b16 %v177
    %v351 = vunpack.c.l.b16 %v178
    %v352 = vpack.c.b16 %v337, %v336
    %v353 = vpack.c.b16 %v339, %v338
    %v354 = vpack.c.b16 %v341, %v340
    %v355 = vpack.c.b16 %v343, %v342
    %v356 = vpack.c.b16 %v345, %v344
    %v357 = vpack.c.b16 %v347, %v346
    %v358 = vpack.c.b16 %v349, %v348
    %v359 = vpack.c.b16 %v351, %v350
    %v384 = vunpack.c.l.b16 %v292
    %v385 = vunpack.c.h.b16 %v292
    %v386 = vunpack.c.l.b16 %v293
    %v387 = vunpack.c.h.b16 %v293
    %v388 = vunpack.c.l.b16 %v294
    %v389 = vunpack.c.h.b16 %v294
    %v390 = vunpack.c.l.b16 %v295
    %v391 = vunpack.c.h.b16 %v295
    %v392 = vunpack.c.l.b16 %v296
    %v393 = vunpack.c.h.b16 %v296
    %v394 = vunpack.c.l.b16 %v297
    %v395 = vunpack.c.h.b16 %v297
    %v396 = vunpack.c.l.b16 %v298
    %v397 = vunpack.c.h.b16 %v298
    %v398 = vunpack.c.l.b16 %v299
    %v399 = vunpack.c.h.b16 %v299
    %v400 = vunpack.c.l.b16 %v300
    %v401 = vunpack.c.h.b16 %v300
    %v402 = vunpack.c.l.b16 %v301
    %v403 = vunpack.c.h.b16 %v301
    %v404 = vunpack.c.l.b16 %v302
    %v405 = vunpack.c.h.b16 %v302
    %v406 = vunpack.c.l.b16 %v303
    %v407 = vunpack.c.h.b16 %v303
    %v408 = vunpack.c.l.b16 %v304
    %v409 = vunpack.c.h.b16 %v304
    %v410 = vunpack.c.l.b16 %v305
    %v411 = vunpack.c.h.b16 %v305
    %v412 = vunpack.c.l.b16 %v306
    %v413 = vunpack.c.h.b16 %v306
    %v414 = vunpack.c.l.b16 %v307
    %v415 = vunpack.c.h.b16 %v307
    %v416 = vpack.c.b16 %v386, %v384
    %v417 = vpack.c.b16 %v387, %v385
    %v418 = vpack.c.b16 %v390, %v388
    %v419 = vpack.c.b16 %v391, %v389
    %v420 = vpack.c.b16 %v394, %v392
    %v421 = vpack.c.b16 %v395, %v393
    %v422 = vpack.c.b16 %v398, %v396
    %v423 = vpack.c.b16 %v399, %v397
    %v424 = vpack.c.b16 %v402, %v400
    %v425 = vpack.c.b16 %v403, %v401
    %v426 = vpack.c.b16 %v406, %v404
    %v427 = vpack.c.b16 %v407, %v405
    %v428 = vpack.c.b16 %v410, %v408
    %v429 = vpack.c.b16 %v411, %v409
    %v430 = vpack.c.b16 %v414, %v412
    %v431 = vpack.c.b16 %v415, %v413
    %448 = vmatprep.subr.bf16.mxu0 %v417
    %449 = vmatpush1.bf16.msra.mxu0 %v416
    %450 = vmatprep.subr.bf16.mxu0 %v419
    %451 = vmatpush1.bf16.msra.mxu0 %v418
    %452 = vmatprep.subr.bf16.mxu0 %v421
    %453 = vmatpush1.bf16.msra.mxu0 %v420
    %454 = vmatprep.subr.bf16.mxu0 %v423
    %455 = vmatpush1.bf16.msra.mxu0 %v422
    %456 = vmatprep.subr.bf16.mxu0 %v425
    %457 = vmatpush1.bf16.msra.mxu0 %v424
    %458 = vmatprep.subr.bf16.mxu0 %v427
    %459 = vmatpush1.bf16.msra.mxu0 %v426
    %460 = vmatprep.subr.bf16.mxu0 %v429
    %461 = vmatpush1.bf16.msra.mxu0 %v428
    %462 = vmatprep.subr.bf16.mxu0 %v431
    %463 = vmatpush1.bf16.msra.mxu0 %v430
    %464 = vmatprep.subr.bf16.mxu0 0
    %465 = vmatpush1.bf16.msra.mxu0 0
    %466 = vmatprep.subr.bf16.mxu0 0
    %467 = vmatpush1.bf16.msra.mxu0 0
    %468 = vmatprep.subr.bf16.mxu0 0
    %469 = vmatpush1.bf16.msra.mxu0 0
    %470 = vmatprep.subr.bf16.mxu0 0
    %471 = vmatpush1.bf16.msra.mxu0 0
    %472 = vmatprep.subr.bf16.mxu0 0
    %473 = vmatpush1.bf16.msra.mxu0 0
    %474 = vmatprep.subr.bf16.mxu0 0
    %475 = vmatpush1.bf16.msra.mxu0 0
    %476 = vmatprep.subr.bf16.mxu0 0
    %477 = vmatpush1.bf16.msra.mxu0 0
    %478 = vmatprep.subr.bf16.mxu0 0
    %479 = vmatpush1.bf16.msra.mxu0 0
    %480 = vmatprep.mubr.bf16.mxu0 0
    %481 = vmatmul.mubr.bf16.gmra.mrb[0].mxu0 %v352
    %v482 = vpop.f32.mrb[0].mxu0
    %v483 = vadd.f32 %v313, %v482
    %v484 = vpop.f32.mrb[0].mxu0
    %v485 = vadd.f32 %v317, %v484
    %v486 = vpop.f32.mrb[0].mxu0
    %v487 = vadd.f32 %v313, %v486
    %v488 = vpop.f32.mrb[0].mxu0
    %v489 = vadd.f32 %v317, %v488
    %490 = vmatprep.mubr.bf16.mxu0 0
    %491 = vmatmul.mubr.bf16.gmra.mrb[0].mxu0 %v353
    %v492 = vpop.f32.mrb[0].mxu0
    %v493 = vadd.f32 %v313, %v492
    %v494 = vpop.f32.mrb[0].mxu0
    %v495 = vadd.f32 %v317, %v494
    %v496 = vpop.f32.mrb[0].mxu0
    %v497 = vadd.f32 %v313, %v496
    %v498 = vpop.f32.mrb[0].mxu0
    %v499 = vadd.f32 %v317, %v498
    %500 = vmatprep.mubr.bf16.mxu0 0
    %501 = vmatmul.mubr.bf16.gmra.mrb[0].mxu0 %v354
    %v502 = vpop.f32.mrb[0].mxu0
    %v503 = vadd.f32 %v313, %v502
    %v504 = vpop.f32.mrb[0].mxu0
    %v505 = vadd.f32 %v317, %v504
    %v506 = vpop.f32.mrb[0].mxu0
    %v507 = vadd.f32 %v313, %v506
    %v508 = vpop.f32.mrb[0].mxu0
    %v509 = vadd.f32 %v317, %v508
    %510 = vmatprep.mubr.bf16.mxu0 0
    %511 = vmatmul.mubr.bf16.gmra.mrb[0].mxu0 %v355
    %v512 = vpop.f32.mrb[0].mxu0
    %v513 = vadd.f32 %v313, %v512
    %v514 = vpop.f32.mrb[0].mxu0
    %v515 = vadd.f32 %v317, %v514
    %v516 = vpop.f32.mrb[0].mxu0
    %v517 = vadd.f32 %v313, %v516
    %v518 = vpop.f32.mrb[0].mxu0
    %v519 = vadd.f32 %v317, %v518
    %520 = vmatprep.mubr.bf16.mxu0 0
    %521 = vmatmul.mubr.bf16.gmra.mrb[0].mxu0 %v356
    %v522 = vpop.f32.mrb[0].mxu0
    %v523 = vadd.f32 %v313, %v522
    %v524 = vpop.f32.mrb[0].mxu0
    %v525 = vadd.f32 %v317, %v524
    %v526 = vpop.f32.mrb[0].mxu0
    %v527 = vadd.f32 %v313, %v526
    %v528 = vpop.f32.mrb[0].mxu0
    %v529 = vadd.f32 %v317, %v528
    %530 = vmatprep.mubr.bf16.mxu0 0
    %531 = vmatmul.mubr.bf16.gmra.mrb[0].mxu0 %v357
    %v532 = vpop.f32.mrb[0].mxu0
    %v533 = vadd.f32 %v313, %v532
    %v534 = vpop.f32.mrb[0].mxu0
    %v535 = vadd.f32 %v317, %v534
    %v536 = vpop.f32.mrb[0].mxu0
    %v537 = vadd.f32 %v313, %v536
    %v538 = vpop.f32.mrb[0].mxu0
    %v539 = vadd.f32 %v317, %v538
    %540 = vmatprep.mubr.bf16.mxu0 0
    %541 = vmatmul.mubr.bf16.gmra.mrb[0].mxu0 %v358
    %v542 = vpop.f32.mrb[0].mxu0
    %v543 = vadd.f32 %v313, %v542
    %v544 = vpop.f32.mrb[0].mxu0
    %v545 = vadd.f32 %v317, %v544
    %v546 = vpop.f32.mrb[0].mxu0
    %v547 = vadd.f32 %v313, %v546
    %v548 = vpop.f32.mrb[0].mxu0
    %v549 = vadd.f32 %v317, %v548
    %550 = vmatprep.mubr.bf16.mxu0 0
    %551 = vmatmul.mubr.bf16.gmra.mrb[0].mxu0 %v359
    %v552 = vpop.f32.mrb[0].mxu0
    %v553 = vadd.f32 %v313, %v552
    %v554 = vpop.f32.mrb[0].mxu0
    %v555 = vadd.f32 %v317, %v554
    %v556 = vpop.f32.mrb[0].mxu0
    %v557 = vadd.f32 %v313, %v556
    %v558 = vpop.f32.mrb[0].mxu0
    %v559 = vadd.f32 %v317, %v558
    %560 = vdwg.mxu0
    %v561 = vmax.f32 %v483, 0.0
    %v562 = vmax.f32 %v485, 0.0
    %v563 = vmax.f32 %v487, 0.0
    %v564 = vmax.f32 %v489, 0.0
    %v565 = vmax.f32 %v493, 0.0
    %v566 = vmax.f32 %v495, 0.0
    %v567 = vmax.f32 %v497, 0.0
    %v568 = vmax.f32 %v499, 0.0
    %v569 = vmax.f32 %v503, 0.0
    %v570 = vmax.f32 %v505, 0.0
    %v571 = vmax.f32 %v507, 0.0
    %v572 = vmax.f32 %v509, 0.0
    %v573 = vmax.f32 %v513, 0.0
    %v574 = vmax.f32 %v515, 0.0
    %v575 = vmax.f32 %v517, 0.0
    %v576 = vmax.f32 %v519, 0.0
    %v577 = vmax.f32 %v523, 0.0
    %v578 = vmax.f32 %v525, 0.0
    %v579 = vmax.f32 %v527, 0.0
    %v580 = vmax.f32 %v529, 0.0
    %v581 = vmax.f32 %v533, 0.0
    %v582 = vmax.f32 %v535, 0.0
    %v583 = vmax.f32 %v537, 0.0
    %v584 = vmax.f32 %v539, 0.0
    %v585 = vmax.f32 %v543, 0.0
    %v586 = vmax.f32 %v545, 0.0
    %v587 = vmax.f32 %v547, 0.0
    %v588 = vmax.f32 %v549, 0.0
    %v589 = vmax.f32 %v553, 0.0
    %v590 = vmax.f32 %v555, 0.0
    %v591 = vmax.f32 %v557, 0.0
    %v592 = vmax.f32 %v559, 0.0
    %v593 = vld [vmem:[#allocation10] sm:$0xff]
    %v594 = vld [vmem:[#allocation10 + $0x8] sm:$0xff]
    %v595 = vld [vmem:[#allocation10 + $0x10] sm:$0xff]
    %v596 = vld [vmem:[#allocation10 + $0x18] sm:$0xff]
    %v597 = vld [vmem:[#allocation10 + $0x20] sm:$0xff]
    %v598 = vld [vmem:[#allocation10 + $0x28] sm:$0xff]
    %v599 = vld [vmem:[#allocation10 + $0x30] sm:$0xff]
    %v600 = vld [vmem:[#allocation10 + $0x38] sm:$0xff]
    %v601 = vld [vmem:[#allocation10 + $0x40] sm:$0xff]
    %v602 = vld [vmem:[#allocation10 + $0x48] sm:$0xff]
    %v603 = vld [vmem:[#allocation10 + $0x50] sm:$0xff]
    %v604 = vld [vmem:[#allocation10 + $0x58] sm:$0xff]
    %v605 = vld [vmem:[#allocation10 + $0x60] sm:$0xff]
    %v606 = vld [vmem:[#allocation10 + $0x68] sm:$0xff]
    %v607 = vld [vmem:[#allocation10 + $0x70] sm:$0xff]
    %v608 = vld [vmem:[#allocation10 + $0x78] sm:$0xff]
    %v625 = vunpack.c.l.b16 %v593
    %v626 = vunpack.c.h.b16 %v593
    %v627 = vunpack.c.l.b16 %v594
    %v628 = vunpack.c.h.b16 %v594
    %v629 = vunpack.c.l.b16 %v595
    %v630 = vunpack.c.h.b16 %v595
    %v631 = vunpack.c.l.b16 %v596
    %v632 = vunpack.c.h.b16 %v596
    %v633 = vunpack.c.l.b16 %v597
    %v634 = vunpack.c.h.b16 %v597
    %v635 = vunpack.c.l.b16 %v598
    %v636 = vunpack.c.h.b16 %v598
    %v637 = vunpack.c.l.b16 %v599
    %v638 = vunpack.c.h.b16 %v599
    %v639 = vunpack.c.l.b16 %v600
    %v640 = vunpack.c.h.b16 %v600
    %v641 = vunpack.c.l.b16 %v601
    %v642 = vunpack.c.h.b16 %v601
    %v643 = vunpack.c.l.b16 %v602
    %v644 = vunpack.c.h.b16 %v602
    %v645 = vunpack.c.l.b16 %v603
    %v646 = vunpack.c.h.b16 %v603
    %v647 = vunpack.c.l.b16 %v604
    %v648 = vunpack.c.h.b16 %v604
    %v649 = vunpack.c.l.b16 %v605
    %v650 = vunpack.c.h.b16 %v605
    %v651 = vunpack.c.l.b16 %v606
    %v652 = vunpack.c.h.b16 %v606
    %v653 = vunpack.c.l.b16 %v607
    %v654 = vunpack.c.h.b16 %v607
    %v655 = vunpack.c.l.b16 %v608
    %v656 = vunpack.c.h.b16 %v608
    %v657 = vpack.c.b16 %v627, %v625
    %v658 = vpack.c.b16 %v628, %v626
    %v659 = vpack.c.b16 %v631, %v629
    %v660 = vpack.c.b16 %v632, %v630
    %v661 = vpack.c.b16 %v635, %v633
    %v662 = vpack.c.b16 %v636, %v634
    %v663 = vpack.c.b16 %v639, %v637
    %v664 = vpack.c.b16 %v640, %v638
    %v665 = vpack.c.b16 %v643, %v641
    %v666 = vpack.c.b16 %v644, %v642
    %v667 = vpack.c.b16 %v647, %v645
    %v668 = vpack.c.b16 %v648, %v646
    %v669 = vpack.c.b16 %v651, %v649
    %v670 = vpack.c.b16 %v652, %v650
    %v671 = vpack.c.b16 %v655, %v653
    %v672 = vpack.c.b16 %v656, %v654
    %689 = vmatprep.subr.bf16.mxu0 %v658
    %690 = vmatpush1.bf16.msra.mxu0 %v657
    %691 = vmatprep.subr.bf16.mxu0 %v660
    %692 = vmatpush1.bf16.msra.mxu0 %v659
    %693 = vmatprep.subr.bf16.mxu0 %v662
    %694 = vmatpush1.bf16.msra.mxu0 %v661
    %695 = vmatprep.subr.bf16.mxu0 %v664
    %696 = vmatpush1.bf16.msra.mxu0 %v663
    %697 = vmatprep.subr.bf16.mxu0 %v666
    %698 = vmatpush1.bf16.msra.mxu0 %v665
    %699 = vmatprep.subr.bf16.mxu0 %v668
    %700 = vmatpush1.bf16.msra.mxu0 %v667
    %701 = vmatprep.subr.bf16.mxu0 %v670
    %702 = vmatpush1.bf16.msra.mxu0 %v669
    %703 = vmatprep.subr.bf16.mxu0 %v672
    %704 = vmatpush1.bf16.msra.mxu0 %v671
    %705 = vmatprep.subr.bf16.mxu0 0
    %706 = vmatpush1.bf16.msra.mxu0 0
    %707 = vmatprep.subr.bf16.mxu0 0
    %708 = vmatpush1.bf16.msra.mxu0 0
    %709 = vmatprep.subr.bf16.mxu0 0
    %710 = vmatpush1.bf16.msra.mxu0 0
    %711 = vmatprep.subr.bf16.mxu0 0
    %712 = vmatpush1.bf16.msra.mxu0 0
    %713 = vmatprep.subr.bf16.mxu0 0
    %714 = vmatpush1.bf16.msra.mxu0 0
    %715 = vmatprep.subr.bf16.mxu0 0
    %716 = vmatpush1.bf16.msra.mxu0 0
    %717 = vmatprep.subr.bf16.mxu0 0
    %718 = vmatpush1.bf16.msra.mxu0 0
    %719 = vmatprep.subr.bf16.mxu0 0
    %720 = vmatpush1.bf16.msra.mxu0 0
    %721 = vmatprep.mubr.bf16.mxu0 0
    %722 = vmatmul.mubr.bf16.gmra.mrb[0].mxu0 %v291
    %v723 = vpop.f32.mrb[0].mxu0
    %v724 = vadd.f32 0.0, %v723
    %v725 = vpop.f32.mrb[0].mxu0
    %v726 = vadd.f32 0.0, %v725
    %v727 = vpop.f32.mrb[0].mxu0
    %v728 = vpop.f32.mrb[0].mxu0
    %729 = vdwg.mxu0
    %v730 = vlaneseq
    %v731 = vand.u32 %v730, 127
    %vm732 = vcmp.lt.s32.totalorder %v731, 8
    %v733 = vld [vmem:[%s7] sm:$0x1]
    %v735 = vlaneseq
    %v736 = vshrl.u32 %v735, 7
    %v737 = vsub.s32 0, %v736
    %v738 = vrot.slane %v733, %v737
    %v740 = vadd.f32 %v724, %v738
    %v741 = vmax.f32 %v740, 0.0
    %v742 = vld [vmem:[%s8] sm:$0x1]
    %v744 = vlaneseq
    %v745 = vshrl.u32 %v744, 7
    %v746 = vsub.s32 0, %v745
    %v747 = vrot.slane %v742, %v746
    %v749 = vmul.f32 %v741, %v747
    %v751 = vcombine.high %v749, %v749
    %v753 = vunpack.c.l.s4 1966171168
    %v754 = vunpack.c.0.s8 %v753
    %v755 = vlaneseq
    %v756 = vshrl.u32 %v755, 7
    %v757 = vsub.s32 %v754, %v756
    %v758 = vrot.slane %v749, %v757
    %v760 = vunpack.c.l.s4 1966171168
    %v761 = vunpack.c.0.s8 %v760
    %v762 = vlaneseq
    %v763 = vshrl.u32 %v762, 7
    %v764 = vsub.s32 %v761, %v763
    %v765 = vrot.slane %v751, %v764
    %v766 = vcombine.high %v758, %v758
    %v767 = vcombine.high %v765, %v765
    %v769 = vunpack.c.l.s4 1966171168
    %v770 = vunpack.c.0.s8 %v769
    %v771 = vlaneseq
    %v772 = vshrl.u32 %v771, 7
    %v773 = vsub.s32 %v770, %v772
    %v774 = vrot.slane %v758, %v773
    %v776 = vunpack.c.l.s4 1966171168
    %v777 = vunpack.c.0.s8 %v776
    %v778 = vlaneseq
    %v779 = vshrl.u32 %v778, 7
    %v780 = vsub.s32 %v777, %v779
    %v781 = vrot.slane %v765, %v780
    %v783 = vunpack.c.l.s4 1966171168
    %v784 = vunpack.c.0.s8 %v783
    %v785 = vlaneseq
    %v786 = vshrl.u32 %v785, 7
    %v787 = vsub.s32 %v784, %v786
    %v788 = vrot.slane %v766, %v787
    %v790 = vunpack.c.l.s4 1966171168
    %v791 = vunpack.c.0.s8 %v790
    %v792 = vlaneseq
    %v793 = vshrl.u32 %v792, 7
    %v794 = vsub.s32 %v791, %v793
    %v795 = vrot.slane %v767, %v794
    %v796 = vcombine.high %v774, %v774
    %v797 = vcombine.high %v781, %v781
    %v798 = vcombine.high %v788, %v788
    %v799 = vcombine.high %v795, %v795
    %v800 = vlaneseq
    %v801 = vshrl.u32 %v800, 7
    %v802 = vsub.s32 0, %v801
    %v803 = vrot.slane %v774, %v802
    %v804 = vlaneseq
    %v805 = vshrl.u32 %v804, 7
    %v806 = vsub.s32 0, %v805
    %v807 = vrot.slane %v788, %v806
    %v808 = vlaneseq
    %v809 = vshrl.u32 %v808, 7
    %v810 = vsub.s32 0, %v809
    %v811 = vrot.slane %v796, %v810
    %v812 = vlaneseq
    %v813 = vshrl.u32 %v812, 7
    %v814 = vsub.s32 0, %v813
    %v815 = vrot.slane %v798, %v814
    %v816 = vlaneseq
    %v817 = vshrl.u32 %v816, 7
    %v818 = vsub.s32 0, %v817
    %v819 = vrot.slane %v781, %v818
    %v820 = vlaneseq
    %v821 = vshrl.u32 %v820, 7
    %v822 = vsub.s32 0, %v821
    %v823 = vrot.slane %v795, %v822
    %v824 = vlaneseq
    %v825 = vshrl.u32 %v824, 7
    %v826 = vsub.s32 0, %v825
    %v827 = vrot.slane %v797, %v826
    %v828 = vlaneseq
    %v829 = vshrl.u32 %v828, 7
    %v830 = vsub.s32 0, %v829
    %v831 = vrot.slane %v799, %v830
    %v840 = vmul.f32 %v561, %v803
    %v841 = vmul.f32 %v563, %v803
    %v842 = vmul.f32 %v565, %v807
    %v843 = vmul.f32 %v567, %v807
    %v844 = vmul.f32 %v569, %v811
    %v845 = vmul.f32 %v571, %v811
    %v846 = vmul.f32 %v573, %v815
    %v847 = vmul.f32 %v575, %v815
    %v848 = vmul.f32 %v577, %v819
    %v849 = vmul.f32 %v579, %v819
    %v850 = vmul.f32 %v581, %v823
    %v851 = vmul.f32 %v583, %v823
    %v852 = vmul.f32 %v585, %v827
    %v853 = vmul.f32 %v587, %v827
    %v854 = vmul.f32 %v589, %v831
    %v855 = vmul.f32 %v591, %v831
    %856 = vadd.xlane.f32.xlu0 %v840
    %v857 = vpop.xlane.xlu0 %856
    %858 = vadd.xlane.f32.xlu0 %v841
    %v859 = vpop.xlane.xlu0 %858
    %860 = vadd.xlane.f32.xlu0 %v842
    %v861 = vpop.xlane.xlu0 %860
    %862 = vadd.xlane.f32.xlu0 %v843
    %v863 = vpop.xlane.xlu0 %862
    %864 = vadd.xlane.f32.xlu0 %v844
    %v865 = vpop.xlane.xlu0 %864
    %866 = vadd.xlane.f32.xlu0 %v845
    %v867 = vpop.xlane.xlu0 %866
    %868 = vadd.xlane.f32.xlu0 %v846
    %v869 = vpop.xlane.xlu0 %868
    %870 = vadd.xlane.f32.xlu0 %v847
    %v871 = vpop.xlane.xlu0 %870
    %872 = vadd.xlane.f32.xlu0 %v848
    %v873 = vpop.xlane.xlu0 %872
    %874 = vadd.xlane.f32.xlu0 %v849
    %v875 = vpop.xlane.xlu0 %874
    %876 = vadd.xlane.f32.xlu0 %v850
    %v877 = vpop.xlane.xlu0 %876
    %878 = vadd.xlane.f32.xlu0 %v851
    %v879 = vpop.xlane.xlu0 %878
    %880 = vadd.xlane.f32.xlu0 %v852
    %v881 = vpop.xlane.xlu0 %880
    %882 = vadd.xlane.f32.xlu0 %v853
    %v883 = vpop.xlane.xlu0 %882
    %884 = vadd.xlane.f32.xlu0 %v854
    %v885 = vpop.xlane.xlu0 %884
    %886 = vadd.xlane.f32.xlu0 %v855
    %v887 = vpop.xlane.xlu0 %886
    %v888 = vsel %vm732, 1, 0
    %vm889 = vcmp.eq.s32.totalorder %v888, 1
    %v906 = vlaneseq
    %v907 = vshrl.u32 %v906, 7
    %v908 = vsub.s32 %v731, %v907
    %v909 = vrot.slane %v857, %v908
    %v910 = vadd.s32 %v731, 4294967288
    %v911 = vlaneseq
    %v912 = vshrl.u32 %v911, 7
    %v913 = vsub.s32 %v910, %v912
    %v914 = vrot.slane %v859, %v913
    %vm915 = vcmask 130112
    %v916 = vsel %vm915, %v914, %v909
    %v917 = vlaneseq
    %v918 = vshrl.u32 %v917, 7
    %v919 = vsub.s32 %v731, %v918
    %v920 = vrot.slane %v861, %v919
    %v921 = vlaneseq
    %v922 = vshrl.u32 %v921, 7
    %v923 = vsub.s32 %v910, %v922
    %v924 = vrot.slane %v863, %v923
    %v925 = vsel %vm915, %v924, %v920
    %v926 = vlaneseq
    %v927 = vshrl.u32 %v926, 7
    %v928 = vsub.s32 %v731, %v927
    %v929 = vrot.slane %v865, %v928
    %v930 = vlaneseq
    %v931 = vshrl.u32 %v930, 7
    %v932 = vsub.s32 %v910, %v931
    %v933 = vrot.slane %v867, %v932
    %v934 = vsel %vm915, %v933, %v929
    %v935 = vlaneseq
    %v936 = vshrl.u32 %v935, 7
    %v937 = vsub.s32 %v731, %v936
    %v938 = vrot.slane %v869, %v937
    %v939 = vlaneseq
    %v940 = vshrl.u32 %v939, 7
    %v941 = vsub.s32 %v910, %v940
    %v942 = vrot.slane %v871, %v941
    %v943 = vsel %vm915, %v942, %v938
    %v944 = vlaneseq
    %v945 = vshrl.u32 %v944, 7
    %v946 = vsub.s32 %v731, %v945
    %v947 = vrot.slane %v873, %v946
    %v948 = vlaneseq
    %v949 = vshrl.u32 %v948, 7
    %v950 = vsub.s32 %v910, %v949
    %v951 = vrot.slane %v875, %v950
    %v952 = vsel %vm915, %v951, %v947
    %v953 = vlaneseq
    %v954 = vshrl.u32 %v953, 7
    %v955 = vsub.s32 %v731, %v954
    %v956 = vrot.slane %v877, %v955
    %v957 = vlaneseq
    %v958 = vshrl.u32 %v957, 7
    %v959 = vsub.s32 %v910, %v958
    %v960 = vrot.slane %v879, %v959
    %v961 = vsel %vm915, %v960, %v956
    %v962 = vlaneseq
    %v963 = vshrl.u32 %v962, 7
    %v964 = vsub.s32 %v731, %v963
    %v965 = vrot.slane %v881, %v964
    %v966 = vlaneseq
    %v967 = vshrl.u32 %v966, 7
    %v968 = vsub.s32 %v910, %v967
    %v969 = vrot.slane %v883, %v968
    %v970 = vsel %vm915, %v969, %v965
    %v971 = vlaneseq
    %v972 = vshrl.u32 %v971, 7
    %v973 = vsub.s32 %v731, %v972
    %v974 = vrot.slane %v885, %v973
    %v975 = vlaneseq
    %v976 = vshrl.u32 %v975, 7
    %v977 = vsub.s32 %v910, %v976
    %v978 = vrot.slane %v887, %v977
    %v979 = vsel %vm915, %v978, %v974
    %vm980 = vcmask 1041409
    %v981 = vsel %vm980, %v925, %v916
    %vm982 = vcmask 1042434
    %v983 = vsel %vm982, %v934, %v981
    %vm984 = vcmask 1043459
    %v985 = vsel %vm984, %v943, %v983
    %vm986 = vcmask 1044484
    %v987 = vsel %vm986, %v952, %v985
    %vm988 = vcmask 1045509
    %v989 = vsel %vm988, %v961, %v987
    %vm990 = vcmask 1046534
    %v991 = vsel %vm990, %v970, %v989
    %vm992 = vcmask 1047559
    %v993 = vsel %vm992, %v979, %v991
    %v995 = vsel %vm889, %v993, -1e+30
    %vm996 = vcmask 130048
    %v997 = vsel %vm996, %v995, -inf
    %998 = vmax.xlane.f32.xlu0 %v997
    %v999 = vpop.xlane.xlu0 %998
    %v1000 = vsub.f32 %v995, %v999
    %v1001 = vmul.f32 %v1000, 1.442695
    %v1002 = vpow.pop %v1001
    %v1003 = vsel %vm996, %v1002, 0.0
    %1004 = vadd.xlane.f32.xlu0 %v1003
    %v1005 = vpop.xlane.xlu0 %1004
    %v1006 = vrcp.pop %v1005
    %v1007 = vmul.f32 %v1002, %v1006
    %v1008 = vlaneseq
    %v1009 = vshrl.u32 %v1008, 7
    %v1010 = vsub.s32 0, %v1009
    %v1011 = vrot.slane %v1007, %v1010
    %1013 = vbcast.lane.b32.xlu0 %v1011, 256
    %v1014 = vpop.permute.xlu0 %1013
    %s1016 = sor.u32 256, 8
    %1017 = vbcast.lane.b32.xlu0 %v1011, %s1016
    %v1018 = vpop.permute.xlu0 %1017
    %v1019 = vlaneseq
    %v1020 = vshrl.u32 %v1019, 7
    %v1021 = vsub.s32 1, %v1020
    %v1022 = vrot.slane %v1007, %v1021
    %1024 = vbcast.lane.b32.xlu0 %v1022, 256
    %v1025 = vpop.permute.xlu0 %1024
    %s1027 = sor.u32 256, 8
    %1028 = vbcast.lane.b32.xlu0 %v1022, %s1027
    %v1029 = vpop.permute.xlu0 %1028
    %v1030 = vlaneseq
    %v1031 = vshrl.u32 %v1030, 7
    %v1032 = vsub.s32 2, %v1031
    %v1033 = vrot.slane %v1007, %v1032
    %1035 = vbcast.lane.b32.xlu0 %v1033, 256
    %v1036 = vpop.permute.xlu0 %1035
    %s1038 = sor.u32 256, 8
    %1039 = vbcast.lane.b32.xlu0 %v1033, %s1038
    %v1040 = vpop.permute.xlu0 %1039
    %v1041 = vlaneseq
    %v1042 = vshrl.u32 %v1041, 7
    %v1043 = vsub.s32 3, %v1042
    %v1044 = vrot.slane %v1007, %v1043
    %1046 = vbcast.lane.b32.xlu0 %v1044, 256
    %v1047 = vpop.permute.xlu0 %1046
    %s1049 = sor.u32 256, 8
    %1050 = vbcast.lane.b32.xlu0 %v1044, %s1049
    %v1051 = vpop.permute.xlu0 %1050
    %v1052 = vlaneseq
    %v1053 = vshrl.u32 %v1052, 7
    %v1054 = vsub.s32 4, %v1053
    %v1055 = vrot.slane %v1007, %v1054
    %1057 = vbcast.lane.b32.xlu0 %v1055, 256
    %v1058 = vpop.permute.xlu0 %1057
    %s1060 = sor.u32 256, 8
    %1061 = vbcast.lane.b32.xlu0 %v1055, %s1060
    %v1062 = vpop.permute.xlu0 %1061
    %v1063 = vlaneseq
    %v1064 = vshrl.u32 %v1063, 7
    %v1065 = vsub.s32 5, %v1064
    %v1066 = vrot.slane %v1007, %v1065
    %1068 = vbcast.lane.b32.xlu0 %v1066, 256
    %v1069 = vpop.permute.xlu0 %1068
    %s1071 = sor.u32 256, 8
    %1072 = vbcast.lane.b32.xlu0 %v1066, %s1071
    %v1073 = vpop.permute.xlu0 %1072
    %v1074 = vlaneseq
    %v1075 = vshrl.u32 %v1074, 7
    %v1076 = vsub.s32 6, %v1075
    %v1077 = vrot.slane %v1007, %v1076
    %1079 = vbcast.lane.b32.xlu0 %v1077, 256
    %v1080 = vpop.permute.xlu0 %1079
    %s1082 = sor.u32 256, 8
    %1083 = vbcast.lane.b32.xlu0 %v1077, %s1082
    %v1084 = vpop.permute.xlu0 %1083
    %v1085 = vlaneseq
    %v1086 = vshrl.u32 %v1085, 7
    %v1087 = vsub.s32 7, %v1086
    %v1088 = vrot.slane %v1007, %v1087
    %1090 = vbcast.lane.b32.xlu0 %v1088, 256
    %v1091 = vpop.permute.xlu0 %1090
    %s1093 = sor.u32 256, 8
    %1094 = vbcast.lane.b32.xlu0 %v1088, %s1093
    %v1095 = vpop.permute.xlu0 %1094
    %v1096 = vunpack.c.l.bf16 %v163
    %v1097 = vunpack.c.l.bf16 %v164
    %v1098 = vunpack.c.l.bf16 %v165
    %v1099 = vunpack.c.l.bf16 %v166
    %v1100 = vunpack.c.l.bf16 %v167
    %v1101 = vunpack.c.l.bf16 %v168
    %v1102 = vunpack.c.l.bf16 %v169
    %v1103 = vunpack.c.l.bf16 %v170
    %v1104 = vunpack.c.l.bf16 %v171
    %v1105 = vunpack.c.l.bf16 %v172
    %v1106 = vunpack.c.l.bf16 %v173
    %v1107 = vunpack.c.l.bf16 %v174
    %v1108 = vunpack.c.l.bf16 %v175
    %v1109 = vunpack.c.l.bf16 %v176
    %v1110 = vunpack.c.l.bf16 %v177
    %v1111 = vunpack.c.l.bf16 %v178
    %v1112 = vmul.f32 %v1014, %v1096
    %v1113 = vmul.f32 %v1018, %v1097
    %v1114 = vmul.f32 %v1025, %v1098
    %v1115 = vmul.f32 %v1029, %v1099
    %v1116 = vmul.f32 %v1036, %v1100
    %v1117 = vmul.f32 %v1040, %v1101
    %v1118 = vmul.f32 %v1047, %v1102
    %v1119 = vmul.f32 %v1051, %v1103
    %v1120 = vmul.f32 %v1058, %v1104
    %v1121 = vmul.f32 %v1062, %v1105
    %v1122 = vmul.f32 %v1069, %v1106
    %v1123 = vmul.f32 %v1073, %v1107
    %v1124 = vmul.f32 %v1080, %v1108
    %v1125 = vmul.f32 %v1084, %v1109
    %v1126 = vmul.f32 %v1091, %v1110
    %v1127 = vmul.f32 %v1095, %v1111
    %v1128 = vadd.f32 %v1112, %v1113
    %v1129 = vrot.slane %v1128, 4
    %v1130 = vadd.f32 %v1128, %v1129
    %v1131 = vrot.slane %v1130, 2
    %v1132 = vadd.f32 %v1130, %v1131
    %v1133 = vrot.slane %v1132, 1
    %v1134 = vadd.f32 %v1132, %v1133
    %v1135 = vadd.f32 %v1114, %v1115
    %v1136 = vrot.slane %v1135, 4
    %v1137 = vadd.f32 %v1135, %v1136
    %v1138 = vrot.slane %v1137, 2
    %v1139 = vadd.f32 %v1137, %v1138
    %v1140 = vrot.slane %v1139, 1
    %v1141 = vadd.f32 %v1139, %v1140
    %v1142 = vadd.f32 %v1116, %v1117
    %v1143 = vrot.slane %v1142, 4
    %v1144 = vadd.f32 %v1142, %v1143
    %v1145 = vrot.slane %v1144, 2
    %v1146 = vadd.f32 %v1144, %v1145
    %v1147 = vrot.slane %v1146, 1
    %v1148 = vadd.f32 %v1146, %v1147
    %v1149 = vadd.f32 %v1118, %v1119
    %v1150 = vrot.slane %v1149, 4
    %v1151 = vadd.f32 %v1149, %v1150
    %v1152 = vrot.slane %v1151, 2
    %v1153 = vadd.f32 %v1151, %v1152
    %v1154 = vrot.slane %v1153, 1
    %v1155 = vadd.f32 %v1153, %v1154
    %v1156 = vadd.f32 %v1120, %v1121
    %v1157 = vrot.slane %v1156, 4
    %v1158 = vadd.f32 %v1156, %v1157
    %v1159 = vrot.slane %v1158, 2
    %v1160 = vadd.f32 %v1158, %v1159
    %v1161 = vrot.slane %v1160, 1
    %v1162 = vadd.f32 %v1160, %v1161
    %v1163 = vadd.f32 %v1122, %v1123
    %v1164 = vrot.slane %v1163, 4
    %v1165 = vadd.f32 %v1163, %v1164
    %v1166 = vrot.slane %v1165, 2
    %v1167 = vadd.f32 %v1165, %v1166
    %v1168 = vrot.slane %v1167, 1
    %v1169 = vadd.f32 %v1167, %v1168
    %v1170 = vadd.f32 %v1124, %v1125
    %v1171 = vrot.slane %v1170, 4
    %v1172 = vadd.f32 %v1170, %v1171
    %v1173 = vrot.slane %v1172, 2
    %v1174 = vadd.f32 %v1172, %v1173
    %v1175 = vrot.slane %v1174, 1
    %v1176 = vadd.f32 %v1174, %v1175
    %v1177 = vadd.f32 %v1126, %v1127
    %v1178 = vrot.slane %v1177, 4
    %v1179 = vadd.f32 %v1177, %v1178
    %v1180 = vrot.slane %v1179, 2
    %v1181 = vadd.f32 %v1179, %v1180
    %v1182 = vrot.slane %v1181, 1
    %v1183 = vadd.f32 %v1181, %v1182
    %v1184 = vpack.c.bf16 %v1134, %v1134
    %v1185 = vpack.c.bf16 %v1141, %v1141
    %v1186 = vpack.c.bf16 %v1148, %v1148
    %v1187 = vpack.c.bf16 %v1155, %v1155
    %v1188 = vpack.c.bf16 %v1162, %v1162
    %v1189 = vpack.c.bf16 %v1169, %v1169
    %v1190 = vpack.c.bf16 %v1176, %v1176
    %v1191 = vpack.c.bf16 %v1183, %v1183
    %v1192 = vld [vmem:[#allocation11] sm:$0xf]
    %v1193 = vld [vmem:[#allocation11 + $0x4] sm:$0xf]
    %v1194 = vld [vmem:[#allocation11 + $0x8] sm:$0xf]
    %v1195 = vld [vmem:[#allocation11 + $0xc] sm:$0xf]
    %v1196 = vld [vmem:[#allocation11 + $0x10] sm:$0xf]
    %v1197 = vld [vmem:[#allocation11 + $0x14] sm:$0xf]
    %v1198 = vld [vmem:[#allocation11 + $0x18] sm:$0xf]
    %v1199 = vld [vmem:[#allocation11 + $0x1c] sm:$0xf]
    %v1200 = vld [vmem:[#allocation11 + $0x20] sm:$0xf]
    %v1201 = vld [vmem:[#allocation11 + $0x24] sm:$0xf]
    %v1202 = vld [vmem:[#allocation11 + $0x28] sm:$0xf]
    %v1203 = vld [vmem:[#allocation11 + $0x2c] sm:$0xf]
    %v1204 = vld [vmem:[#allocation11 + $0x30] sm:$0xf]
    %v1205 = vld [vmem:[#allocation11 + $0x34] sm:$0xf]
    %v1206 = vld [vmem:[#allocation11 + $0x38] sm:$0xf]
    %v1207 = vld [vmem:[#allocation11 + $0x3c] sm:$0xf]
    %v1216 = vunpack.c.l.b16 %v1184
    %v1217 = vunpack.c.l.b16 %v1185
    %v1218 = vunpack.c.l.b16 %v1186
    %v1219 = vunpack.c.l.b16 %v1187
    %v1220 = vunpack.c.l.b16 %v1188
    %v1221 = vunpack.c.l.b16 %v1189
    %v1222 = vunpack.c.l.b16 %v1190
    %v1223 = vunpack.c.l.b16 %v1191
    %v1224 = vsel %vm980, %v1217, %v1216
    %v1225 = vsel %vm982, %v1218, %v1224
    %v1226 = vsel %vm984, %v1219, %v1225
    %v1227 = vsel %vm986, %v1220, %v1226
    %v1228 = vsel %vm988, %v1221, %v1227
    %v1229 = vsel %vm990, %v1222, %v1228
    %v1230 = vsel %vm992, %v1223, %v1229
    %v1231 = vpack.c.b16 %v1230, %v1230
    %v1249 = vunpack.c.l.b16 %v1192
    %v1250 = vunpack.c.l.b16 %v1193
    %v1251 = vunpack.c.l.b16 %v1194
    %v1252 = vunpack.c.l.b16 %v1195
    %v1253 = vunpack.c.l.b16 %v1196
    %v1254 = vunpack.c.l.b16 %v1197
    %v1255 = vunpack.c.l.b16 %v1198
    %v1256 = vunpack.c.l.b16 %v1199
    %v1257 = vunpack.c.l.b16 %v1200
    %v1258 = vunpack.c.l.b16 %v1201
    %v1259 = vunpack.c.l.b16 %v1202
    %v1260 = vunpack.c.l.b16 %v1203
    %v1261 = vunpack.c.l.b16 %v1204
    %v1262 = vunpack.c.l.b16 %v1205
    %v1263 = vunpack.c.l.b16 %v1206
    %v1264 = vunpack.c.l.b16 %v1207
    %v1265 = vpack.c.b16 %v1250, %v1249
    %v1266 = vpack.c.b16 %v1252, %v1251
    %v1267 = vpack.c.b16 %v1254, %v1253
    %v1268 = vpack.c.b16 %v1256, %v1255
    %v1269 = vpack.c.b16 %v1258, %v1257
    %v1270 = vpack.c.b16 %v1260, %v1259
    %v1271 = vpack.c.b16 %v1262, %v1261
    %v1272 = vpack.c.b16 %v1264, %v1263
    %1281 = vmatprep.subr.bf16.mxu0 0
    %1282 = vmatpush1.bf16.msra.mxu0 %v1265
    %1283 = vmatprep.subr.bf16.mxu0 0
    %1284 = vmatpush1.bf16.msra.mxu0 %v1266
    %1285 = vmatprep.subr.bf16.mxu0 0
    %1286 = vmatpush1.bf16.msra.mxu0 %v1267
    %1287 = vmatprep.subr.bf16.mxu0 0
    %1288 = vmatpush1.bf16.msra.mxu0 %v1268
    %1289 = vmatprep.subr.bf16.mxu0 0
    %1290 = vmatpush1.bf16.msra.mxu0 %v1269
    %1291 = vmatprep.subr.bf16.mxu0 0
    %1292 = vmatpush1.bf16.msra.mxu0 %v1270
    %1293 = vmatprep.subr.bf16.mxu0 0
    %1294 = vmatpush1.bf16.msra.mxu0 %v1271
    %1295 = vmatprep.subr.bf16.mxu0 0
    %1296 = vmatpush1.bf16.msra.mxu0 %v1272
    %1297 = vmatprep.subr.bf16.mxu0 0
    %1298 = vmatpush1.bf16.msra.mxu0 0
    %1299 = vmatprep.subr.bf16.mxu0 0
    %1300 = vmatpush1.bf16.msra.mxu0 0
    %1301 = vmatprep.subr.bf16.mxu0 0
    %1302 = vmatpush1.bf16.msra.mxu0 0
    %1303 = vmatprep.subr.bf16.mxu0 0
    %1304 = vmatpush1.bf16.msra.mxu0 0
    %1305 = vmatprep.subr.bf16.mxu0 0
    %1306 = vmatpush1.bf16.msra.mxu0 0
    %1307 = vmatprep.subr.bf16.mxu0 0
    %1308 = vmatpush1.bf16.msra.mxu0 0
    %1309 = vmatprep.subr.bf16.mxu0 0
    %1310 = vmatpush1.bf16.msra.mxu0 0
    %1311 = vmatprep.subr.bf16.mxu0 0
    %1312 = vmatpush1.bf16.msra.mxu0 0
    %1313 = vmatprep.mubr.bf16.mxu0 0
    %1314 = vmatmul.mubr.bf16.gmra.mrb[0].mxu0 %v1231
    %v1315 = vpop.f32.mrb[0].mxu0
    %v1316 = vadd.f32 0.0, %v1315
    %v1317 = vpop.f32.mrb[0].mxu0
    %v1318 = vpop.f32.mrb[0].mxu0
    %v1319 = vpop.f32.mrb[0].mxu0
    %1320 = vdwg.mxu0
    %v1321 = vadd.f32 %v726, %v1316
    %v1322 = vld [vmem:[%s10] sm:$0x1]
    %v1324 = vlaneseq
    %v1325 = vshrl.u32 %v1324, 7
    %v1326 = vsub.s32 0, %v1325
    %v1327 = vrot.slane %v1322, %v1326
    %v1329 = vadd.f32 %v1321, %v1327
    %v1330 = vmax.f32 %v1329, 0.0
    %v1331 = vld [vmem:[%s11] sm:$0x1]
    %v1333 = vlaneseq
    %v1334 = vshrl.u32 %v1333, 7
    %v1335 = vsub.s32 0, %v1334
    %v1336 = vrot.slane %v1331, %v1335
    %v1338 = vmul.f32 %v1330, %v1336
    %v1340 = vcombine.high %v1338, %v1338
    %v1342 = vunpack.c.l.s4 1966171168
    %v1343 = vunpack.c.0.s8 %v1342
    %v1344 = vlaneseq
    %v1345 = vshrl.u32 %v1344, 7
    %v1346 = vsub.s32 %v1343, %v1345
    %v1347 = vrot.slane %v1338, %v1346
    %v1349 = vunpack.c.l.s4 1966171168
    %v1350 = vunpack.c.0.s8 %v1349
    %v1351 = vlaneseq
    %v1352 = vshrl.u32 %v1351, 7
    %v1353 = vsub.s32 %v1350, %v1352
    %v1354 = vrot.slane %v1340, %v1353
    %v1355 = vcombine.high %v1347, %v1347
    %v1356 = vcombine.high %v1354, %v1354
    %v1358 = vunpack.c.l.s4 1966171168
    %v1359 = vunpack.c.0.s8 %v1358
    %v1360 = vlaneseq
    %v1361 = vshrl.u32 %v1360, 7
    %v1362 = vsub.s32 %v1359, %v1361
    %v1363 = vrot.slane %v1347, %v1362
    %v1365 = vunpack.c.l.s4 1966171168
    %v1366 = vunpack.c.0.s8 %v1365
    %v1367 = vlaneseq
    %v1368 = vshrl.u32 %v1367, 7
    %v1369 = vsub.s32 %v1366, %v1368
    %v1370 = vrot.slane %v1354, %v1369
    %v1372 = vunpack.c.l.s4 1966171168
    %v1373 = vunpack.c.0.s8 %v1372
    %v1374 = vlaneseq
    %v1375 = vshrl.u32 %v1374, 7
    %v1376 = vsub.s32 %v1373, %v1375
    %v1377 = vrot.slane %v1355, %v1376
    %v1379 = vunpack.c.l.s4 1966171168
    %v1380 = vunpack.c.0.s8 %v1379
    %v1381 = vlaneseq
    %v1382 = vshrl.u32 %v1381, 7
    %v1383 = vsub.s32 %v1380, %v1382
    %v1384 = vrot.slane %v1356, %v1383
    %v1385 = vcombine.high %v1363, %v1363
    %v1386 = vcombine.high %v1370, %v1370
    %v1387 = vcombine.high %v1377, %v1377
    %v1388 = vcombine.high %v1384, %v1384
    %v1389 = vlaneseq
    %v1390 = vshrl.u32 %v1389, 7
    %v1391 = vsub.s32 0, %v1390
    %v1392 = vrot.slane %v1363, %v1391
    %v1393 = vlaneseq
    %v1394 = vshrl.u32 %v1393, 7
    %v1395 = vsub.s32 0, %v1394
    %v1396 = vrot.slane %v1377, %v1395
    %v1397 = vlaneseq
    %v1398 = vshrl.u32 %v1397, 7
    %v1399 = vsub.s32 0, %v1398
    %v1400 = vrot.slane %v1385, %v1399
    %v1401 = vlaneseq
    %v1402 = vshrl.u32 %v1401, 7
    %v1403 = vsub.s32 0, %v1402
    %v1404 = vrot.slane %v1387, %v1403
    %v1405 = vlaneseq
    %v1406 = vshrl.u32 %v1405, 7
    %v1407 = vsub.s32 0, %v1406
    %v1408 = vrot.slane %v1370, %v1407
    %v1409 = vlaneseq
    %v1410 = vshrl.u32 %v1409, 7
    %v1411 = vsub.s32 0, %v1410
    %v1412 = vrot.slane %v1384, %v1411
    %v1413 = vlaneseq
    %v1414 = vshrl.u32 %v1413, 7
    %v1415 = vsub.s32 0, %v1414
    %v1416 = vrot.slane %v1386, %v1415
    %v1417 = vlaneseq
    %v1418 = vshrl.u32 %v1417, 7
    %v1419 = vsub.s32 0, %v1418
    %v1420 = vrot.slane %v1388, %v1419
    %v1429 = vmul.f32 %v562, %v1392
    %v1430 = vmul.f32 %v564, %v1392
    %v1431 = vmul.f32 %v566, %v1396
    %v1432 = vmul.f32 %v568, %v1396
    %v1433 = vmul.f32 %v570, %v1400
    %v1434 = vmul.f32 %v572, %v1400
    %v1435 = vmul.f32 %v574, %v1404
    %v1436 = vmul.f32 %v576, %v1404
    %v1437 = vmul.f32 %v578, %v1408
    %v1438 = vmul.f32 %v580, %v1408
    %v1439 = vmul.f32 %v582, %v1412
    %v1440 = vmul.f32 %v584, %v1412
    %v1441 = vmul.f32 %v586, %v1416
    %v1442 = vmul.f32 %v588, %v1416
    %v1443 = vmul.f32 %v590, %v1420
    %v1444 = vmul.f32 %v592, %v1420
    %1445 = vadd.xlane.f32.xlu0 %v1429
    %v1446 = vpop.xlane.xlu0 %1445
    %1447 = vadd.xlane.f32.xlu0 %v1430
    %v1448 = vpop.xlane.xlu0 %1447
    %1449 = vadd.xlane.f32.xlu0 %v1431
    %v1450 = vpop.xlane.xlu0 %1449
    %1451 = vadd.xlane.f32.xlu0 %v1432
    %v1452 = vpop.xlane.xlu0 %1451
    %1453 = vadd.xlane.f32.xlu0 %v1433
    %v1454 = vpop.xlane.xlu0 %1453
    %1455 = vadd.xlane.f32.xlu0 %v1434
    %v1456 = vpop.xlane.xlu0 %1455
    %1457 = vadd.xlane.f32.xlu0 %v1435
    %v1458 = vpop.xlane.xlu0 %1457
    %1459 = vadd.xlane.f32.xlu0 %v1436
    %v1460 = vpop.xlane.xlu0 %1459
    %1461 = vadd.xlane.f32.xlu0 %v1437
    %v1462 = vpop.xlane.xlu0 %1461
    %1463 = vadd.xlane.f32.xlu0 %v1438
    %v1464 = vpop.xlane.xlu0 %1463
    %1465 = vadd.xlane.f32.xlu0 %v1439
    %v1466 = vpop.xlane.xlu0 %1465
    %1467 = vadd.xlane.f32.xlu0 %v1440
    %v1468 = vpop.xlane.xlu0 %1467
    %1469 = vadd.xlane.f32.xlu0 %v1441
    %v1470 = vpop.xlane.xlu0 %1469
    %1471 = vadd.xlane.f32.xlu0 %v1442
    %v1472 = vpop.xlane.xlu0 %1471
    %1473 = vadd.xlane.f32.xlu0 %v1443
    %v1474 = vpop.xlane.xlu0 %1473
    %1475 = vadd.xlane.f32.xlu0 %v1444
    %v1476 = vpop.xlane.xlu0 %1475
    %v1493 = vlaneseq
    %v1494 = vshrl.u32 %v1493, 7
    %v1495 = vsub.s32 %v731, %v1494
    %v1496 = vrot.slane %v1446, %v1495
    %v1497 = vlaneseq
    %v1498 = vshrl.u32 %v1497, 7
    %v1499 = vsub.s32 %v910, %v1498
    %v1500 = vrot.slane %v1448, %v1499
    %v1501 = vsel %vm915, %v1500, %v1496
    %v1502 = vlaneseq
    %v1503 = vshrl.u32 %v1502, 7
    %v1504 = vsub.s32 %v731, %v1503
    %v1505 = vrot.slane %v1450, %v1504
    %v1506 = vlaneseq
    %v1507 = vshrl.u32 %v1506, 7
    %v1508 = vsub.s32 %v910, %v1507
    %v1509 = vrot.slane %v1452, %v1508
    %v1510 = vsel %vm915, %v1509, %v1505
    %v1511 = vlaneseq
    %v1512 = vshrl.u32 %v1511, 7
    %v1513 = vsub.s32 %v731, %v1512
    %v1514 = vrot.slane %v1454, %v1513
    %v1515 = vlaneseq
    %v1516 = vshrl.u32 %v1515, 7
    %v1517 = vsub.s32 %v910, %v1516
    %v1518 = vrot.slane %v1456, %v1517
    %v1519 = vsel %vm915, %v1518, %v1514
    %v1520 = vlaneseq
    %v1521 = vshrl.u32 %v1520, 7
    %v1522 = vsub.s32 %v731, %v1521
    %v1523 = vrot.slane %v1458, %v1522
    %v1524 = vlaneseq
    %v1525 = vshrl.u32 %v1524, 7
    %v1526 = vsub.s32 %v910, %v1525
    %v1527 = vrot.slane %v1460, %v1526
    %v1528 = vsel %vm915, %v1527, %v1523
    %v1529 = vlaneseq
    %v1530 = vshrl.u32 %v1529, 7
    %v1531 = vsub.s32 %v731, %v1530
    %v1532 = vrot.slane %v1462, %v1531
    %v1533 = vlaneseq
    %v1534 = vshrl.u32 %v1533, 7
    %v1535 = vsub.s32 %v910, %v1534
    %v1536 = vrot.slane %v1464, %v1535
    %v1537 = vsel %vm915, %v1536, %v1532
    %v1538 = vlaneseq
    %v1539 = vshrl.u32 %v1538, 7
    %v1540 = vsub.s32 %v731, %v1539
    %v1541 = vrot.slane %v1466, %v1540
    %v1542 = vlaneseq
    %v1543 = vshrl.u32 %v1542, 7
    %v1544 = vsub.s32 %v910, %v1543
    %v1545 = vrot.slane %v1468, %v1544
    %v1546 = vsel %vm915, %v1545, %v1541
    %v1547 = vlaneseq
    %v1548 = vshrl.u32 %v1547, 7
    %v1549 = vsub.s32 %v731, %v1548
    %v1550 = vrot.slane %v1470, %v1549
    %v1551 = vlaneseq
    %v1552 = vshrl.u32 %v1551, 7
    %v1553 = vsub.s32 %v910, %v1552
    %v1554 = vrot.slane %v1472, %v1553
    %v1555 = vsel %vm915, %v1554, %v1550
    %v1556 = vlaneseq
    %v1557 = vshrl.u32 %v1556, 7
    %v1558 = vsub.s32 %v731, %v1557
    %v1559 = vrot.slane %v1474, %v1558
    %v1560 = vlaneseq
    %v1561 = vshrl.u32 %v1560, 7
    %v1562 = vsub.s32 %v910, %v1561
    %v1563 = vrot.slane %v1476, %v1562
    %v1564 = vsel %vm915, %v1563, %v1559
    %v1565 = vsel %vm980, %v1510, %v1501
    %v1566 = vsel %vm982, %v1519, %v1565
    %v1567 = vsel %vm984, %v1528, %v1566
    %v1568 = vsel %vm986, %v1537, %v1567
    %v1569 = vsel %vm988, %v1546, %v1568
    %v1570 = vsel %vm990, %v1555, %v1569
    %v1571 = vsel %vm992, %v1564, %v1570
    %v1573 = vsel %vm889, %v1571, -1e+30
    %v1574 = vsel %vm996, %v1573, -inf
    %1575 = vmax.xlane.f32.xlu0 %v1574
    %v1576 = vpop.xlane.xlu0 %1575
    %v1577 = vsub.f32 %v1573, %v1576
    %v1578 = vmul.f32 %v1577, 1.442695
    %v1579 = vpow.pop %v1578
    %v1580 = vsel %vm996, %v1579, 0.0
    %1581 = vadd.xlane.f32.xlu0 %v1580
    %v1582 = vpop.xlane.xlu0 %1581
    %v1583 = vrcp.pop %v1582
    %v1584 = vmul.f32 %v1579, %v1583
    %v1585 = vlaneseq
    %v1586 = vshrl.u32 %v1585, 7
    %v1587 = vsub.s32 0, %v1586
    %v1588 = vrot.slane %v1584, %v1587
    %1590 = vbcast.lane.b32.xlu0 %v1588, 256
    %v1591 = vpop.permute.xlu0 %1590
    %s1593 = sor.u32 256, 8
    %1594 = vbcast.lane.b32.xlu0 %v1588, %s1593
    %v1595 = vpop.permute.xlu0 %1594
    %v1596 = vlaneseq
    %v1597 = vshrl.u32 %v1596, 7
    %v1598 = vsub.s32 1, %v1597
    %v1599 = vrot.slane %v1584, %v1598
    %1601 = vbcast.lane.b32.xlu0 %v1599, 256
    %v1602 = vpop.permute.xlu0 %1601
    %s1604 = sor.u32 256, 8
    %1605 = vbcast.lane.b32.xlu0 %v1599, %s1604
    %v1606 = vpop.permute.xlu0 %1605
    %v1607 = vlaneseq
    %v1608 = vshrl.u32 %v1607, 7
    %v1609 = vsub.s32 2, %v1608
    %v1610 = vrot.slane %v1584, %v1609
    %1612 = vbcast.lane.b32.xlu0 %v1610, 256
    %v1613 = vpop.permute.xlu0 %1612
    %s1615 = sor.u32 256, 8
    %1616 = vbcast.lane.b32.xlu0 %v1610, %s1615
    %v1617 = vpop.permute.xlu0 %1616
    %v1618 = vlaneseq
    %v1619 = vshrl.u32 %v1618, 7
    %v1620 = vsub.s32 3, %v1619
    %v1621 = vrot.slane %v1584, %v1620
    %1623 = vbcast.lane.b32.xlu0 %v1621, 256
    %v1624 = vpop.permute.xlu0 %1623
    %s1626 = sor.u32 256, 8
    %1627 = vbcast.lane.b32.xlu0 %v1621, %s1626
    %v1628 = vpop.permute.xlu0 %1627
    %v1629 = vlaneseq
    %v1630 = vshrl.u32 %v1629, 7
    %v1631 = vsub.s32 4, %v1630
    %v1632 = vrot.slane %v1584, %v1631
    %1634 = vbcast.lane.b32.xlu0 %v1632, 256
    %v1635 = vpop.permute.xlu0 %1634
    %s1637 = sor.u32 256, 8
    %1638 = vbcast.lane.b32.xlu0 %v1632, %s1637
    %v1639 = vpop.permute.xlu0 %1638
    %v1640 = vlaneseq
    %v1641 = vshrl.u32 %v1640, 7
    %v1642 = vsub.s32 5, %v1641
    %v1643 = vrot.slane %v1584, %v1642
    %1645 = vbcast.lane.b32.xlu0 %v1643, 256
    %v1646 = vpop.permute.xlu0 %1645
    %s1648 = sor.u32 256, 8
    %1649 = vbcast.lane.b32.xlu0 %v1643, %s1648
    %v1650 = vpop.permute.xlu0 %1649
    %v1651 = vlaneseq
    %v1652 = vshrl.u32 %v1651, 7
    %v1653 = vsub.s32 6, %v1652
    %v1654 = vrot.slane %v1584, %v1653
    %1656 = vbcast.lane.b32.xlu0 %v1654, 256
    %v1657 = vpop.permute.xlu0 %1656
    %s1659 = sor.u32 256, 8
    %1660 = vbcast.lane.b32.xlu0 %v1654, %s1659
    %v1661 = vpop.permute.xlu0 %1660
    %v1662 = vlaneseq
    %v1663 = vshrl.u32 %v1662, 7
    %v1664 = vsub.s32 7, %v1663
    %v1665 = vrot.slane %v1584, %v1664
    %1667 = vbcast.lane.b32.xlu0 %v1665, 256
    %v1668 = vpop.permute.xlu0 %1667
    %s1670 = sor.u32 256, 8
    %1671 = vbcast.lane.b32.xlu0 %v1665, %s1670
    %v1672 = vpop.permute.xlu0 %1671
    %v1673 = vmul.f32 %v1591, %v1096
    %v1674 = vmul.f32 %v1595, %v1097
    %v1675 = vmul.f32 %v1602, %v1098
    %v1676 = vmul.f32 %v1606, %v1099
    %v1677 = vmul.f32 %v1613, %v1100
    %v1678 = vmul.f32 %v1617, %v1101
    %v1679 = vmul.f32 %v1624, %v1102
    %v1680 = vmul.f32 %v1628, %v1103
    %v1681 = vmul.f32 %v1635, %v1104
    %v1682 = vmul.f32 %v1639, %v1105
    %v1683 = vmul.f32 %v1646, %v1106
    %v1684 = vmul.f32 %v1650, %v1107
    %v1685 = vmul.f32 %v1657, %v1108
    %v1686 = vmul.f32 %v1661, %v1109
    %v1687 = vmul.f32 %v1668, %v1110
    %v1688 = vmul.f32 %v1672, %v1111
    %v1689 = vadd.f32 %v1673, %v1674
    %v1690 = vrot.slane %v1689, 4
    %v1691 = vadd.f32 %v1689, %v1690
    %v1692 = vrot.slane %v1691, 2
    %v1693 = vadd.f32 %v1691, %v1692
    %v1694 = vrot.slane %v1693, 1
    %v1695 = vadd.f32 %v1693, %v1694
    %v1696 = vadd.f32 %v1675, %v1676
    %v1697 = vrot.slane %v1696, 4
    %v1698 = vadd.f32 %v1696, %v1697
    %v1699 = vrot.slane %v1698, 2
    %v1700 = vadd.f32 %v1698, %v1699
    %v1701 = vrot.slane %v1700, 1
    %v1702 = vadd.f32 %v1700, %v1701
    %v1703 = vadd.f32 %v1677, %v1678
    %v1704 = vrot.slane %v1703, 4
    %v1705 = vadd.f32 %v1703, %v1704
    %v1706 = vrot.slane %v1705, 2
    %v1707 = vadd.f32 %v1705, %v1706
    %v1708 = vrot.slane %v1707, 1
    %v1709 = vadd.f32 %v1707, %v1708
    %v1710 = vadd.f32 %v1679, %v1680
    %v1711 = vrot.slane %v1710, 4
    %v1712 = vadd.f32 %v1710, %v1711
    %v1713 = vrot.slane %v1712, 2
    %v1714 = vadd.f32 %v1712, %v1713
    %v1715 = vrot.slane %v1714, 1
    %v1716 = vadd.f32 %v1714, %v1715
    %v1717 = vadd.f32 %v1681, %v1682
    %v1718 = vrot.slane %v1717, 4
    %v1719 = vadd.f32 %v1717, %v1718
    %v1720 = vrot.slane %v1719, 2
    %v1721 = vadd.f32 %v1719, %v1720
    %v1722 = vrot.slane %v1721, 1
    %v1723 = vadd.f32 %v1721, %v1722
    %v1724 = vadd.f32 %v1683, %v1684
    %v1725 = vrot.slane %v1724, 4
    %v1726 = vadd.f32 %v1724, %v1725
    %v1727 = vrot.slane %v1726, 2
    %v1728 = vadd.f32 %v1726, %v1727
    %v1729 = vrot.slane %v1728, 1
    %v1730 = vadd.f32 %v1728, %v1729
    %v1731 = vadd.f32 %v1685, %v1686
    %v1732 = vrot.slane %v1731, 4
    %v1733 = vadd.f32 %v1731, %v1732
    %v1734 = vrot.slane %v1733, 2
    %v1735 = vadd.f32 %v1733, %v1734
    %v1736 = vrot.slane %v1735, 1
    %v1737 = vadd.f32 %v1735, %v1736
    %v1738 = vadd.f32 %v1687, %v1688
    %v1739 = vrot.slane %v1738, 4
    %v1740 = vadd.f32 %v1738, %v1739
    %v1741 = vrot.slane %v1740, 2
    %v1742 = vadd.f32 %v1740, %v1741
    %v1743 = vrot.slane %v1742, 1
    %v1744 = vadd.f32 %v1742, %v1743
    %v1745 = vpack.c.bf16 %v1695, %v1695
    %v1746 = vpack.c.bf16 %v1702, %v1702
    %v1747 = vpack.c.bf16 %v1709, %v1709
    %v1748 = vpack.c.bf16 %v1716, %v1716
    %v1749 = vpack.c.bf16 %v1723, %v1723
    %v1750 = vpack.c.bf16 %v1730, %v1730
    %v1751 = vpack.c.bf16 %v1737, %v1737
    %v1752 = vpack.c.bf16 %v1744, %v1744
    %v1761 = vunpack.c.l.b16 %v1745
    %v1762 = vunpack.c.l.b16 %v1746
    %v1763 = vunpack.c.l.b16 %v1747
    %v1764 = vunpack.c.l.b16 %v1748
    %v1765 = vunpack.c.l.b16 %v1749
    %v1766 = vunpack.c.l.b16 %v1750
    %v1767 = vunpack.c.l.b16 %v1751
    %v1768 = vunpack.c.l.b16 %v1752
    %v1769 = vsel %vm980, %v1762, %v1761
    %v1770 = vsel %vm982, %v1763, %v1769
    %v1771 = vsel %vm984, %v1764, %v1770
    %v1772 = vsel %vm986, %v1765, %v1771
    %v1773 = vsel %vm988, %v1766, %v1772
    %v1774 = vsel %vm990, %v1767, %v1773
    %v1775 = vsel %vm992, %v1768, %v1774
    %v1776 = vpack.c.b16 %v1775, %v1775
    %1778 = vmatprep.subr.bf16.mxu0 0
    %1779 = vmatpush1.bf16.msra.mxu0 %v1265
    %1780 = vmatprep.subr.bf16.mxu0 0
    %1781 = vmatpush1.bf16.msra.mxu0 %v1266
    %1782 = vmatprep.subr.bf16.mxu0 0
    %1783 = vmatpush1.bf16.msra.mxu0 %v1267
    %1784 = vmatprep.subr.bf16.mxu0 0
    %1785 = vmatpush1.bf16.msra.mxu0 %v1268
    %1786 = vmatprep.subr.bf16.mxu0 0
    %1787 = vmatpush1.bf16.msra.mxu0 %v1269
    %1788 = vmatprep.subr.bf16.mxu0 0
    %1789 = vmatpush1.bf16.msra.mxu0 %v1270
    %1790 = vmatprep.subr.bf16.mxu0 0
    %1791 = vmatpush1.bf16.msra.mxu0 %v1271
    %1792 = vmatprep.subr.bf16.mxu0 0
    %1793 = vmatpush1.bf16.msra.mxu0 %v1272
    %1794 = vmatprep.subr.bf16.mxu0 0
    %1795 = vmatpush1.bf16.msra.mxu0 0
    %1796 = vmatprep.subr.bf16.mxu0 0
    %1797 = vmatpush1.bf16.msra.mxu0 0
    %1798 = vmatprep.subr.bf16.mxu0 0
    %1799 = vmatpush1.bf16.msra.mxu0 0
    %1800 = vmatprep.subr.bf16.mxu0 0
    %1801 = vmatpush1.bf16.msra.mxu0 0
    %1802 = vmatprep.subr.bf16.mxu0 0
    %1803 = vmatpush1.bf16.msra.mxu0 0
    %1804 = vmatprep.subr.bf16.mxu0 0
    %1805 = vmatpush1.bf16.msra.mxu0 0
    %1806 = vmatprep.subr.bf16.mxu0 0
    %1807 = vmatpush1.bf16.msra.mxu0 0
    %1808 = vmatprep.subr.bf16.mxu0 0
    %1809 = vmatpush1.bf16.msra.mxu0 0
    %1810 = vmatprep.mubr.bf16.mxu0 0
    %1811 = vmatmul.mubr.bf16.gmra.mrb[0].mxu0 %v1776
    %v1812 = vpop.f32.mrb[0].mxu0
    %v1813 = vadd.f32 0.0, %v1812
    %v1814 = vpop.f32.mrb[0].mxu0
    %v1815 = vpop.f32.mrb[0].mxu0
    %v1816 = vpop.f32.mrb[0].mxu0
    %1817 = vdwg.mxu0
    %v1818 = vadd.f32 %v726, %v1813
    %v1819 = vadd.f32 %v1818, %v1327
    %v1820 = vmax.f32 %v1819, 0.0
    %v1821 = vmul.f32 %v1820, %v1336
    %v1823 = vcombine.high %v1821, %v1821
    %v1825 = vunpack.c.l.s4 1966171168
    %v1826 = vunpack.c.0.s8 %v1825
    %v1827 = vlaneseq
    %v1828 = vshrl.u32 %v1827, 7
    %v1829 = vsub.s32 %v1826, %v1828
    %v1830 = vrot.slane %v1821, %v1829
    %v1832 = vunpack.c.l.s4 1966171168
    %v1833 = vunpack.c.0.s8 %v1832
    %v1834 = vlaneseq
    %v1835 = vshrl.u32 %v1834, 7
    %v1836 = vsub.s32 %v1833, %v1835
    %v1837 = vrot.slane %v1823, %v1836
    %v1838 = vcombine.high %v1830, %v1830
    %v1839 = vcombine.high %v1837, %v1837
    %v1841 = vunpack.c.l.s4 1966171168
    %v1842 = vunpack.c.0.s8 %v1841
    %v1843 = vlaneseq
    %v1844 = vshrl.u32 %v1843, 7
    %v1845 = vsub.s32 %v1842, %v1844
    %v1846 = vrot.slane %v1830, %v1845
    %v1848 = vunpack.c.l.s4 1966171168
    %v1849 = vunpack.c.0.s8 %v1848
    %v1850 = vlaneseq
    %v1851 = vshrl.u32 %v1850, 7
    %v1852 = vsub.s32 %v1849, %v1851
    %v1853 = vrot.slane %v1837, %v1852
    %v1855 = vunpack.c.l.s4 1966171168
    %v1856 = vunpack.c.0.s8 %v1855
    %v1857 = vlaneseq
    %v1858 = vshrl.u32 %v1857, 7
    %v1859 = vsub.s32 %v1856, %v1858
    %v1860 = vrot.slane %v1838, %v1859
    %v1862 = vunpack.c.l.s4 1966171168
    %v1863 = vunpack.c.0.s8 %v1862
    %v1864 = vlaneseq
    %v1865 = vshrl.u32 %v1864, 7
    %v1866 = vsub.s32 %v1863, %v1865
    %v1867 = vrot.slane %v1839, %v1866
    %v1868 = vcombine.high %v1846, %v1846
    %v1869 = vcombine.high %v1853, %v1853
    %v1870 = vcombine.high %v1860, %v1860
    %v1871 = vcombine.high %v1867, %v1867
    %v1872 = vlaneseq
    %v1873 = vshrl.u32 %v1872, 7
    %v1874 = vsub.s32 0, %v1873
    %v1875 = vrot.slane %v1846, %v1874
    %v1876 = vlaneseq
    %v1877 = vshrl.u32 %v1876, 7
    %v1878 = vsub.s32 0, %v1877
    %v1879 = vrot.slane %v1860, %v1878
    %v1880 = vlaneseq
    %v1881 = vshrl.u32 %v1880, 7
    %v1882 = vsub.s32 0, %v1881
    %v1883 = vrot.slane %v1868, %v1882
    %v1884 = vlaneseq
    %v1885 = vshrl.u32 %v1884, 7
    %v1886 = vsub.s32 0, %v1885
    %v1887 = vrot.slane %v1870, %v1886
    %v1888 = vlaneseq
    %v1889 = vshrl.u32 %v1888, 7
    %v1890 = vsub.s32 0, %v1889
    %v1891 = vrot.slane %v1853, %v1890
    %v1892 = vlaneseq
    %v1893 = vshrl.u32 %v1892, 7
    %v1894 = vsub.s32 0, %v1893
    %v1895 = vrot.slane %v1867, %v1894
    %v1896 = vlaneseq
    %v1897 = vshrl.u32 %v1896, 7
    %v1898 = vsub.s32 0, %v1897
    %v1899 = vrot.slane %v1869, %v1898
    %v1900 = vlaneseq
    %v1901 = vshrl.u32 %v1900, 7
    %v1902 = vsub.s32 0, %v1901
    %v1903 = vrot.slane %v1871, %v1902
    %v1912 = vmul.f32 %v562, %v1875
    %v1913 = vmul.f32 %v564, %v1875
    %v1914 = vmul.f32 %v566, %v1879
    %v1915 = vmul.f32 %v568, %v1879
    %v1916 = vmul.f32 %v570, %v1883
    %v1917 = vmul.f32 %v572, %v1883
    %v1918 = vmul.f32 %v574, %v1887
    %v1919 = vmul.f32 %v576, %v1887
    %v1920 = vmul.f32 %v578, %v1891
    %v1921 = vmul.f32 %v580, %v1891
    %v1922 = vmul.f32 %v582, %v1895
    %v1923 = vmul.f32 %v584, %v1895
    %v1924 = vmul.f32 %v586, %v1899
    %v1925 = vmul.f32 %v588, %v1899
    %v1926 = vmul.f32 %v590, %v1903
    %v1927 = vmul.f32 %v592, %v1903
    %1928 = vadd.xlane.f32.xlu0 %v1912
    %v1929 = vpop.xlane.xlu0 %1928
    %1930 = vadd.xlane.f32.xlu0 %v1913
    %v1931 = vpop.xlane.xlu0 %1930
    %1932 = vadd.xlane.f32.xlu0 %v1914
    %v1933 = vpop.xlane.xlu0 %1932
    %1934 = vadd.xlane.f32.xlu0 %v1915
    %v1935 = vpop.xlane.xlu0 %1934
    %1936 = vadd.xlane.f32.xlu0 %v1916
    %v1937 = vpop.xlane.xlu0 %1936
    %1938 = vadd.xlane.f32.xlu0 %v1917
    %v1939 = vpop.xlane.xlu0 %1938
    %1940 = vadd.xlane.f32.xlu0 %v1918
    %v1941 = vpop.xlane.xlu0 %1940
    %1942 = vadd.xlane.f32.xlu0 %v1919
    %v1943 = vpop.xlane.xlu0 %1942
    %1944 = vadd.xlane.f32.xlu0 %v1920
    %v1945 = vpop.xlane.xlu0 %1944
    %1946 = vadd.xlane.f32.xlu0 %v1921
    %v1947 = vpop.xlane.xlu0 %1946
    %1948 = vadd.xlane.f32.xlu0 %v1922
    %v1949 = vpop.xlane.xlu0 %1948
    %1950 = vadd.xlane.f32.xlu0 %v1923
    %v1951 = vpop.xlane.xlu0 %1950
    %1952 = vadd.xlane.f32.xlu0 %v1924
    %v1953 = vpop.xlane.xlu0 %1952
    %1954 = vadd.xlane.f32.xlu0 %v1925
    %v1955 = vpop.xlane.xlu0 %1954
    %1956 = vadd.xlane.f32.xlu0 %v1926
    %v1957 = vpop.xlane.xlu0 %1956
    %1958 = vadd.xlane.f32.xlu0 %v1927
    %v1959 = vpop.xlane.xlu0 %1958
    %v1976 = vlaneseq
    %v1977 = vshrl.u32 %v1976, 7
    %v1978 = vsub.s32 %v731, %v1977
    %v1979 = vrot.slane %v1929, %v1978
    %v1980 = vlaneseq
    %v1981 = vshrl.u32 %v1980, 7
    %v1982 = vsub.s32 %v910, %v1981
    %v1983 = vrot.slane %v1931, %v1982
    %v1984 = vsel %vm915, %v1983, %v1979
    %v1985 = vlaneseq
    %v1986 = vshrl.u32 %v1985, 7
    %v1987 = vsub.s32 %v731, %v1986
    %v1988 = vrot.slane %v1933, %v1987
    %v1989 = vlaneseq
    %v1990 = vshrl.u32 %v1989, 7
    %v1991 = vsub.s32 %v910, %v1990
    %v1992 = vrot.slane %v1935, %v1991
    %v1993 = vsel %vm915, %v1992, %v1988
    %v1994 = vlaneseq
    %v1995 = vshrl.u32 %v1994, 7
    %v1996 = vsub.s32 %v731, %v1995
    %v1997 = vrot.slane %v1937, %v1996
    %v1998 = vlaneseq
    %v1999 = vshrl.u32 %v1998, 7
    %v2000 = vsub.s32 %v910, %v1999
    %v2001 = vrot.slane %v1939, %v2000
    %v2002 = vsel %vm915, %v2001, %v1997
    %v2003 = vlaneseq
    %v2004 = vshrl.u32 %v2003, 7
    %v2005 = vsub.s32 %v731, %v2004
    %v2006 = vrot.slane %v1941, %v2005
    %v2007 = vlaneseq
    %v2008 = vshrl.u32 %v2007, 7
    %v2009 = vsub.s32 %v910, %v2008
    %v2010 = vrot.slane %v1943, %v2009
    %v2011 = vsel %vm915, %v2010, %v2006
    %v2012 = vlaneseq
    %v2013 = vshrl.u32 %v2012, 7
    %v2014 = vsub.s32 %v731, %v2013
    %v2015 = vrot.slane %v1945, %v2014
    %v2016 = vlaneseq
    %v2017 = vshrl.u32 %v2016, 7
    %v2018 = vsub.s32 %v910, %v2017
    %v2019 = vrot.slane %v1947, %v2018
    %v2020 = vsel %vm915, %v2019, %v2015
    %v2021 = vlaneseq
    %v2022 = vshrl.u32 %v2021, 7
    %v2023 = vsub.s32 %v731, %v2022
    %v2024 = vrot.slane %v1949, %v2023
    %v2025 = vlaneseq
    %v2026 = vshrl.u32 %v2025, 7
    %v2027 = vsub.s32 %v910, %v2026
    %v2028 = vrot.slane %v1951, %v2027
    %v2029 = vsel %vm915, %v2028, %v2024
    %v2030 = vlaneseq
    %v2031 = vshrl.u32 %v2030, 7
    %v2032 = vsub.s32 %v731, %v2031
    %v2033 = vrot.slane %v1953, %v2032
    %v2034 = vlaneseq
    %v2035 = vshrl.u32 %v2034, 7
    %v2036 = vsub.s32 %v910, %v2035
    %v2037 = vrot.slane %v1955, %v2036
    %v2038 = vsel %vm915, %v2037, %v2033
    %v2039 = vlaneseq
    %v2040 = vshrl.u32 %v2039, 7
    %v2041 = vsub.s32 %v731, %v2040
    %v2042 = vrot.slane %v1957, %v2041
    %v2043 = vlaneseq
    %v2044 = vshrl.u32 %v2043, 7
    %v2045 = vsub.s32 %v910, %v2044
    %v2046 = vrot.slane %v1959, %v2045
    %v2047 = vsel %vm915, %v2046, %v2042
    %v2048 = vsel %vm980, %v1993, %v1984
    %v2049 = vsel %vm982, %v2002, %v2048
    %v2050 = vsel %vm984, %v2011, %v2049
    %v2051 = vsel %vm986, %v2020, %v2050
    %v2052 = vsel %vm988, %v2029, %v2051
    %v2053 = vsel %vm990, %v2038, %v2052
    %v2054 = vsel %vm992, %v2047, %v2053
    %v2056 = vsel %vm889, %v2054, -1e+30
    %v2057 = vsel %vm996, %v2056, -inf
    %2058 = vmax.xlane.f32.xlu0 %v2057
    %v2059 = vpop.xlane.xlu0 %2058
    %v2060 = vsub.f32 %v2056, %v2059
    %v2061 = vmul.f32 %v2060, 1.442695
    %v2062 = vpow.pop %v2061
    %v2063 = vsel %vm996, %v2062, 0.0
    %2064 = vadd.xlane.f32.xlu0 %v2063
    %v2065 = vpop.xlane.xlu0 %2064
    %v2066 = vrcp.pop %v2065
    %v2067 = vmul.f32 %v2062, %v2066
    %v2068 = vlaneseq
    %v2069 = vshrl.u32 %v2068, 7
    %v2070 = vsub.s32 0, %v2069
    %v2071 = vrot.slane %v2067, %v2070
    %2073 = vbcast.lane.b32.xlu0 %v2071, 256
    %v2074 = vpop.permute.xlu0 %2073
    %s2076 = sor.u32 256, 8
    %2077 = vbcast.lane.b32.xlu0 %v2071, %s2076
    %v2078 = vpop.permute.xlu0 %2077
    %v2079 = vlaneseq
    %v2080 = vshrl.u32 %v2079, 7
    %v2081 = vsub.s32 1, %v2080
    %v2082 = vrot.slane %v2067, %v2081
    %2084 = vbcast.lane.b32.xlu0 %v2082, 256
    %v2085 = vpop.permute.xlu0 %2084
    %s2087 = sor.u32 256, 8
    %2088 = vbcast.lane.b32.xlu0 %v2082, %s2087
    %v2089 = vpop.permute.xlu0 %2088
    %v2090 = vlaneseq
    %v2091 = vshrl.u32 %v2090, 7
    %v2092 = vsub.s32 2, %v2091
    %v2093 = vrot.slane %v2067, %v2092
    %2095 = vbcast.lane.b32.xlu0 %v2093, 256
    %v2096 = vpop.permute.xlu0 %2095
    %s2098 = sor.u32 256, 8
    %2099 = vbcast.lane.b32.xlu0 %v2093, %s2098
    %v2100 = vpop.permute.xlu0 %2099
    %v2101 = vlaneseq
    %v2102 = vshrl.u32 %v2101, 7
    %v2103 = vsub.s32 3, %v2102
    %v2104 = vrot.slane %v2067, %v2103
    %2106 = vbcast.lane.b32.xlu0 %v2104, 256
    %v2107 = vpop.permute.xlu0 %2106
    %s2109 = sor.u32 256, 8
    %2110 = vbcast.lane.b32.xlu0 %v2104, %s2109
    %v2111 = vpop.permute.xlu0 %2110
    %v2112 = vlaneseq
    %v2113 = vshrl.u32 %v2112, 7
    %v2114 = vsub.s32 4, %v2113
    %v2115 = vrot.slane %v2067, %v2114
    %2117 = vbcast.lane.b32.xlu0 %v2115, 256
    %v2118 = vpop.permute.xlu0 %2117
    %s2120 = sor.u32 256, 8
    %2121 = vbcast.lane.b32.xlu0 %v2115, %s2120
    %v2122 = vpop.permute.xlu0 %2121
    %v2123 = vlaneseq
    %v2124 = vshrl.u32 %v2123, 7
    %v2125 = vsub.s32 5, %v2124
    %v2126 = vrot.slane %v2067, %v2125
    %2128 = vbcast.lane.b32.xlu0 %v2126, 256
    %v2129 = vpop.permute.xlu0 %2128
    %s2131 = sor.u32 256, 8
    %2132 = vbcast.lane.b32.xlu0 %v2126, %s2131
    %v2133 = vpop.permute.xlu0 %2132
    %v2134 = vlaneseq
    %v2135 = vshrl.u32 %v2134, 7
    %v2136 = vsub.s32 6, %v2135
    %v2137 = vrot.slane %v2067, %v2136
    %2139 = vbcast.lane.b32.xlu0 %v2137, 256
    %v2140 = vpop.permute.xlu0 %2139
    %s2142 = sor.u32 256, 8
    %2143 = vbcast.lane.b32.xlu0 %v2137, %s2142
    %v2144 = vpop.permute.xlu0 %2143
    %v2145 = vlaneseq
    %v2146 = vshrl.u32 %v2145, 7
    %v2147 = vsub.s32 7, %v2146
    %v2148 = vrot.slane %v2067, %v2147
    %2150 = vbcast.lane.b32.xlu0 %v2148, 256
    %v2151 = vpop.permute.xlu0 %2150
    %s2153 = sor.u32 256, 8
    %2154 = vbcast.lane.b32.xlu0 %v2148, %s2153
    %v2155 = vpop.permute.xlu0 %2154
    %v2156 = vmul.f32 %v2074, %v1096
    %v2157 = vmul.f32 %v2078, %v1097
    %v2158 = vmul.f32 %v2085, %v1098
    %v2159 = vmul.f32 %v2089, %v1099
    %v2160 = vmul.f32 %v2096, %v1100
    %v2161 = vmul.f32 %v2100, %v1101
    %v2162 = vmul.f32 %v2107, %v1102
    %v2163 = vmul.f32 %v2111, %v1103
    %v2164 = vmul.f32 %v2118, %v1104
    %v2165 = vmul.f32 %v2122, %v1105
    %v2166 = vmul.f32 %v2129, %v1106
    %v2167 = vmul.f32 %v2133, %v1107
    %v2168 = vmul.f32 %v2140, %v1108
    %v2169 = vmul.f32 %v2144, %v1109
    %v2170 = vmul.f32 %v2151, %v1110
    %v2171 = vmul.f32 %v2155, %v1111
    %v2172 = vadd.f32 %v2156, %v2157
    %v2173 = vrot.slane %v2172, 4
    %v2174 = vadd.f32 %v2172, %v2173
    %v2175 = vrot.slane %v2174, 2
    %v2176 = vadd.f32 %v2174, %v2175
    %v2177 = vrot.slane %v2176, 1
    %v2178 = vadd.f32 %v2176, %v2177
    %v2179 = vadd.f32 %v2158, %v2159
    %v2180 = vrot.slane %v2179, 4
    %v2181 = vadd.f32 %v2179, %v2180
    %v2182 = vrot.slane %v2181, 2
    %v2183 = vadd.f32 %v2181, %v2182
    %v2184 = vrot.slane %v2183, 1
    %v2185 = vadd.f32 %v2183, %v2184
    %v2186 = vadd.f32 %v2160, %v2161
    %v2187 = vrot.slane %v2186, 4
    %v2188 = vadd.f32 %v2186, %v2187
    %v2189 = vrot.slane %v2188, 2
    %v2190 = vadd.f32 %v2188, %v2189
    %v2191 = vrot.slane %v2190, 1
    %v2192 = vadd.f32 %v2190, %v2191
    %v2193 = vadd.f32 %v2162, %v2163
    %v2194 = vrot.slane %v2193, 4
    %v2195 = vadd.f32 %v2193, %v2194
    %v2196 = vrot.slane %v2195, 2
    %v2197 = vadd.f32 %v2195, %v2196
    %v2198 = vrot.slane %v2197, 1
    %v2199 = vadd.f32 %v2197, %v2198
    %v2200 = vadd.f32 %v2164, %v2165
    %v2201 = vrot.slane %v2200, 4
    %v2202 = vadd.f32 %v2200, %v2201
    %v2203 = vrot.slane %v2202, 2
    %v2204 = vadd.f32 %v2202, %v2203
    %v2205 = vrot.slane %v2204, 1
    %v2206 = vadd.f32 %v2204, %v2205
    %v2207 = vadd.f32 %v2166, %v2167
    %v2208 = vrot.slane %v2207, 4
    %v2209 = vadd.f32 %v2207, %v2208
    %v2210 = vrot.slane %v2209, 2
    %v2211 = vadd.f32 %v2209, %v2210
    %v2212 = vrot.slane %v2211, 1
    %v2213 = vadd.f32 %v2211, %v2212
    %v2214 = vadd.f32 %v2168, %v2169
    %v2215 = vrot.slane %v2214, 4
    %v2216 = vadd.f32 %v2214, %v2215
    %v2217 = vrot.slane %v2216, 2
    %v2218 = vadd.f32 %v2216, %v2217
    %v2219 = vrot.slane %v2218, 1
    %v2220 = vadd.f32 %v2218, %v2219
    %v2221 = vadd.f32 %v2170, %v2171
    %v2222 = vrot.slane %v2221, 4
    %v2223 = vadd.f32 %v2221, %v2222
    %v2224 = vrot.slane %v2223, 2
    %v2225 = vadd.f32 %v2223, %v2224
    %v2226 = vrot.slane %v2225, 1
    %v2227 = vadd.f32 %v2225, %v2226
    %v2228 = vpack.c.bf16 %v2178, %v2178
    %v2229 = vpack.c.bf16 %v2185, %v2185
    %v2230 = vpack.c.bf16 %v2192, %v2192
    %v2231 = vpack.c.bf16 %v2199, %v2199
    %v2232 = vpack.c.bf16 %v2206, %v2206
    %v2233 = vpack.c.bf16 %v2213, %v2213
    %v2234 = vpack.c.bf16 %v2220, %v2220
    %v2235 = vpack.c.bf16 %v2227, %v2227
    %v2236 = vld [vmem:[#allocation13] sm:$0xf]
    %v2237 = vld [vmem:[#allocation13 + $0x4] sm:$0xf]
    %v2238 = vld [vmem:[#allocation13 + $0x8] sm:$0xf]
    %v2239 = vld [vmem:[#allocation13 + $0xc] sm:$0xf]
    %v2240 = vld [vmem:[#allocation13 + $0x10] sm:$0xf]
    %v2241 = vld [vmem:[#allocation13 + $0x14] sm:$0xf]
    %v2242 = vld [vmem:[#allocation13 + $0x18] sm:$0xf]
    %v2243 = vld [vmem:[#allocation13 + $0x1c] sm:$0xf]
    %v2244 = vld [vmem:[#allocation13 + $0x20] sm:$0xf]
    %v2245 = vld [vmem:[#allocation13 + $0x24] sm:$0xf]
    %v2246 = vld [vmem:[#allocation13 + $0x28] sm:$0xf]
    %v2247 = vld [vmem:[#allocation13 + $0x2c] sm:$0xf]
    %v2248 = vld [vmem:[#allocation13 + $0x30] sm:$0xf]
    %v2249 = vld [vmem:[#allocation13 + $0x34] sm:$0xf]
    %v2250 = vld [vmem:[#allocation13 + $0x38] sm:$0xf]
    %v2251 = vld [vmem:[#allocation13 + $0x3c] sm:$0xf]
    %v2252 = vld [vmem:[%s13] sm:$0x1]
    %v2254 = vlaneseq
    %v2255 = vshrl.u32 %v2254, 7
    %v2256 = vsub.s32 0, %v2255
    %v2257 = vrot.slane %v2252, %v2256
    %v2267 = vunpack.c.l.b16 %v2228
    %v2268 = vunpack.c.l.b16 %v2229
    %v2269 = vunpack.c.l.b16 %v2230
    %v2270 = vunpack.c.l.b16 %v2231
    %v2271 = vunpack.c.l.b16 %v2232
    %v2272 = vunpack.c.l.b16 %v2233
    %v2273 = vunpack.c.l.b16 %v2234
    %v2274 = vunpack.c.l.b16 %v2235
    %v2275 = vsel %vm980, %v2268, %v2267
    %v2276 = vsel %vm982, %v2269, %v2275
    %v2277 = vsel %vm984, %v2270, %v2276
    %v2278 = vsel %vm986, %v2271, %v2277
    %v2279 = vsel %vm988, %v2272, %v2278
    %v2280 = vsel %vm990, %v2273, %v2279
    %v2281 = vsel %vm992, %v2274, %v2280
    %v2282 = vpack.c.b16 %v2281, %v2281
    %v2300 = vunpack.c.l.b16 %v2236
    %v2301 = vunpack.c.l.b16 %v2237
    %v2302 = vunpack.c.l.b16 %v2238
    %v2303 = vunpack.c.l.b16 %v2239
    %v2304 = vunpack.c.l.b16 %v2240
    %v2305 = vunpack.c.l.b16 %v2241
    %v2306 = vunpack.c.l.b16 %v2242
    %v2307 = vunpack.c.l.b16 %v2243
    %v2308 = vunpack.c.l.b16 %v2244
    %v2309 = vunpack.c.l.b16 %v2245
    %v2310 = vunpack.c.l.b16 %v2246
    %v2311 = vunpack.c.l.b16 %v2247
    %v2312 = vunpack.c.l.b16 %v2248
    %v2313 = vunpack.c.l.b16 %v2249
    %v2314 = vunpack.c.l.b16 %v2250
    %v2315 = vunpack.c.l.b16 %v2251
    %v2316 = vpack.c.b16 %v2301, %v2300
    %v2317 = vpack.c.b16 %v2303, %v2302
    %v2318 = vpack.c.b16 %v2305, %v2304
    %v2319 = vpack.c.b16 %v2307, %v2306
    %v2320 = vpack.c.b16 %v2309, %v2308
    %v2321 = vpack.c.b16 %v2311, %v2310
    %v2322 = vpack.c.b16 %v2313, %v2312
    %v2323 = vpack.c.b16 %v2315, %v2314
    %2332 = vmatprep.subr.bf16.mxu0 0
    %2333 = vmatpush1.bf16.msra.mxu0 %v2316
    %2334 = vmatprep.subr.bf16.mxu0 0
    %2335 = vmatpush1.bf16.msra.mxu0 %v2317
    %2336 = vmatprep.subr.bf16.mxu0 0
    %2337 = vmatpush1.bf16.msra.mxu0 %v2318
    %2338 = vmatprep.subr.bf16.mxu0 0
    %2339 = vmatpush1.bf16.msra.mxu0 %v2319
    %2340 = vmatprep.subr.bf16.mxu0 0
    %2341 = vmatpush1.bf16.msra.mxu0 %v2320
    %2342 = vmatprep.subr.bf16.mxu0 0
    %2343 = vmatpush1.bf16.msra.mxu0 %v2321
    %2344 = vmatprep.subr.bf16.mxu0 0
    %2345 = vmatpush1.bf16.msra.mxu0 %v2322
    %2346 = vmatprep.subr.bf16.mxu0 0
    %2347 = vmatpush1.bf16.msra.mxu0 %v2323
    %2348 = vmatprep.subr.bf16.mxu0 0
    %2349 = vmatpush1.bf16.msra.mxu0 0
    %2350 = vmatprep.subr.bf16.mxu0 0
    %2351 = vmatpush1.bf16.msra.mxu0 0
    %2352 = vmatprep.subr.bf16.mxu0 0
    %2353 = vmatpush1.bf16.msra.mxu0 0
    %2354 = vmatprep.subr.bf16.mxu0 0
    %2355 = vmatpush1.bf16.msra.mxu0 0
    %2356 = vmatprep.subr.bf16.mxu0 0
    %2357 = vmatpush1.bf16.msra.mxu0 0
    %2358 = vmatprep.subr.bf16.mxu0 0
    %2359 = vmatpush1.bf16.msra.mxu0 0
    %2360 = vmatprep.subr.bf16.mxu0 0
    %2361 = vmatpush1.bf16.msra.mxu0 0
    %2362 = vmatprep.subr.bf16.mxu0 0
    %2363 = vmatpush1.bf16.msra.mxu0 0
    %2364 = vmatprep.mubr.bf16.mxu0 0
    %2365 = vmatmul.mubr.bf16.gmra.mrb[0].mxu0 %v2282
    %v2366 = vpop.f32.mrb[0].mxu0
    %v2367 = vadd.f32 %v2257, %v2366
    %v2368 = vpop.f32.mrb[0].mxu0
    %v2369 = vpop.f32.mrb[0].mxu0
    %v2370 = vpop.f32.mrb[0].mxu0
    %2371 = vdwg.mxu0
    %v2372 = vmax.f32 %v2367, 0.0
    %v2373 = vpack.c.bf16 %v2372, %v2372
    %v2374 = vld [vmem:[#allocation14] sm:$0xf]
    %v2375 = vld [vmem:[#allocation14 + $0x4] sm:$0xf]
    %v2376 = vld [vmem:[#allocation14 + $0x8] sm:$0xf]
    %v2377 = vld [vmem:[#allocation14 + $0xc] sm:$0xf]
    %v2378 = vld [vmem:[#allocation14 + $0x10] sm:$0xf]
    %v2379 = vld [vmem:[#allocation14 + $0x14] sm:$0xf]
    %v2380 = vld [vmem:[#allocation14 + $0x18] sm:$0xf]
    %v2381 = vld [vmem:[#allocation14 + $0x1c] sm:$0xf]
    %v2382 = vld [vmem:[#allocation14 + $0x20] sm:$0xf]
    %v2383 = vld [vmem:[#allocation14 + $0x24] sm:$0xf]
    %v2384 = vld [vmem:[#allocation14 + $0x28] sm:$0xf]
    %v2385 = vld [vmem:[#allocation14 + $0x2c] sm:$0xf]
    %v2386 = vld [vmem:[#allocation14 + $0x30] sm:$0xf]
    %v2387 = vld [vmem:[#allocation14 + $0x34] sm:$0xf]
    %v2388 = vld [vmem:[#allocation14 + $0x38] sm:$0xf]
    %v2389 = vld [vmem:[#allocation14 + $0x3c] sm:$0xf]
    %v2390 = vld [vmem:[%s15] sm:$0x1]
    %v2392 = vlaneseq
    %v2393 = vshrl.u32 %v2392, 7
    %v2394 = vsub.s32 0, %v2393
    %v2395 = vrot.slane %v2390, %v2394
    %v2413 = vunpack.c.l.b16 %v2374
    %v2414 = vunpack.c.l.b16 %v2375
    %v2415 = vunpack.c.l.b16 %v2376
    %v2416 = vunpack.c.l.b16 %v2377
    %v2417 = vunpack.c.l.b16 %v2378
    %v2418 = vunpack.c.l.b16 %v2379
    %v2419 = vunpack.c.l.b16 %v2380
    %v2420 = vunpack.c.l.b16 %v2381
    %v2421 = vunpack.c.l.b16 %v2382
    %v2422 = vunpack.c.l.b16 %v2383
    %v2423 = vunpack.c.l.b16 %v2384
    %v2424 = vunpack.c.l.b16 %v2385
    %v2425 = vunpack.c.l.b16 %v2386
    %v2426 = vunpack.c.l.b16 %v2387
    %v2427 = vunpack.c.l.b16 %v2388
    %v2428 = vunpack.c.l.b16 %v2389
    %v2429 = vpack.c.b16 %v2414, %v2413
    %v2430 = vpack.c.b16 %v2416, %v2415
    %v2431 = vpack.c.b16 %v2418, %v2417
    %v2432 = vpack.c.b16 %v2420, %v2419
    %v2433 = vpack.c.b16 %v2422, %v2421
    %v2434 = vpack.c.b16 %v2424, %v2423
    %v2435 = vpack.c.b16 %v2426, %v2425
    %v2436 = vpack.c.b16 %v2428, %v2427
    %2445 = vmatprep.subr.bf16.mxu0 0
    %2446 = vmatpush1.bf16.msra.mxu0 %v2429
    %2447 = vmatprep.subr.bf16.mxu0 0
    %2448 = vmatpush1.bf16.msra.mxu0 %v2430
    %2449 = vmatprep.subr.bf16.mxu0 0
    %2450 = vmatpush1.bf16.msra.mxu0 %v2431
    %2451 = vmatprep.subr.bf16.mxu0 0
    %2452 = vmatpush1.bf16.msra.mxu0 %v2432
    %2453 = vmatprep.subr.bf16.mxu0 0
    %2454 = vmatpush1.bf16.msra.mxu0 %v2433
    %2455 = vmatprep.subr.bf16.mxu0 0
    %2456 = vmatpush1.bf16.msra.mxu0 %v2434
    %2457 = vmatprep.subr.bf16.mxu0 0
    %2458 = vmatpush1.bf16.msra.mxu0 %v2435
    %2459 = vmatprep.subr.bf16.mxu0 0
    %2460 = vmatpush1.bf16.msra.mxu0 %v2436
    %2461 = vmatprep.subr.bf16.mxu0 0
    %2462 = vmatpush1.bf16.msra.mxu0 0
    %2463 = vmatprep.subr.bf16.mxu0 0
    %2464 = vmatpush1.bf16.msra.mxu0 0
    %2465 = vmatprep.subr.bf16.mxu0 0
    %2466 = vmatpush1.bf16.msra.mxu0 0
    %2467 = vmatprep.subr.bf16.mxu0 0
    %2468 = vmatpush1.bf16.msra.mxu0 0
    %2469 = vmatprep.subr.bf16.mxu0 0
    %2470 = vmatpush1.bf16.msra.mxu0 0
    %2471 = vmatprep.subr.bf16.mxu0 0
    %2472 = vmatpush1.bf16.msra.mxu0 0
    %2473 = vmatprep.subr.bf16.mxu0 0
    %2474 = vmatpush1.bf16.msra.mxu0 0
    %2475 = vmatprep.subr.bf16.mxu0 0
    %2476 = vmatpush1.bf16.msra.mxu0 0
    %2477 = vmatprep.mubr.bf16.mxu0 0
    %2478 = vmatmul.mubr.bf16.gmra.mrb[0].mxu0 %v2373
    %v2479 = vpop.f32.mrb[0].mxu0
    %v2480 = vadd.f32 %v2395, %v2479
    %v2481 = vpop.f32.mrb[0].mxu0
    %v2482 = vpop.f32.mrb[0].mxu0
    %v2483 = vpop.f32.mrb[0].mxu0
    %2484 = vdwg.mxu0
    %2485 = vst [vmem:[#allocation16] sm:$0xff] %v2480
    // Predicated region
    $region98: #{tpu_custom_call.1} parent=1 // pred_check
      _
    $region99: #{tpu_custom_call.1} parent=1 // pred_check_branch
      %2487 = sbr.rel (0) target = $region101
    $region100: #{tpu_custom_call.1} parent=1 // pred_region
      %s2489 = ssub.s32 128, 128
      %2490 = vsyncadd [#allocation4], %s2489
      %s2492 = sshll.u32 [#allocation16], 4
      %s2493 = int_to_ptr.vmem [resolvable:$true] %s2492
      %2495 = dma.vmem_to_hbm [thread:$0]  %s2493, 128, %s16, [#allocation4]
    $region101: #{tpu_custom_call.1} parent=1 // pred_fallthru
      _
    // Predicated region
    $region102: #{tpu_custom_call.1} parent=1 // pred_check
      _
    $region103: #{tpu_custom_call.1} parent=1 // pred_check_branch
      %2497 = sbr.rel (0) target = $region105
    $region104: #{tpu_custom_call.1} parent=1 // pred_region
      %2498 = dma.done [#allocation4], 128
    $region105: #{tpu_custom_call.1} parent=1 // pred_fallthru
      _
    %2499 = vsyncpa [#allocation3], 1
    %2500 = vsyncpa [#allocation6], 1
    %2501 = vsyncpa [#allocation9], 1
    %2502 = vsyncpa [#allocation12], 1
    %2503 = vsyncpa [#allocation15], 1
    %2504 = vsyncpa [#allocation4], 1

</llo_original>
